<compile_context>
chip_gen: v6e
topology: v6e:2x2x1
jax: 0.10.0
libtpu: 0.0.40
codegen_flags: <defaults>
</compile_context>

<pallas_src>
import functools

import jax
import jax.numpy as jnp
from jax import lax
from jax.experimental import pallas as pl
from jax.experimental.pallas import tpu as pltpu


# ----------------------------------------------------------------------------
# Fused kernel: all LSTM layers (both directions) + final linear projection.
# Gate order matches PyTorch: [i, f, g, o] stacked along the 4H axis.
# ----------------------------------------------------------------------------
def _fused_bilstm_tagger_kernel(*refs, num_layers, hidden, batch_pad, seq_len):
    H, B, S = hidden, batch_pad, seq_len
    n_w = 5 * num_layers

    x_ref = refs[0]                               # (S*B, E)       bf16
    layer_refs = refs[1:1 + n_w]                  # per layer: wih_f, wih_b, b_f, b_b, whh_comb
    lin_w_ref = refs[1 + n_w]                     # (2H, T_pad)    bf16
    lin_b_ref = refs[2 + n_w]                     # (1, T_pad)     f32
    out_ref = refs[3 + n_w]                       # (S*B, T_pad)   f32
    gf_ref, gb_ref, hf_ref, hb_ref = refs[4 + n_w:]

    def cell(gates, c):
        # PyTorch gate order [i, f, g, o]; elementwise math kept in f32.
        i = jax.nn.sigmoid(gates[:, 0 * H:1 * H])
        f = jax.nn.sigmoid(gates[:, 1 * H:2 * H])
        g = jnp.tanh(gates[:, 2 * H:3 * H])
        o = jax.nn.sigmoid(gates[:, 3 * H:4 * H])
        c_new = f * c + i * g
        h_new = o * jnp.tanh(c_new)
        return h_new, c_new

    for layer in range(num_layers):
        (wih_f_ref, wih_b_ref, b_f_ref, b_b_ref,
         whh_ref) = layer_refs[5 * layer:5 * layer + 5]

        # ---- Hoisted input projection: one large bf16 MXU matmul per
        #      direction, bias folded in once (no per-step bias broadcast). ----
        if layer == 0:
            x_bf = x_ref[...]                                           # (S*B, E) bf16
            gf = (jnp.dot(x_bf, wih_f_ref[...],
                          preferred_element_type=jnp.float32) + b_f_ref[...])
            gb = (jnp.dot(x_bf, wih_b_ref[...],
                          preferred_element_type=jnp.float32) + b_b_ref[...])
        else:
            hf_prev = hf_ref[...].astype(jnp.bfloat16)                  # (S*B, H)
            hb_prev = hb_ref[...].astype(jnp.bfloat16)
            w_f = wih_f_ref[...]                                        # (2H, 4H) bf16
            w_b = wih_b_ref[...]
            # concat(hf, hb) @ W  ==  hf @ W[:H] + hb @ W[H:]  (no concat)
            gf = (jnp.dot(hf_prev, w_f[:H], preferred_element_type=jnp.float32)
                  + jnp.dot(hb_prev, w_f[H:], preferred_element_type=jnp.float32)
                  + b_f_ref[...])
            gb = (jnp.dot(hf_prev, w_b[:H], preferred_element_type=jnp.float32)
                  + jnp.dot(hb_prev, w_b[H:], preferred_element_type=jnp.float32)
                  + b_b_ref[...])
        gf_ref[...] = gf                                                # (S*B, 4H) f32
        gb_ref[...] = gb

        # Block-diagonal recurrent weight loaded once per layer:
        #   rows 0:H,  cols 0:4H   -> whh_fwd
        #   rows H:2H, cols 4H:8H  -> whh_bwd
        whh = whh_ref[...]                                              # (2H, 8H) bf16

        # ---- Serial recurrence. fwd step t and bwd step S-1-t share ONE MXU
        #      push per iteration via the block-diagonal W_hh. All per-step
        #      ref slices are sublane-aligned (B is a multiple of 8). ----
        def step(t, carry, *, dynamic):
            h_f, c_f, h_b, c_b = carry
            row_f = t * B
            row_b = (S - 1 - t) * B
            if dynamic:
                row_f = pl.multiple_of(row_f, B)
                row_b = pl.multiple_of(row_b, B)
            h_cat = jnp.concatenate([h_f, h_b], axis=-1).astype(jnp.bfloat16)
            rec = jnp.dot(h_cat, whh, preferred_element_type=jnp.float32)  # (B, 8H)
            gates_f = gf_ref[pl.ds(row_f, B), :] + rec[:, :4 * H]
            gates_b = gb_ref[pl.ds(row_b, B), :] + rec[:, 4 * H:]
            h_f, c_f = cell(gates_f, c_f)
            h_b, c_b = cell(gates_b, c_b)
            hf_ref[pl.ds(row_f, B), :] = h_f
            hb_ref[pl.ds(row_b, B), :] = h_b
            return (h_f, c_f, h_b, c_b)

        zeros = jnp.zeros((B, H), jnp.float32)
        carry = (zeros, zeros, zeros, zeros)
        if S <= 16:
            # Full unroll: static slices, scheduler sees all the overlap.
            for t in range(S):
                carry = step(t, carry, dynamic=False)
        else:
            # Bound live ranges for long sequences; small unroll keeps overlap.
            carry = lax.fori_loop(
                0, S, lambda t, c: step(t, c, dynamic=True), carry, unroll=2)

    # ---- Final linear folded into the epilogue while activations are in VMEM.
    #      Output lane dim is padded to 128 -> unmasked, lane-dense stores. ----
    lw = lin_w_ref[...]                                                 # (2H, T_pad) bf16
    hf_all = hf_ref[...].astype(jnp.bfloat16)
    hb_all = hb_ref[...].astype(jnp.bfloat16)
    logits = (jnp.dot(hf_all, lw[:H], preferred_element_type=jnp.float32)
              + jnp.dot(hb_all, lw[H:], preferred_element_type=jnp.float32)
              + lin_b_ref[...])
    out_ref[...] = logits.astype(out_ref.dtype)


def _full_block(arr):
    zeros = (0,) * arr.ndim

    def idx(i):
        return zeros

    return pl.BlockSpec(arr.shape, idx)


def _round_up(x, m):
    return ((x + m - 1) // m) * m


# ----------------------------------------------------------------------------
# Parameter init (deterministic, PyTorch-style).  Weights are stored
# pre-transposed, i.e. w_ih is (input_dim, 4H) so the kernel computes x @ w_ih.
# ----------------------------------------------------------------------------
def init_params(key, num_embds, embedding_dim, padding_index, num_layers,
                hidden_dims, num_tags):
    params = {}
    key, sub = jax.random.split(key)
    emb = jax.random.normal(sub, (num_embds, embedding_dim), jnp.float32)
    emb = emb.at[padding_index].set(0.0)   # padding_idx row is zero
    params['embedding'] = emb

    bound = 1.0 / float(hidden_dims) ** 0.5
    lstm = []
    for layer in range(num_layers):
        in_dim = embedding_dim if layer == 0 else 2 * hidden_dims
        layer_p = {}
        for direction in ('fwd', 'bwd'):
            key, k1, k2, k3, k4 = jax.random.split(key, 5)
            layer_p[direction] = dict(
                w_ih=jax.random.uniform(k1, (in_dim, 4 * hidden_dims),
                                        jnp.float32, -bound, bound),
                w_hh=jax.random.uniform(k2, (hidden_dims, 4 * hidden_dims),
                                        jnp.float32, -bound, bound),
                # b = b_ih + b_hh (PyTorch keeps them separate; sum is equivalent)
                b=(jax.random.uniform(k3, (1, 4 * hidden_dims),
                                      jnp.float32, -bound, bound)
                   + jax.random.uniform(k4, (1, 4 * hidden_dims),
                                        jnp.float32, -bound, bound)),
            )
        lstm.append(layer_p)
    params['lstm'] = lstm

    lb = 1.0 / float(2 * hidden_dims) ** 0.5
    key, k1, k2 = jax.random.split(key, 3)
    params['linear_w'] = jax.random.uniform(k1, (2 * hidden_dims, num_tags),
                                            jnp.float32, -lb, lb)
    params['linear_b'] = jax.random.uniform(k2, (1, num_tags),
                                            jnp.float32, -lb, lb)
    return params


# ----------------------------------------------------------------------------
# Forward pass == BiLSTM_POS_Tagger.forward (eval mode)
# ----------------------------------------------------------------------------
def bilstm_pos_tagger_forward(params, text, hidden_dims):
    # Embedding lookup (gather) -- plain-JAX glue.
    emb = jnp.take(params['embedding'], text, axis=0)        # (S, B, E)
    S, B, E = emb.shape
    H = hidden_dims
    num_layers = len(params['lstm'])
    num_tags = params['linear_w'].shape[1]

    # Pad batch to a sublane multiple (8) and tags to a lane multiple (128).
    B_pad = max(8, _round_up(B, 8))
    T_pad = max(128, _round_up(num_tags, 128))

    emb_p = jnp.zeros((S, B_pad, E), emb.dtype).at[:, :B, :].set(emb)
    x_flat = emb_p.reshape(S * B_pad, E).astype(jnp.bfloat16)  # bf16 MXU operand

    inputs = [x_flat]
    for layer_p in params['lstm']:
        wih_f = layer_p['fwd']['w_ih'].astype(jnp.bfloat16)
        wih_b = layer_p['bwd']['w_ih'].astype(jnp.bfloat16)
        b_f = layer_p['fwd']['b']                              # f32 (1, 4H)
        b_b = layer_p['bwd']['b']
        # Block-diagonal recurrent weight: one MXU push covers both directions.
        whh_comb = jnp.zeros((2 * H, 8 * H), jnp.float32)
        whh_comb = whh_comb.at[:H, :4 * H].set(layer_p['fwd']['w_hh'])
        whh_comb = whh_comb.at[H:, 4 * H:].set(layer_p['bwd']['w_hh'])
        inputs += [wih_f, wih_b, b_f, b_b, whh_comb.astype(jnp.bfloat16)]

    lin_w = (jnp.zeros((2 * H, T_pad), jnp.float32)
             .at[:, :num_tags].set(params['linear_w'])).astype(jnp.bfloat16)
    lin_b = jnp.zeros((1, T_pad), jnp.float32).at[:, :num_tags].set(params['linear_b'])
    inputs += [lin_w, lin_b]

    # Explicit VMEM budget from the real resident footprint (weights + input
    # + output + scratch), with 2x headroom for double-buffered input DMA.
    def nbytes(a):
        return int(a.size) * int(a.dtype.itemsize)

    scratch_bytes = (2 * S * B_pad * 4 * H + 2 * S * B_pad * H) * 4
    out_bytes = S * B_pad * T_pad * 4
    footprint = sum(nbytes(a) for a in inputs) + out_bytes + scratch_bytes
    vmem_limit = int(min(64 * 1024 * 1024,
                         max(2 * footprint + (2 << 20), 16 * 1024 * 1024)))

    kernel = functools.partial(
        _fused_bilstm_tagger_kernel,
        num_layers=num_layers, hidden=H, batch_pad=B_pad, seq_len=S)

    logits_flat = pl.pallas_call(
        kernel,
        out_shape=jax.ShapeDtypeStruct((S * B_pad, T_pad), jnp.float32),
        grid=(1,),
        in_specs=[_full_block(a) for a in inputs],
        out_specs=pl.BlockSpec((S * B_pad, T_pad), lambda i: (0, 0)),
        scratch_shapes=[
            pltpu.VMEM((S * B_pad, 4 * H), jnp.float32),   # precomputed fwd gates
            pltpu.VMEM((S * B_pad, 4 * H), jnp.float32),   # precomputed bwd gates
            pltpu.VMEM((S * B_pad, H), jnp.float32),       # fwd hidden stack
            pltpu.VMEM((S * B_pad, H), jnp.float32),       # bwd hidden stack
        ],
        compiler_params=pltpu.CompilerParams(
            dimension_semantics=("arbitrary",),
            vmem_limit_bytes=vmem_limit),
    )(*inputs)

    logits = logits_flat.reshape(S, B_pad, T_pad)
    return logits[:, :B, :num_tags]                          # (S, B, num_tags)


if __name__ == "__main__":
    # Small, forward-consistent shapes.
    NUM_EMBDS = 50
    EMBED_DIM = 32
    PADDING_IDX = 0
    NUM_LAYERS = 2
    HIDDEN = 32
    NUM_TAGS = 10
    SEQ = 8
    BATCH = 2

    key = jax.random.PRNGKey(0)
    key, pkey, tkey = jax.random.split(key, 3)
    params = init_params(pkey, NUM_EMBDS, EMBED_DIM, PADDING_IDX,
                         NUM_LAYERS, HIDDEN, NUM_TAGS)
    text = jax.random.randint(tkey, (SEQ, BATCH), 0, NUM_EMBDS, dtype=jnp.int32)

    preds = bilstm_pos_tagger_forward(params, text, HIDDEN)
    preds = jax.block_until_ready(preds)
    assert preds.shape == (SEQ, BATCH, NUM_TAGS), preds.shape
    assert bool(jnp.all(jnp.isfinite(preds)))
    print("KERNEL_OK")
</pallas_src>

<mosaic_0001>
module attributes {stable_mosaic.version = 11 : i64} {
  func.func @_fused_bilstm_tagger_kernel(%arg0: i32, %arg1: memref<64x32xbf16, #tpu.memory_space<vmem>>, %arg2: memref<32x128xbf16, #tpu.memory_space<vmem>>, %arg3: memref<32x128xbf16, #tpu.memory_space<vmem>>, %arg4: memref<1x128xf32, #tpu.memory_space<vmem>>, %arg5: memref<1x128xf32, #tpu.memory_space<vmem>>, %arg6: memref<64x256xbf16, #tpu.memory_space<vmem>>, %arg7: memref<64x128xbf16, #tpu.memory_space<vmem>>, %arg8: memref<64x128xbf16, #tpu.memory_space<vmem>>, %arg9: memref<1x128xf32, #tpu.memory_space<vmem>>, %arg10: memref<1x128xf32, #tpu.memory_space<vmem>>, %arg11: memref<64x256xbf16, #tpu.memory_space<vmem>>, %arg12: memref<64x128xbf16, #tpu.memory_space<vmem>>, %arg13: memref<1x128xf32, #tpu.memory_space<vmem>>, %arg14: memref<64x128xf32, #tpu.memory_space<vmem>>, %arg15: memref<64x128xf32, #tpu.memory_space<vmem>>, %arg16: memref<64x128xf32, #tpu.memory_space<vmem>>, %arg17: memref<64x32xf32, #tpu.memory_space<vmem>>, %arg18: memref<64x32xf32, #tpu.memory_space<vmem>>) attributes {dimension_semantics = [#tpu.dimension_semantics<arbitrary>], iteration_bounds = array<i64: 1>, scalar_prefetch = 0 : i64, scratch_operands = 4 : i64, tpu.core_type = #tpu.core_type<tc>, window_params = [{pipeline_mode = #tpu.pipeline_mode<synchronous>, transform_indices = @transform_0, window_bounds = array<i64: 64, 32>}, {pipeline_mode = #tpu.pipeline_mode<synchronous>, transform_indices = @transform_1, window_bounds = array<i64: 32, 128>}, {pipeline_mode = #tpu.pipeline_mode<synchronous>, transform_indices = @transform_2, window_bounds = array<i64: 32, 128>}, {pipeline_mode = #tpu.pipeline_mode<synchronous>, transform_indices = @transform_3, window_bounds = array<i64: 1, 128>}, {pipeline_mode = #tpu.pipeline_mode<synchronous>, transform_indices = @transform_4, window_bounds = array<i64: 1, 128>}, {pipeline_mode = #tpu.pipeline_mode<synchronous>, transform_indices = @transform_5, window_bounds = array<i64: 64, 256>}, {pipeline_mode = #tpu.pipeline_mode<synchronous>, transform_indices = @transform_6, window_bounds = array<i64: 64, 128>}, {pipeline_mode = #tpu.pipeline_mode<synchronous>, transform_indices = @transform_7, window_bounds = array<i64: 64, 128>}, {pipeline_mode = #tpu.pipeline_mode<synchronous>, transform_indices = @transform_8, window_bounds = array<i64: 1, 128>}, {pipeline_mode = #tpu.pipeline_mode<synchronous>, transform_indices = @transform_9, window_bounds = array<i64: 1, 128>}, {pipeline_mode = #tpu.pipeline_mode<synchronous>, transform_indices = @transform_10, window_bounds = array<i64: 64, 256>}, {pipeline_mode = #tpu.pipeline_mode<synchronous>, transform_indices = @transform_11, window_bounds = array<i64: 64, 128>}, {pipeline_mode = #tpu.pipeline_mode<synchronous>, transform_indices = @transform_12, window_bounds = array<i64: 1, 128>}, {pipeline_mode = #tpu.pipeline_mode<synchronous>, transform_indices = @transform_13, window_bounds = array<i64: 64, 128>}]} {
    %c0 = arith.constant 0 : index
    %c0_0 = arith.constant 0 : index
    %0 = vector.load %arg1[%c0, %c0_0] : memref<64x32xbf16, #tpu.memory_space<vmem>>, vector<64x32xbf16>
    %c0_1 = arith.constant 0 : index
    %c0_2 = arith.constant 0 : index
    %1 = vector.load %arg2[%c0_1, %c0_2] : memref<32x128xbf16, #tpu.memory_space<vmem>>, vector<32x128xbf16>
    %cst = arith.constant dense<0.000000e+00> : vector<64x128xf32>
    %2 = tpu.matmul %0, %1, %cst {dimension_numbers = #tpu.dot_dimension_numbers<[1], [0], [0], [1], [0, 0, 1, 1], [], []>} : vector<64x32xbf16>, vector<32x128xbf16>, vector<64x128xf32> -> vector<64x128xf32>
    %c0_3 = arith.constant 0 : index
    %c0_4 = arith.constant 0 : index
    %3 = vector.load %arg4[%c0_3, %c0_4] : memref<1x128xf32, #tpu.memory_space<vmem>>, vector<1x128xf32>
    %4 = vector.broadcast %3 : vector<1x128xf32> to vector<64x128xf32>
    %5 = arith.addf %2, %4 : vector<64x128xf32>
    %c0_5 = arith.constant 0 : index
    %c0_6 = arith.constant 0 : index
    %6 = vector.load %arg3[%c0_5, %c0_6] : memref<32x128xbf16, #tpu.memory_space<vmem>>, vector<32x128xbf16>
    %cst_7 = arith.constant dense<0.000000e+00> : vector<64x128xf32>
    %7 = tpu.matmul %0, %6, %cst_7 {dimension_numbers = #tpu.dot_dimension_numbers<[1], [0], [0], [1], [0, 0, 1, 1], [], []>} : vector<64x32xbf16>, vector<32x128xbf16>, vector<64x128xf32> -> vector<64x128xf32>
    %c0_8 = arith.constant 0 : index
    %c0_9 = arith.constant 0 : index
    %8 = vector.load %arg5[%c0_8, %c0_9] : memref<1x128xf32, #tpu.memory_space<vmem>>, vector<1x128xf32>
    %9 = vector.broadcast %8 : vector<1x128xf32> to vector<64x128xf32>
    %10 = arith.addf %7, %9 : vector<64x128xf32>
    %c0_10 = arith.constant 0 : index
    %c0_11 = arith.constant 0 : index
    %11 = vector.load %arg15[%c0_10, %c0_11] : memref<64x128xf32, #tpu.memory_space<vmem>>, vector<64x128xf32>
    tpu.vector_store %arg15[%c0_10, %c0_11], %5 {strides = array<i32>} : memref<64x128xf32, #tpu.memory_space<vmem>>, vector<64x128xf32>,
    %c0_12 = arith.constant 0 : index
    %c0_13 = arith.constant 0 : index
    %12 = vector.load %arg16[%c0_12, %c0_13] : memref<64x128xf32, #tpu.memory_space<vmem>>, vector<64x128xf32>
    tpu.vector_store %arg16[%c0_12, %c0_13], %10 {strides = array<i32>} : memref<64x128xf32, #tpu.memory_space<vmem>>, vector<64x128xf32>,
    %c0_14 = arith.constant 0 : index
    %c0_15 = arith.constant 0 : index
    %13 = vector.load %arg6[%c0_14, %c0_15] : memref<64x256xbf16, #tpu.memory_space<vmem>>, vector<64x256xbf16>
    %cst_16 = arith.constant 0.000000e+00 : f32
    %14 = vector.broadcast %cst_16 : f32 to vector<8x32xf32>
    %15 = tpu.concatenate %14, %14 in 1 : vector<8x32xf32>, vector<8x32xf32> -> vector<8x64xf32>
    %16 = arith.truncf %15 : vector<8x64xf32> to vector<8x64xbf16>
    %cst_17 = arith.constant dense<0.000000e+00> : vector<8x256xf32>
    %17 = tpu.matmul %16, %13, %cst_17 {dimension_numbers = #tpu.dot_dimension_numbers<[1], [0], [0], [1], [0, 0, 1, 1], [], []>} : vector<8x64xbf16>, vector<64x256xbf16>, vector<8x256xf32> -> vector<8x256xf32>
    %c0_18 = arith.constant 0 : index
    %c0_19 = arith.constant 0 : index
    %18 = vector.load %arg15[%c0_18, %c0_19] : memref<64x128xf32, #tpu.memory_space<vmem>>, vector<8x128xf32>
    %19 = vector.extract_strided_slice %17 {offsets = [0, 0], sizes = [8, 128], strides = [1, 1]} : vector<8x256xf32> to vector<8x128xf32>
    %20 = arith.addf %18, %19 : vector<8x128xf32>
    %c56 = arith.constant 56 : index
    %c0_20 = arith.constant 0 : index
    %21 = vector.load %arg16[%c56, %c0_20] : memref<64x128xf32, #tpu.memory_space<vmem>>, vector<8x128xf32>
    %22 = vector.extract_strided_slice %17 {offsets = [0, 128], sizes = [8, 128], strides = [1, 1]} : vector<8x256xf32> to vector<8x128xf32>
    %23 = arith.addf %21, %22 : vector<8x128xf32>
    %24 = vector.extract_strided_slice %20 {offsets = [0, 0], sizes = [8, 32], strides = [1, 1]} : vector<8x128xf32> to vector<8x32xf32>
    %25 = arith.negf %24 : vector<8x32xf32>
    %26 = math.exp %25 : vector<8x32xf32>
    %cst_21 = arith.constant 1.000000e+00 : f32
    %27 = vector.broadcast %cst_21 : f32 to vector<8x32xf32>
    %28 = arith.addf %27, %26 : vector<8x32xf32>
    %29 = arith.divf %27, %28 : vector<8x32xf32>
    %30 = vector.extract_strided_slice %20 {offsets = [0, 32], sizes = [8, 32], strides = [1, 1]} : vector<8x128xf32> to vector<8x32xf32>
    %31 = arith.negf %30 : vector<8x32xf32>
    %32 = math.exp %31 : vector<8x32xf32>
    %cst_22 = arith.constant 1.000000e+00 : f32
    %33 = vector.broadcast %cst_22 : f32 to vector<8x32xf32>
    %34 = arith.addf %33, %32 : vector<8x32xf32>
    %35 = arith.divf %33, %34 : vector<8x32xf32>
    %36 = vector.extract_strided_slice %20 {offsets = [0, 64], sizes = [8, 32], strides = [1, 1]} : vector<8x128xf32> to vector<8x32xf32>
    %37 = math.tanh %36 : vector<8x32xf32>
    %38 = vector.extract_strided_slice %20 {offsets = [0, 96], sizes = [8, 32], strides = [1, 1]} : vector<8x128xf32> to vector<8x32xf32>
    %39 = arith.negf %38 : vector<8x32xf32>
    %40 = math.exp %39 : vector<8x32xf32>
    %cst_23 = arith.constant 1.000000e+00 : f32
    %41 = vector.broadcast %cst_23 : f32 to vector<8x32xf32>
    %42 = arith.addf %41, %40 : vector<8x32xf32>
    %43 = arith.divf %41, %42 : vector<8x32xf32>
    %44 = arith.mulf %35, %14 : vector<8x32xf32>
    %45 = arith.mulf %29, %37 : vector<8x32xf32>
    %46 = arith.addf %44, %45 : vector<8x32xf32>
    %47 = math.tanh %46 : vector<8x32xf32>
    %48 = arith.mulf %43, %47 : vector<8x32xf32>
    %49 = vector.extract_strided_slice %23 {offsets = [0, 0], sizes = [8, 32], strides = [1, 1]} : vector<8x128xf32> to vector<8x32xf32>
    %50 = arith.negf %49 : vector<8x32xf32>
    %51 = math.exp %50 : vector<8x32xf32>
    %cst_24 = arith.constant 1.000000e+00 : f32
    %52 = vector.broadcast %cst_24 : f32 to vector<8x32xf32>
    %53 = arith.addf %52, %51 : vector<8x32xf32>
    %54 = arith.divf %52, %53 : vector<8x32xf32>
    %55 = vector.extract_strided_slice %23 {offsets = [0, 32], sizes = [8, 32], strides = [1, 1]} : vector<8x128xf32> to vector<8x32xf32>
    %56 = arith.negf %55 : vector<8x32xf32>
    %57 = math.exp %56 : vector<8x32xf32>
    %cst_25 = arith.constant 1.000000e+00 : f32
    %58 = vector.broadcast %cst_25 : f32 to vector<8x32xf32>
    %59 = arith.addf %58, %57 : vector<8x32xf32>
    %60 = arith.divf %58, %59 : vector<8x32xf32>
    %61 = vector.extract_strided_slice %23 {offsets = [0, 64], sizes = [8, 32], strides = [1, 1]} : vector<8x128xf32> to vector<8x32xf32>
    %62 = math.tanh %61 : vector<8x32xf32>
    %63 = vector.extract_strided_slice %23 {offsets = [0, 96], sizes = [8, 32], strides = [1, 1]} : vector<8x128xf32> to vector<8x32xf32>
    %64 = arith.negf %63 : vector<8x32xf32>
    %65 = math.exp %64 : vector<8x32xf32>
    %cst_26 = arith.constant 1.000000e+00 : f32
    %66 = vector.broadcast %cst_26 : f32 to vector<8x32xf32>
    %67 = arith.addf %66, %65 : vector<8x32xf32>
    %68 = arith.divf %66, %67 : vector<8x32xf32>
    %69 = arith.mulf %60, %14 : vector<8x32xf32>
    %70 = arith.mulf %54, %62 : vector<8x32xf32>
    %71 = arith.addf %69, %70 : vector<8x32xf32>
    %72 = math.tanh %71 : vector<8x32xf32>
    %73 = arith.mulf %68, %72 : vector<8x32xf32>
    %c0_27 = arith.constant 0 : index
    %c0_28 = arith.constant 0 : index
    %74 = vector.load %arg17[%c0_27, %c0_28] : memref<64x32xf32, #tpu.memory_space<vmem>>, vector<8x32xf32>
    tpu.vector_store %arg17[%c0_27, %c0_28], %48 {strides = array<i32>} : memref<64x32xf32, #tpu.memory_space<vmem>>, vector<8x32xf32>,
    %c56_29 = arith.constant 56 : index
    %c0_30 = arith.constant 0 : index
    %75 = vector.load %arg18[%c56_29, %c0_30] : memref<64x32xf32, #tpu.memory_space<vmem>>, vector<8x32xf32>
    tpu.vector_store %arg18[%c56_29, %c0_30], %73 {strides = array<i32>} : memref<64x32xf32, #tpu.memory_space<vmem>>, vector<8x32xf32>,
    %76 = tpu.concatenate %48, %73 in 1 : vector<8x32xf32>, vector<8x32xf32> -> vector<8x64xf32>
    %77 = arith.truncf %76 : vector<8x64xf32> to vector<8x64xbf16>
    %cst_31 = arith.constant dense<0.000000e+00> : vector<8x256xf32>
    %78 = tpu.matmul %77, %13, %cst_31 {dimension_numbers = #tpu.dot_dimension_numbers<[1], [0], [0], [1], [0, 0, 1, 1], [], []>} : vector<8x64xbf16>, vector<64x256xbf16>, vector<8x256xf32> -> vector<8x256xf32>
    %c8 = arith.constant 8 : index
    %c0_32 = arith.constant 0 : index
    %79 = vector.load %arg15[%c8, %c0_32] : memref<64x128xf32, #tpu.memory_space<vmem>>, vector<8x128xf32>
    %80 = vector.extract_strided_slice %78 {offsets = [0, 0], sizes = [8, 128], strides = [1, 1]} : vector<8x256xf32> to vector<8x128xf32>
    %81 = arith.addf %79, %80 : vector<8x128xf32>
    %c48 = arith.constant 48 : index
    %c0_33 = arith.constant 0 : index
    %82 = vector.load %arg16[%c48, %c0_33] : memref<64x128xf32, #tpu.memory_space<vmem>>, vector<8x128xf32>
    %83 = vector.extract_strided_slice %78 {offsets = [0, 128], sizes = [8, 128], strides = [1, 1]} : vector<8x256xf32> to vector<8x128xf32>
    %84 = arith.addf %82, %83 : vector<8x128xf32>
    %85 = vector.extract_strided_slice %81 {offsets = [0, 0], sizes = [8, 32], strides = [1, 1]} : vector<8x128xf32> to vector<8x32xf32>
    %86 = arith.negf %85 : vector<8x32xf32>
    %87 = math.exp %86 : vector<8x32xf32>
    %cst_34 = arith.constant 1.000000e+00 : f32
    %88 = vector.broadcast %cst_34 : f32 to vector<8x32xf32>
    %89 = arith.addf %88, %87 : vector<8x32xf32>
    %90 = arith.divf %88, %89 : vector<8x32xf32>
    %91 = vector.extract_strided_slice %81 {offsets = [0, 32], sizes = [8, 32], strides = [1, 1]} : vector<8x128xf32> to vector<8x32xf32>
    %92 = arith.negf %91 : vector<8x32xf32>
    %93 = math.exp %92 : vector<8x32xf32>
    %cst_35 = arith.constant 1.000000e+00 : f32
    %94 = vector.broadcast %cst_35 : f32 to vector<8x32xf32>
    %95 = arith.addf %94, %93 : vector<8x32xf32>
    %96 = arith.divf %94, %95 : vector<8x32xf32>
    %97 = vector.extract_strided_slice %81 {offsets = [0, 64], sizes = [8, 32], strides = [1, 1]} : vector<8x128xf32> to vector<8x32xf32>
    %98 = math.tanh %97 : vector<8x32xf32>
    %99 = vector.extract_strided_slice %81 {offsets = [0, 96], sizes = [8, 32], strides = [1, 1]} : vector<8x128xf32> to vector<8x32xf32>
    %100 = arith.negf %99 : vector<8x32xf32>
    %101 = math.exp %100 : vector<8x32xf32>
    %cst_36 = arith.constant 1.000000e+00 : f32
    %102 = vector.broadcast %cst_36 : f32 to vector<8x32xf32>
    %103 = arith.addf %102, %101 : vector<8x32xf32>
    %104 = arith.divf %102, %103 : vector<8x32xf32>
    %105 = arith.mulf %96, %46 : vector<8x32xf32>
    %106 = arith.mulf %90, %98 : vector<8x32xf32>
    %107 = arith.addf %105, %106 : vector<8x32xf32>
    %108 = math.tanh %107 : vector<8x32xf32>
    %109 = arith.mulf %104, %108 : vector<8x32xf32>
    %110 = vector.extract_strided_slice %84 {offsets = [0, 0], sizes = [8, 32], strides = [1, 1]} : vector<8x128xf32> to vector<8x32xf32>
    %111 = arith.negf %110 : vector<8x32xf32>
    %112 = math.exp %111 : vector<8x32xf32>
    %cst_37 = arith.constant 1.000000e+00 : f32
    %113 = vector.broadcast %cst_37 : f32 to vector<8x32xf32>
    %114 = arith.addf %113, %112 : vector<8x32xf32>
    %115 = arith.divf %113, %114 : vector<8x32xf32>
    %116 = vector.extract_strided_slice %84 {offsets = [0, 32], sizes = [8, 32], strides = [1, 1]} : vector<8x128xf32> to vector<8x32xf32>
    %117 = arith.negf %116 : vector<8x32xf32>
    %118 = math.exp %117 : vector<8x32xf32>
    %cst_38 = arith.constant 1.000000e+00 : f32
    %119 = vector.broadcast %cst_38 : f32 to vector<8x32xf32>
    %120 = arith.addf %119, %118 : vector<8x32xf32>
    %121 = arith.divf %119, %120 : vector<8x32xf32>
    %122 = vector.extract_strided_slice %84 {offsets = [0, 64], sizes = [8, 32], strides = [1, 1]} : vector<8x128xf32> to vector<8x32xf32>
    %123 = math.tanh %122 : vector<8x32xf32>
    %124 = vector.extract_strided_slice %84 {offsets = [0, 96], sizes = [8, 32], strides = [1, 1]} : vector<8x128xf32> to vector<8x32xf32>
    %125 = arith.negf %124 : vector<8x32xf32>
    %126 = math.exp %125 : vector<8x32xf32>
    %cst_39 = arith.constant 1.000000e+00 : f32
    %127 = vector.broadcast %cst_39 : f32 to vector<8x32xf32>
    %128 = arith.addf %127, %126 : vector<8x32xf32>
    %129 = arith.divf %127, %128 : vector<8x32xf32>
    %130 = arith.mulf %121, %71 : vector<8x32xf32>
    %131 = arith.mulf %115, %123 : vector<8x32xf32>
    %132 = arith.addf %130, %131 : vector<8x32xf32>
    %133 = math.tanh %132 : vector<8x32xf32>
    %134 = arith.mulf %129, %133 : vector<8x32xf32>
    %c8_40 = arith.constant 8 : index
    %c0_41 = arith.constant 0 : index
    %135 = vector.load %arg17[%c8_40, %c0_41] : memref<64x32xf32, #tpu.memory_space<vmem>>, vector<8x32xf32>
    tpu.vector_store %arg17[%c8_40, %c0_41], %109 {strides = array<i32>} : memref<64x32xf32, #tpu.memory_space<vmem>>, vector<8x32xf32>,
    %c48_42 = arith.constant 48 : index
    %c0_43 = arith.constant 0 : index
    %136 = vector.load %arg18[%c48_42, %c0_43] : memref<64x32xf32, #tpu.memory_space<vmem>>, vector<8x32xf32>
    tpu.vector_store %arg18[%c48_42, %c0_43], %134 {strides = array<i32>} : memref<64x32xf32, #tpu.memory_space<vmem>>, vector<8x32xf32>,
    %137 = tpu.concatenate %109, %134 in 1 : vector<8x32xf32>, vector<8x32xf32> -> vector<8x64xf32>
    %138 = arith.truncf %137 : vector<8x64xf32> to vector<8x64xbf16>
    %cst_44 = arith.constant dense<0.000000e+00> : vector<8x256xf32>
    %139 = tpu.matmul %138, %13, %cst_44 {dimension_numbers = #tpu.dot_dimension_numbers<[1], [0], [0], [1], [0, 0, 1, 1], [], []>} : vector<8x64xbf16>, vector<64x256xbf16>, vector<8x256xf32> -> vector<8x256xf32>
    %c16 = arith.constant 16 : index
    %c0_45 = arith.constant 0 : index
    %140 = vector.load %arg15[%c16, %c0_45] : memref<64x128xf32, #tpu.memory_space<vmem>>, vector<8x128xf32>
    %141 = vector.extract_strided_slice %139 {offsets = [0, 0], sizes = [8, 128], strides = [1, 1]} : vector<8x256xf32> to vector<8x128xf32>
    %142 = arith.addf %140, %141 : vector<8x128xf32>
    %c40 = arith.constant 40 : index
    %c0_46 = arith.constant 0 : index
    %143 = vector.load %arg16[%c40, %c0_46] : memref<64x128xf32, #tpu.memory_space<vmem>>, vector<8x128xf32>
    %144 = vector.extract_strided_slice %139 {offsets = [0, 128], sizes = [8, 128], strides = [1, 1]} : vector<8x256xf32> to vector<8x128xf32>
    %145 = arith.addf %143, %144 : vector<8x128xf32>
    %146 = vector.extract_strided_slice %142 {offsets = [0, 0], sizes = [8, 32], strides = [1, 1]} : vector<8x128xf32> to vector<8x32xf32>
    %147 = arith.negf %146 : vector<8x32xf32>
    %148 = math.exp %147 : vector<8x32xf32>
    %cst_47 = arith.constant 1.000000e+00 : f32
    %149 = vector.broadcast %cst_47 : f32 to vector<8x32xf32>
    %150 = arith.addf %149, %148 : vector<8x32xf32>
    %151 = arith.divf %149, %150 : vector<8x32xf32>
    %152 = vector.extract_strided_slice %142 {offsets = [0, 32], sizes = [8, 32], strides = [1, 1]} : vector<8x128xf32> to vector<8x32xf32>
    %153 = arith.negf %152 : vector<8x32xf32>
    %154 = math.exp %153 : vector<8x32xf32>
    %cst_48 = arith.constant 1.000000e+00 : f32
    %155 = vector.broadcast %cst_48 : f32 to vector<8x32xf32>
    %156 = arith.addf %155, %154 : vector<8x32xf32>
    %157 = arith.divf %155, %156 : vector<8x32xf32>
    %158 = vector.extract_strided_slice %142 {offsets = [0, 64], sizes = [8, 32], strides = [1, 1]} : vector<8x128xf32> to vector<8x32xf32>
    %159 = math.tanh %158 : vector<8x32xf32>
    %160 = vector.extract_strided_slice %142 {offsets = [0, 96], sizes = [8, 32], strides = [1, 1]} : vector<8x128xf32> to vector<8x32xf32>
    %161 = arith.negf %160 : vector<8x32xf32>
    %162 = math.exp %161 : vector<8x32xf32>
    %cst_49 = arith.constant 1.000000e+00 : f32
    %163 = vector.broadcast %cst_49 : f32 to vector<8x32xf32>
    %164 = arith.addf %163, %162 : vector<8x32xf32>
    %165 = arith.divf %163, %164 : vector<8x32xf32>
    %166 = arith.mulf %157, %107 : vector<8x32xf32>
    %167 = arith.mulf %151, %159 : vector<8x32xf32>
    %168 = arith.addf %166, %167 : vector<8x32xf32>
    %169 = math.tanh %168 : vector<8x32xf32>
    %170 = arith.mulf %165, %169 : vector<8x32xf32>
    %171 = vector.extract_strided_slice %145 {offsets = [0, 0], sizes = [8, 32], strides = [1, 1]} : vector<8x128xf32> to vector<8x32xf32>
    %172 = arith.negf %171 : vector<8x32xf32>
    %173 = math.exp %172 : vector<8x32xf32>
    %cst_50 = arith.constant 1.000000e+00 : f32
    %174 = vector.broadcast %cst_50 : f32 to vector<8x32xf32>
    %175 = arith.addf %174, %173 : vector<8x32xf32>
    %176 = arith.divf %174, %175 : vector<8x32xf32>
    %177 = vector.extract_strided_slice %145 {offsets = [0, 32], sizes = [8, 32], strides = [1, 1]} : vector<8x128xf32> to vector<8x32xf32>
    %178 = arith.negf %177 : vector<8x32xf32>
    %179 = math.exp %178 : vector<8x32xf32>
    %cst_51 = arith.constant 1.000000e+00 : f32
    %180 = vector.broadcast %cst_51 : f32 to vector<8x32xf32>
    %181 = arith.addf %180, %179 : vector<8x32xf32>
    %182 = arith.divf %180, %181 : vector<8x32xf32>
    %183 = vector.extract_strided_slice %145 {offsets = [0, 64], sizes = [8, 32], strides = [1, 1]} : vector<8x128xf32> to vector<8x32xf32>
    %184 = math.tanh %183 : vector<8x32xf32>
    %185 = vector.extract_strided_slice %145 {offsets = [0, 96], sizes = [8, 32], strides = [1, 1]} : vector<8x128xf32> to vector<8x32xf32>
    %186 = arith.negf %185 : vector<8x32xf32>
    %187 = math.exp %186 : vector<8x32xf32>
    %cst_52 = arith.constant 1.000000e+00 : f32
    %188 = vector.broadcast %cst_52 : f32 to vector<8x32xf32>
    %189 = arith.addf %188, %187 : vector<8x32xf32>
    %190 = arith.divf %188, %189 : vector<8x32xf32>
    %191 = arith.mulf %182, %132 : vector<8x32xf32>
    %192 = arith.mulf %176, %184 : vector<8x32xf32>
    %193 = arith.addf %191, %192 : vector<8x32xf32>
    %194 = math.tanh %193 : vector<8x32xf32>
    %195 = arith.mulf %190, %194 : vector<8x32xf32>
    %c16_53 = arith.constant 16 : index
    %c0_54 = arith.constant 0 : index
    %196 = vector.load %arg17[%c16_53, %c0_54] : memref<64x32xf32, #tpu.memory_space<vmem>>, vector<8x32xf32>
    tpu.vector_store %arg17[%c16_53, %c0_54], %170 {strides = array<i32>} : memref<64x32xf32, #tpu.memory_space<vmem>>, vector<8x32xf32>,
    %c40_55 = arith.constant 40 : index
    %c0_56 = arith.constant 0 : index
    %197 = vector.load %arg18[%c40_55, %c0_56] : memref<64x32xf32, #tpu.memory_space<vmem>>, vector<8x32xf32>
    tpu.vector_store %arg18[%c40_55, %c0_56], %195 {strides = array<i32>} : memref<64x32xf32, #tpu.memory_space<vmem>>, vector<8x32xf32>,
    %198 = tpu.concatenate %170, %195 in 1 : vector<8x32xf32>, vector<8x32xf32> -> vector<8x64xf32>
    %199 = arith.truncf %198 : vector<8x64xf32> to vector<8x64xbf16>
    %cst_57 = arith.constant dense<0.000000e+00> : vector<8x256xf32>
    %200 = tpu.matmul %199, %13, %cst_57 {dimension_numbers = #tpu.dot_dimension_numbers<[1], [0], [0], [1], [0, 0, 1, 1], [], []>} : vector<8x64xbf16>, vector<64x256xbf16>, vector<8x256xf32> -> vector<8x256xf32>
    %c24 = arith.constant 24 : index
    %c0_58 = arith.constant 0 : index
    %201 = vector.load %arg15[%c24, %c0_58] : memref<64x128xf32, #tpu.memory_space<vmem>>, vector<8x128xf32>
    %202 = vector.extract_strided_slice %200 {offsets = [0, 0], sizes = [8, 128], strides = [1, 1]} : vector<8x256xf32> to vector<8x128xf32>
    %203 = arith.addf %201, %202 : vector<8x128xf32>
    %c32 = arith.constant 32 : index
    %c0_59 = arith.constant 0 : index
    %204 = vector.load %arg16[%c32, %c0_59] : memref<64x128xf32, #tpu.memory_space<vmem>>, vector<8x128xf32>
    %205 = vector.extract_strided_slice %200 {offsets = [0, 128], sizes = [8, 128], strides = [1, 1]} : vector<8x256xf32> to vector<8x128xf32>
    %206 = arith.addf %204, %205 : vector<8x128xf32>
    %207 = vector.extract_strided_slice %203 {offsets = [0, 0], sizes = [8, 32], strides = [1, 1]} : vector<8x128xf32> to vector<8x32xf32>
    %208 = arith.negf %207 : vector<8x32xf32>
    %209 = math.exp %208 : vector<8x32xf32>
    %cst_60 = arith.constant 1.000000e+00 : f32
    %210 = vector.broadcast %cst_60 : f32 to vector<8x32xf32>
    %211 = arith.addf %210, %209 : vector<8x32xf32>
    %212 = arith.divf %210, %211 : vector<8x32xf32>
    %213 = vector.extract_strided_slice %203 {offsets = [0, 32], sizes = [8, 32], strides = [1, 1]} : vector<8x128xf32> to vector<8x32xf32>
    %214 = arith.negf %213 : vector<8x32xf32>
    %215 = math.exp %214 : vector<8x32xf32>
    %cst_61 = arith.constant 1.000000e+00 : f32
    %216 = vector.broadcast %cst_61 : f32 to vector<8x32xf32>
    %217 = arith.addf %216, %215 : vector<8x32xf32>
    %218 = arith.divf %216, %217 : vector<8x32xf32>
    %219 = vector.extract_strided_slice %203 {offsets = [0, 64], sizes = [8, 32], strides = [1, 1]} : vector<8x128xf32> to vector<8x32xf32>
    %220 = math.tanh %219 : vector<8x32xf32>
    %221 = vector.extract_strided_slice %203 {offsets = [0, 96], sizes = [8, 32], strides = [1, 1]} : vector<8x128xf32> to vector<8x32xf32>
    %222 = arith.negf %221 : vector<8x32xf32>
    %223 = math.exp %222 : vector<8x32xf32>
    %cst_62 = arith.constant 1.000000e+00 : f32
    %224 = vector.broadcast %cst_62 : f32 to vector<8x32xf32>
    %225 = arith.addf %224, %223 : vector<8x32xf32>
    %226 = arith.divf %224, %225 : vector<8x32xf32>
    %227 = arith.mulf %218, %168 : vector<8x32xf32>
    %228 = arith.mulf %212, %220 : vector<8x32xf32>
    %229 = arith.addf %227, %228 : vector<8x32xf32>
    %230 = math.tanh %229 : vector<8x32xf32>
    %231 = arith.mulf %226, %230 : vector<8x32xf32>
    %232 = vector.extract_strided_slice %206 {offsets = [0, 0], sizes = [8, 32], strides = [1, 1]} : vector<8x128xf32> to vector<8x32xf32>
    %233 = arith.negf %232 : vector<8x32xf32>
    %234 = math.exp %233 : vector<8x32xf32>
    %cst_63 = arith.constant 1.000000e+00 : f32
    %235 = vector.broadcast %cst_63 : f32 to vector<8x32xf32>
    %236 = arith.addf %235, %234 : vector<8x32xf32>
    %237 = arith.divf %235, %236 : vector<8x32xf32>
    %238 = vector.extract_strided_slice %206 {offsets = [0, 32], sizes = [8, 32], strides = [1, 1]} : vector<8x128xf32> to vector<8x32xf32>
    %239 = arith.negf %238 : vector<8x32xf32>
    %240 = math.exp %239 : vector<8x32xf32>
    %cst_64 = arith.constant 1.000000e+00 : f32
    %241 = vector.broadcast %cst_64 : f32 to vector<8x32xf32>
    %242 = arith.addf %241, %240 : vector<8x32xf32>
    %243 = arith.divf %241, %242 : vector<8x32xf32>
    %244 = vector.extract_strided_slice %206 {offsets = [0, 64], sizes = [8, 32], strides = [1, 1]} : vector<8x128xf32> to vector<8x32xf32>
    %245 = math.tanh %244 : vector<8x32xf32>
    %246 = vector.extract_strided_slice %206 {offsets = [0, 96], sizes = [8, 32], strides = [1, 1]} : vector<8x128xf32> to vector<8x32xf32>
    %247 = arith.negf %246 : vector<8x32xf32>
    %248 = math.exp %247 : vector<8x32xf32>
    %cst_65 = arith.constant 1.000000e+00 : f32
    %249 = vector.broadcast %cst_65 : f32 to vector<8x32xf32>
    %250 = arith.addf %249, %248 : vector<8x32xf32>
    %251 = arith.divf %249, %250 : vector<8x32xf32>
    %252 = arith.mulf %243, %193 : vector<8x32xf32>
    %253 = arith.mulf %237, %245 : vector<8x32xf32>
    %254 = arith.addf %252, %253 : vector<8x32xf32>
    %255 = math.tanh %254 : vector<8x32xf32>
    %256 = arith.mulf %251, %255 : vector<8x32xf32>
    %c24_66 = arith.constant 24 : index
    %c0_67 = arith.constant 0 : index
    %257 = vector.load %arg17[%c24_66, %c0_67] : memref<64x32xf32, #tpu.memory_space<vmem>>, vector<8x32xf32>
    tpu.vector_store %arg17[%c24_66, %c0_67], %231 {strides = array<i32>} : memref<64x32xf32, #tpu.memory_space<vmem>>, vector<8x32xf32>,
    %c32_68 = arith.constant 32 : index
    %c0_69 = arith.constant 0 : index
    %258 = vector.load %arg18[%c32_68, %c0_69] : memref<64x32xf32, #tpu.memory_space<vmem>>, vector<8x32xf32>
    tpu.vector_store %arg18[%c32_68, %c0_69], %256 {strides = array<i32>} : memref<64x32xf32, #tpu.memory_space<vmem>>, vector<8x32xf32>,
    %259 = tpu.concatenate %231, %256 in 1 : vector<8x32xf32>, vector<8x32xf32> -> vector<8x64xf32>
    %260 = arith.truncf %259 : vector<8x64xf32> to vector<8x64xbf16>
    %cst_70 = arith.constant dense<0.000000e+00> : vector<8x256xf32>
    %261 = tpu.matmul %260, %13, %cst_70 {dimension_numbers = #tpu.dot_dimension_numbers<[1], [0], [0], [1], [0, 0, 1, 1], [], []>} : vector<8x64xbf16>, vector<64x256xbf16>, vector<8x256xf32> -> vector<8x256xf32>
    %c32_71 = arith.constant 32 : index
    %c0_72 = arith.constant 0 : index
    %262 = vector.load %arg15[%c32_71, %c0_72] : memref<64x128xf32, #tpu.memory_space<vmem>>, vector<8x128xf32>
    %263 = vector.extract_strided_slice %261 {offsets = [0, 0], sizes = [8, 128], strides = [1, 1]} : vector<8x256xf32> to vector<8x128xf32>
    %264 = arith.addf %262, %263 : vector<8x128xf32>
    %c24_73 = arith.constant 24 : index
    %c0_74 = arith.constant 0 : index
    %265 = vector.load %arg16[%c24_73, %c0_74] : memref<64x128xf32, #tpu.memory_space<vmem>>, vector<8x128xf32>
    %266 = vector.extract_strided_slice %261 {offsets = [0, 128], sizes = [8, 128], strides = [1, 1]} : vector<8x256xf32> to vector<8x128xf32>
    %267 = arith.addf %265, %266 : vector<8x128xf32>
    %268 = vector.extract_strided_slice %264 {offsets = [0, 0], sizes = [8, 32], strides = [1, 1]} : vector<8x128xf32> to vector<8x32xf32>
    %269 = arith.negf %268 : vector<8x32xf32>
    %270 = math.exp %269 : vector<8x32xf32>
    %cst_75 = arith.constant 1.000000e+00 : f32
    %271 = vector.broadcast %cst_75 : f32 to vector<8x32xf32>
    %272 = arith.addf %271, %270 : vector<8x32xf32>
    %273 = arith.divf %271, %272 : vector<8x32xf32>
    %274 = vector.extract_strided_slice %264 {offsets = [0, 32], sizes = [8, 32], strides = [1, 1]} : vector<8x128xf32> to vector<8x32xf32>
    %275 = arith.negf %274 : vector<8x32xf32>
    %276 = math.exp %275 : vector<8x32xf32>
    %cst_76 = arith.constant 1.000000e+00 : f32
    %277 = vector.broadcast %cst_76 : f32 to vector<8x32xf32>
    %278 = arith.addf %277, %276 : vector<8x32xf32>
    %279 = arith.divf %277, %278 : vector<8x32xf32>
    %280 = vector.extract_strided_slice %264 {offsets = [0, 64], sizes = [8, 32], strides = [1, 1]} : vector<8x128xf32> to vector<8x32xf32>
    %281 = math.tanh %280 : vector<8x32xf32>
    %282 = vector.extract_strided_slice %264 {offsets = [0, 96], sizes = [8, 32], strides = [1, 1]} : vector<8x128xf32> to vector<8x32xf32>
    %283 = arith.negf %282 : vector<8x32xf32>
    %284 = math.exp %283 : vector<8x32xf32>
    %cst_77 = arith.constant 1.000000e+00 : f32
    %285 = vector.broadcast %cst_77 : f32 to vector<8x32xf32>
    %286 = arith.addf %285, %284 : vector<8x32xf32>
    %287 = arith.divf %285, %286 : vector<8x32xf32>
    %288 = arith.mulf %279, %229 : vector<8x32xf32>
    %289 = arith.mulf %273, %281 : vector<8x32xf32>
    %290 = arith.addf %288, %289 : vector<8x32xf32>
    %291 = math.tanh %290 : vector<8x32xf32>
    %292 = arith.mulf %287, %291 : vector<8x32xf32>
    %293 = vector.extract_strided_slice %267 {offsets = [0, 0], sizes = [8, 32], strides = [1, 1]} : vector<8x128xf32> to vector<8x32xf32>
    %294 = arith.negf %293 : vector<8x32xf32>
    %295 = math.exp %294 : vector<8x32xf32>
    %cst_78 = arith.constant 1.000000e+00 : f32
    %296 = vector.broadcast %cst_78 : f32 to vector<8x32xf32>
    %297 = arith.addf %296, %295 : vector<8x32xf32>
    %298 = arith.divf %296, %297 : vector<8x32xf32>
    %299 = vector.extract_strided_slice %267 {offsets = [0, 32], sizes = [8, 32], strides = [1, 1]} : vector<8x128xf32> to vector<8x32xf32>
    %300 = arith.negf %299 : vector<8x32xf32>
    %301 = math.exp %300 : vector<8x32xf32>
    %cst_79 = arith.constant 1.000000e+00 : f32
    %302 = vector.broadcast %cst_79 : f32 to vector<8x32xf32>
    %303 = arith.addf %302, %301 : vector<8x32xf32>
    %304 = arith.divf %302, %303 : vector<8x32xf32>
    %305 = vector.extract_strided_slice %267 {offsets = [0, 64], sizes = [8, 32], strides = [1, 1]} : vector<8x128xf32> to vector<8x32xf32>
    %306 = math.tanh %305 : vector<8x32xf32>
    %307 = vector.extract_strided_slice %267 {offsets = [0, 96], sizes = [8, 32], strides = [1, 1]} : vector<8x128xf32> to vector<8x32xf32>
    %308 = arith.negf %307 : vector<8x32xf32>
    %309 = math.exp %308 : vector<8x32xf32>
    %cst_80 = arith.constant 1.000000e+00 : f32
    %310 = vector.broadcast %cst_80 : f32 to vector<8x32xf32>
    %311 = arith.addf %310, %309 : vector<8x32xf32>
    %312 = arith.divf %310, %311 : vector<8x32xf32>
    %313 = arith.mulf %304, %254 : vector<8x32xf32>
    %314 = arith.mulf %298, %306 : vector<8x32xf32>
    %315 = arith.addf %313, %314 : vector<8x32xf32>
    %316 = math.tanh %315 : vector<8x32xf32>
    %317 = arith.mulf %312, %316 : vector<8x32xf32>
    %c32_81 = arith.constant 32 : index
    %c0_82 = arith.constant 0 : index
    %318 = vector.load %arg17[%c32_81, %c0_82] : memref<64x32xf32, #tpu.memory_space<vmem>>, vector<8x32xf32>
    tpu.vector_store %arg17[%c32_81, %c0_82], %292 {strides = array<i32>} : memref<64x32xf32, #tpu.memory_space<vmem>>, vector<8x32xf32>,
    %c24_83 = arith.constant 24 : index
    %c0_84 = arith.constant 0 : index
    %319 = vector.load %arg18[%c24_83, %c0_84] : memref<64x32xf32, #tpu.memory_space<vmem>>, vector<8x32xf32>
    tpu.vector_store %arg18[%c24_83, %c0_84], %317 {strides = array<i32>} : memref<64x32xf32, #tpu.memory_space<vmem>>, vector<8x32xf32>,
    %320 = tpu.concatenate %292, %317 in 1 : vector<8x32xf32>, vector<8x32xf32> -> vector<8x64xf32>
    %321 = arith.truncf %320 : vector<8x64xf32> to vector<8x64xbf16>
    %cst_85 = arith.constant dense<0.000000e+00> : vector<8x256xf32>
    %322 = tpu.matmul %321, %13, %cst_85 {dimension_numbers = #tpu.dot_dimension_numbers<[1], [0], [0], [1], [0, 0, 1, 1], [], []>} : vector<8x64xbf16>, vector<64x256xbf16>, vector<8x256xf32> -> vector<8x256xf32>
    %c40_86 = arith.constant 40 : index
    %c0_87 = arith.constant 0 : index
    %323 = vector.load %arg15[%c40_86, %c0_87] : memref<64x128xf32, #tpu.memory_space<vmem>>, vector<8x128xf32>
    %324 = vector.extract_strided_slice %322 {offsets = [0, 0], sizes = [8, 128], strides = [1, 1]} : vector<8x256xf32> to vector<8x128xf32>
    %325 = arith.addf %323, %324 : vector<8x128xf32>
    %c16_88 = arith.constant 16 : index
    %c0_89 = arith.constant 0 : index
    %326 = vector.load %arg16[%c16_88, %c0_89] : memref<64x128xf32, #tpu.memory_space<vmem>>, vector<8x128xf32>
    %327 = vector.extract_strided_slice %322 {offsets = [0, 128], sizes = [8, 128], strides = [1, 1]} : vector<8x256xf32> to vector<8x128xf32>
    %328 = arith.addf %326, %327 : vector<8x128xf32>
    %329 = vector.extract_strided_slice %325 {offsets = [0, 0], sizes = [8, 32], strides = [1, 1]} : vector<8x128xf32> to vector<8x32xf32>
    %330 = arith.negf %329 : vector<8x32xf32>
    %331 = math.exp %330 : vector<8x32xf32>
    %cst_90 = arith.constant 1.000000e+00 : f32
    %332 = vector.broadcast %cst_90 : f32 to vector<8x32xf32>
    %333 = arith.addf %332, %331 : vector<8x32xf32>
    %334 = arith.divf %332, %333 : vector<8x32xf32>
    %335 = vector.extract_strided_slice %325 {offsets = [0, 32], sizes = [8, 32], strides = [1, 1]} : vector<8x128xf32> to vector<8x32xf32>
    %336 = arith.negf %335 : vector<8x32xf32>
    %337 = math.exp %336 : vector<8x32xf32>
    %cst_91 = arith.constant 1.000000e+00 : f32
    %338 = vector.broadcast %cst_91 : f32 to vector<8x32xf32>
    %339 = arith.addf %338, %337 : vector<8x32xf32>
    %340 = arith.divf %338, %339 : vector<8x32xf32>
    %341 = vector.extract_strided_slice %325 {offsets = [0, 64], sizes = [8, 32], strides = [1, 1]} : vector<8x128xf32> to vector<8x32xf32>
    %342 = math.tanh %341 : vector<8x32xf32>
    %343 = vector.extract_strided_slice %325 {offsets = [0, 96], sizes = [8, 32], strides = [1, 1]} : vector<8x128xf32> to vector<8x32xf32>
    %344 = arith.negf %343 : vector<8x32xf32>
    %345 = math.exp %344 : vector<8x32xf32>
    %cst_92 = arith.constant 1.000000e+00 : f32
    %346 = vector.broadcast %cst_92 : f32 to vector<8x32xf32>
    %347 = arith.addf %346, %345 : vector<8x32xf32>
    %348 = arith.divf %346, %347 : vector<8x32xf32>
    %349 = arith.mulf %340, %290 : vector<8x32xf32>
    %350 = arith.mulf %334, %342 : vector<8x32xf32>
    %351 = arith.addf %349, %350 : vector<8x32xf32>
    %352 = math.tanh %351 : vector<8x32xf32>
    %353 = arith.mulf %348, %352 : vector<8x32xf32>
    %354 = vector.extract_strided_slice %328 {offsets = [0, 0], sizes = [8, 32], strides = [1, 1]} : vector<8x128xf32> to vector<8x32xf32>
    %355 = arith.negf %354 : vector<8x32xf32>
    %356 = math.exp %355 : vector<8x32xf32>
    %cst_93 = arith.constant 1.000000e+00 : f32
    %357 = vector.broadcast %cst_93 : f32 to vector<8x32xf32>
    %358 = arith.addf %357, %356 : vector<8x32xf32>
    %359 = arith.divf %357, %358 : vector<8x32xf32>
    %360 = vector.extract_strided_slice %328 {offsets = [0, 32], sizes = [8, 32], strides = [1, 1]} : vector<8x128xf32> to vector<8x32xf32>
    %361 = arith.negf %360 : vector<8x32xf32>
    %362 = math.exp %361 : vector<8x32xf32>
    %cst_94 = arith.constant 1.000000e+00 : f32
    %363 = vector.broadcast %cst_94 : f32 to vector<8x32xf32>
    %364 = arith.addf %363, %362 : vector<8x32xf32>
    %365 = arith.divf %363, %364 : vector<8x32xf32>
    %366 = vector.extract_strided_slice %328 {offsets = [0, 64], sizes = [8, 32], strides = [1, 1]} : vector<8x128xf32> to vector<8x32xf32>
    %367 = math.tanh %366 : vector<8x32xf32>
    %368 = vector.extract_strided_slice %328 {offsets = [0, 96], sizes = [8, 32], strides = [1, 1]} : vector<8x128xf32> to vector<8x32xf32>
    %369 = arith.negf %368 : vector<8x32xf32>
    %370 = math.exp %369 : vector<8x32xf32>
    %cst_95 = arith.constant 1.000000e+00 : f32
    %371 = vector.broadcast %cst_95 : f32 to vector<8x32xf32>
    %372 = arith.addf %371, %370 : vector<8x32xf32>
    %373 = arith.divf %371, %372 : vector<8x32xf32>
    %374 = arith.mulf %365, %315 : vector<8x32xf32>
    %375 = arith.mulf %359, %367 : vector<8x32xf32>
    %376 = arith.addf %374, %375 : vector<8x32xf32>
    %377 = math.tanh %376 : vector<8x32xf32>
    %378 = arith.mulf %373, %377 : vector<8x32xf32>
    %c40_96 = arith.constant 40 : index
    %c0_97 = arith.constant 0 : index
    %379 = vector.load %arg17[%c40_96, %c0_97] : memref<64x32xf32, #tpu.memory_space<vmem>>, vector<8x32xf32>
    tpu.vector_store %arg17[%c40_96, %c0_97], %353 {strides = array<i32>} : memref<64x32xf32, #tpu.memory_space<vmem>>, vector<8x32xf32>,
    %c16_98 = arith.constant 16 : index
    %c0_99 = arith.constant 0 : index
    %380 = vector.load %arg18[%c16_98, %c0_99] : memref<64x32xf32, #tpu.memory_space<vmem>>, vector<8x32xf32>
    tpu.vector_store %arg18[%c16_98, %c0_99], %378 {strides = array<i32>} : memref<64x32xf32, #tpu.memory_space<vmem>>, vector<8x32xf32>,
    %381 = tpu.concatenate %353, %378 in 1 : vector<8x32xf32>, vector<8x32xf32> -> vector<8x64xf32>
    %382 = arith.truncf %381 : vector<8x64xf32> to vector<8x64xbf16>
    %cst_100 = arith.constant dense<0.000000e+00> : vector<8x256xf32>
    %383 = tpu.matmul %382, %13, %cst_100 {dimension_numbers = #tpu.dot_dimension_numbers<[1], [0], [0], [1], [0, 0, 1, 1], [], []>} : vector<8x64xbf16>, vector<64x256xbf16>, vector<8x256xf32> -> vector<8x256xf32>
    %c48_101 = arith.constant 48 : index
    %c0_102 = arith.constant 0 : index
    %384 = vector.load %arg15[%c48_101, %c0_102] : memref<64x128xf32, #tpu.memory_space<vmem>>, vector<8x128xf32>
    %385 = vector.extract_strided_slice %383 {offsets = [0, 0], sizes = [8, 128], strides = [1, 1]} : vector<8x256xf32> to vector<8x128xf32>
    %386 = arith.addf %384, %385 : vector<8x128xf32>
    %c8_103 = arith.constant 8 : index
    %c0_104 = arith.constant 0 : index
    %387 = vector.load %arg16[%c8_103, %c0_104] : memref<64x128xf32, #tpu.memory_space<vmem>>, vector<8x128xf32>
    %388 = vector.extract_strided_slice %383 {offsets = [0, 128], sizes = [8, 128], strides = [1, 1]} : vector<8x256xf32> to vector<8x128xf32>
    %389 = arith.addf %387, %388 : vector<8x128xf32>
    %390 = vector.extract_strided_slice %386 {offsets = [0, 0], sizes = [8, 32], strides = [1, 1]} : vector<8x128xf32> to vector<8x32xf32>
    %391 = arith.negf %390 : vector<8x32xf32>
    %392 = math.exp %391 : vector<8x32xf32>
    %cst_105 = arith.constant 1.000000e+00 : f32
    %393 = vector.broadcast %cst_105 : f32 to vector<8x32xf32>
    %394 = arith.addf %393, %392 : vector<8x32xf32>
    %395 = arith.divf %393, %394 : vector<8x32xf32>
    %396 = vector.extract_strided_slice %386 {offsets = [0, 32], sizes = [8, 32], strides = [1, 1]} : vector<8x128xf32> to vector<8x32xf32>
    %397 = arith.negf %396 : vector<8x32xf32>
    %398 = math.exp %397 : vector<8x32xf32>
    %cst_106 = arith.constant 1.000000e+00 : f32
    %399 = vector.broadcast %cst_106 : f32 to vector<8x32xf32>
    %400 = arith.addf %399, %398 : vector<8x32xf32>
    %401 = arith.divf %399, %400 : vector<8x32xf32>
    %402 = vector.extract_strided_slice %386 {offsets = [0, 64], sizes = [8, 32], strides = [1, 1]} : vector<8x128xf32> to vector<8x32xf32>
    %403 = math.tanh %402 : vector<8x32xf32>
    %404 = vector.extract_strided_slice %386 {offsets = [0, 96], sizes = [8, 32], strides = [1, 1]} : vector<8x128xf32> to vector<8x32xf32>
    %405 = arith.negf %404 : vector<8x32xf32>
    %406 = math.exp %405 : vector<8x32xf32>
    %cst_107 = arith.constant 1.000000e+00 : f32
    %407 = vector.broadcast %cst_107 : f32 to vector<8x32xf32>
    %408 = arith.addf %407, %406 : vector<8x32xf32>
    %409 = arith.divf %407, %408 : vector<8x32xf32>
    %410 = arith.mulf %401, %351 : vector<8x32xf32>
    %411 = arith.mulf %395, %403 : vector<8x32xf32>
    %412 = arith.addf %410, %411 : vector<8x32xf32>
    %413 = math.tanh %412 : vector<8x32xf32>
    %414 = arith.mulf %409, %413 : vector<8x32xf32>
    %415 = vector.extract_strided_slice %389 {offsets = [0, 0], sizes = [8, 32], strides = [1, 1]} : vector<8x128xf32> to vector<8x32xf32>
    %416 = arith.negf %415 : vector<8x32xf32>
    %417 = math.exp %416 : vector<8x32xf32>
    %cst_108 = arith.constant 1.000000e+00 : f32
    %418 = vector.broadcast %cst_108 : f32 to vector<8x32xf32>
    %419 = arith.addf %418, %417 : vector<8x32xf32>
    %420 = arith.divf %418, %419 : vector<8x32xf32>
    %421 = vector.extract_strided_slice %389 {offsets = [0, 32], sizes = [8, 32], strides = [1, 1]} : vector<8x128xf32> to vector<8x32xf32>
    %422 = arith.negf %421 : vector<8x32xf32>
    %423 = math.exp %422 : vector<8x32xf32>
    %cst_109 = arith.constant 1.000000e+00 : f32
    %424 = vector.broadcast %cst_109 : f32 to vector<8x32xf32>
    %425 = arith.addf %424, %423 : vector<8x32xf32>
    %426 = arith.divf %424, %425 : vector<8x32xf32>
    %427 = vector.extract_strided_slice %389 {offsets = [0, 64], sizes = [8, 32], strides = [1, 1]} : vector<8x128xf32> to vector<8x32xf32>
    %428 = math.tanh %427 : vector<8x32xf32>
    %429 = vector.extract_strided_slice %389 {offsets = [0, 96], sizes = [8, 32], strides = [1, 1]} : vector<8x128xf32> to vector<8x32xf32>
    %430 = arith.negf %429 : vector<8x32xf32>
    %431 = math.exp %430 : vector<8x32xf32>
    %cst_110 = arith.constant 1.000000e+00 : f32
    %432 = vector.broadcast %cst_110 : f32 to vector<8x32xf32>
    %433 = arith.addf %432, %431 : vector<8x32xf32>
    %434 = arith.divf %432, %433 : vector<8x32xf32>
    %435 = arith.mulf %426, %376 : vector<8x32xf32>
    %436 = arith.mulf %420, %428 : vector<8x32xf32>
    %437 = arith.addf %435, %436 : vector<8x32xf32>
    %438 = math.tanh %437 : vector<8x32xf32>
    %439 = arith.mulf %434, %438 : vector<8x32xf32>
    %c48_111 = arith.constant 48 : index
    %c0_112 = arith.constant 0 : index
    %440 = vector.load %arg17[%c48_111, %c0_112] : memref<64x32xf32, #tpu.memory_space<vmem>>, vector<8x32xf32>
    tpu.vector_store %arg17[%c48_111, %c0_112], %414 {strides = array<i32>} : memref<64x32xf32, #tpu.memory_space<vmem>>, vector<8x32xf32>,
    %c8_113 = arith.constant 8 : index
    %c0_114 = arith.constant 0 : index
    %441 = vector.load %arg18[%c8_113, %c0_114] : memref<64x32xf32, #tpu.memory_space<vmem>>, vector<8x32xf32>
    tpu.vector_store %arg18[%c8_113, %c0_114], %439 {strides = array<i32>} : memref<64x32xf32, #tpu.memory_space<vmem>>, vector<8x32xf32>,
    %442 = tpu.concatenate %414, %439 in 1 : vector<8x32xf32>, vector<8x32xf32> -> vector<8x64xf32>
    %443 = arith.truncf %442 : vector<8x64xf32> to vector<8x64xbf16>
    %cst_115 = arith.constant dense<0.000000e+00> : vector<8x256xf32>
    %444 = tpu.matmul %443, %13, %cst_115 {dimension_numbers = #tpu.dot_dimension_numbers<[1], [0], [0], [1], [0, 0, 1, 1], [], []>} : vector<8x64xbf16>, vector<64x256xbf16>, vector<8x256xf32> -> vector<8x256xf32>
    %c56_116 = arith.constant 56 : index
    %c0_117 = arith.constant 0 : index
    %445 = vector.load %arg15[%c56_116, %c0_117] : memref<64x128xf32, #tpu.memory_space<vmem>>, vector<8x128xf32>
    %446 = vector.extract_strided_slice %444 {offsets = [0, 0], sizes = [8, 128], strides = [1, 1]} : vector<8x256xf32> to vector<8x128xf32>
    %447 = arith.addf %445, %446 : vector<8x128xf32>
    %c0_118 = arith.constant 0 : index
    %c0_119 = arith.constant 0 : index
    %448 = vector.load %arg16[%c0_118, %c0_119] : memref<64x128xf32, #tpu.memory_space<vmem>>, vector<8x128xf32>
    %449 = vector.extract_strided_slice %444 {offsets = [0, 128], sizes = [8, 128], strides = [1, 1]} : vector<8x256xf32> to vector<8x128xf32>
    %450 = arith.addf %448, %449 : vector<8x128xf32>
    %451 = vector.extract_strided_slice %447 {offsets = [0, 0], sizes = [8, 32], strides = [1, 1]} : vector<8x128xf32> to vector<8x32xf32>
    %452 = arith.negf %451 : vector<8x32xf32>
    %453 = math.exp %452 : vector<8x32xf32>
    %cst_120 = arith.constant 1.000000e+00 : f32
    %454 = vector.broadcast %cst_120 : f32 to vector<8x32xf32>
    %455 = arith.addf %454, %453 : vector<8x32xf32>
    %456 = arith.divf %454, %455 : vector<8x32xf32>
    %457 = vector.extract_strided_slice %447 {offsets = [0, 32], sizes = [8, 32], strides = [1, 1]} : vector<8x128xf32> to vector<8x32xf32>
    %458 = arith.negf %457 : vector<8x32xf32>
    %459 = math.exp %458 : vector<8x32xf32>
    %cst_121 = arith.constant 1.000000e+00 : f32
    %460 = vector.broadcast %cst_121 : f32 to vector<8x32xf32>
    %461 = arith.addf %460, %459 : vector<8x32xf32>
    %462 = arith.divf %460, %461 : vector<8x32xf32>
    %463 = vector.extract_strided_slice %447 {offsets = [0, 64], sizes = [8, 32], strides = [1, 1]} : vector<8x128xf32> to vector<8x32xf32>
    %464 = math.tanh %463 : vector<8x32xf32>
    %465 = vector.extract_strided_slice %447 {offsets = [0, 96], sizes = [8, 32], strides = [1, 1]} : vector<8x128xf32> to vector<8x32xf32>
    %466 = arith.negf %465 : vector<8x32xf32>
    %467 = math.exp %466 : vector<8x32xf32>
    %cst_122 = arith.constant 1.000000e+00 : f32
    %468 = vector.broadcast %cst_122 : f32 to vector<8x32xf32>
    %469 = arith.addf %468, %467 : vector<8x32xf32>
    %470 = arith.divf %468, %469 : vector<8x32xf32>
    %471 = arith.mulf %462, %412 : vector<8x32xf32>
    %472 = arith.mulf %456, %464 : vector<8x32xf32>
    %473 = arith.addf %471, %472 : vector<8x32xf32>
    %474 = math.tanh %473 : vector<8x32xf32>
    %475 = arith.mulf %470, %474 : vector<8x32xf32>
    %476 = vector.extract_strided_slice %450 {offsets = [0, 0], sizes = [8, 32], strides = [1, 1]} : vector<8x128xf32> to vector<8x32xf32>
    %477 = arith.negf %476 : vector<8x32xf32>
    %478 = math.exp %477 : vector<8x32xf32>
    %cst_123 = arith.constant 1.000000e+00 : f32
    %479 = vector.broadcast %cst_123 : f32 to vector<8x32xf32>
    %480 = arith.addf %479, %478 : vector<8x32xf32>
    %481 = arith.divf %479, %480 : vector<8x32xf32>
    %482 = vector.extract_strided_slice %450 {offsets = [0, 32], sizes = [8, 32], strides = [1, 1]} : vector<8x128xf32> to vector<8x32xf32>
    %483 = arith.negf %482 : vector<8x32xf32>
    %484 = math.exp %483 : vector<8x32xf32>
    %cst_124 = arith.constant 1.000000e+00 : f32
    %485 = vector.broadcast %cst_124 : f32 to vector<8x32xf32>
    %486 = arith.addf %485, %484 : vector<8x32xf32>
    %487 = arith.divf %485, %486 : vector<8x32xf32>
    %488 = vector.extract_strided_slice %450 {offsets = [0, 64], sizes = [8, 32], strides = [1, 1]} : vector<8x128xf32> to vector<8x32xf32>
    %489 = math.tanh %488 : vector<8x32xf32>
    %490 = vector.extract_strided_slice %450 {offsets = [0, 96], sizes = [8, 32], strides = [1, 1]} : vector<8x128xf32> to vector<8x32xf32>
    %491 = arith.negf %490 : vector<8x32xf32>
    %492 = math.exp %491 : vector<8x32xf32>
    %cst_125 = arith.constant 1.000000e+00 : f32
    %493 = vector.broadcast %cst_125 : f32 to vector<8x32xf32>
    %494 = arith.addf %493, %492 : vector<8x32xf32>
    %495 = arith.divf %493, %494 : vector<8x32xf32>
    %496 = arith.mulf %487, %437 : vector<8x32xf32>
    %497 = arith.mulf %481, %489 : vector<8x32xf32>
    %498 = arith.addf %496, %497 : vector<8x32xf32>
    %499 = math.tanh %498 : vector<8x32xf32>
    %500 = arith.mulf %495, %499 : vector<8x32xf32>
    %c56_126 = arith.constant 56 : index
    %c0_127 = arith.constant 0 : index
    %501 = vector.load %arg17[%c56_126, %c0_127] : memref<64x32xf32, #tpu.memory_space<vmem>>, vector<8x32xf32>
    tpu.vector_store %arg17[%c56_126, %c0_127], %475 {strides = array<i32>} : memref<64x32xf32, #tpu.memory_space<vmem>>, vector<8x32xf32>,
    %c0_128 = arith.constant 0 : index
    %c0_129 = arith.constant 0 : index
    %502 = vector.load %arg18[%c0_128, %c0_129] : memref<64x32xf32, #tpu.memory_space<vmem>>, vector<8x32xf32>
    tpu.vector_store %arg18[%c0_128, %c0_129], %500 {strides = array<i32>} : memref<64x32xf32, #tpu.memory_space<vmem>>, vector<8x32xf32>,
    %c0_130 = arith.constant 0 : index
    %c0_131 = arith.constant 0 : index
    %503 = vector.load %arg17[%c0_130, %c0_131] : memref<64x32xf32, #tpu.memory_space<vmem>>, vector<64x32xf32>
    %504 = arith.truncf %503 : vector<64x32xf32> to vector<64x32xbf16>
    %c0_132 = arith.constant 0 : index
    %c0_133 = arith.constant 0 : index
    %505 = vector.load %arg18[%c0_132, %c0_133] : memref<64x32xf32, #tpu.memory_space<vmem>>, vector<64x32xf32>
    %506 = arith.truncf %505 : vector<64x32xf32> to vector<64x32xbf16>
    %c0_134 = arith.constant 0 : index
    %c0_135 = arith.constant 0 : index
    %507 = vector.load %arg7[%c0_134, %c0_135] : memref<64x128xbf16, #tpu.memory_space<vmem>>, vector<64x128xbf16>
    %c0_136 = arith.constant 0 : index
    %c0_137 = arith.constant 0 : index
    %508 = vector.load %arg8[%c0_136, %c0_137] : memref<64x128xbf16, #tpu.memory_space<vmem>>, vector<64x128xbf16>
    %509 = vector.extract_strided_slice %507 {offsets = [0, 0], sizes = [32, 128], strides = [1, 1]} : vector<64x128xbf16> to vector<32x128xbf16>
    %cst_138 = arith.constant dense<0.000000e+00> : vector<64x128xf32>
    %510 = tpu.matmul %504, %509, %cst_138 {dimension_numbers = #tpu.dot_dimension_numbers<[1], [0], [0], [1], [0, 0, 1, 1], [], []>} : vector<64x32xbf16>, vector<32x128xbf16>, vector<64x128xf32> -> vector<64x128xf32>
    %511 = vector.extract_strided_slice %507 {offsets = [32, 0], sizes = [32, 128], strides = [1, 1]} : vector<64x128xbf16> to vector<32x128xbf16>
    %cst_139 = arith.constant dense<0.000000e+00> : vector<64x128xf32>
    %512 = tpu.matmul %506, %511, %cst_139 {dimension_numbers = #tpu.dot_dimension_numbers<[1], [0], [0], [1], [0, 0, 1, 1], [], []>} : vector<64x32xbf16>, vector<32x128xbf16>, vector<64x128xf32> -> vector<64x128xf32>
    %513 = arith.addf %510, %512 : vector<64x128xf32>
    %c0_140 = arith.constant 0 : index
    %c0_141 = arith.constant 0 : index
    %514 = vector.load %arg9[%c0_140, %c0_141] : memref<1x128xf32, #tpu.memory_space<vmem>>, vector<1x128xf32>
    %515 = vector.broadcast %514 : vector<1x128xf32> to vector<64x128xf32>
    %516 = arith.addf %513, %515 : vector<64x128xf32>
    %517 = vector.extract_strided_slice %508 {offsets = [0, 0], sizes = [32, 128], strides = [1, 1]} : vector<64x128xbf16> to vector<32x128xbf16>
    %cst_142 = arith.constant dense<0.000000e+00> : vector<64x128xf32>
    %518 = tpu.matmul %504, %517, %cst_142 {dimension_numbers = #tpu.dot_dimension_numbers<[1], [0], [0], [1], [0, 0, 1, 1], [], []>} : vector<64x32xbf16>, vector<32x128xbf16>, vector<64x128xf32> -> vector<64x128xf32>
    %519 = vector.extract_strided_slice %508 {offsets = [32, 0], sizes = [32, 128], strides = [1, 1]} : vector<64x128xbf16> to vector<32x128xbf16>
    %cst_143 = arith.constant dense<0.000000e+00> : vector<64x128xf32>
    %520 = tpu.matmul %506, %519, %cst_143 {dimension_numbers = #tpu.dot_dimension_numbers<[1], [0], [0], [1], [0, 0, 1, 1], [], []>} : vector<64x32xbf16>, vector<32x128xbf16>, vector<64x128xf32> -> vector<64x128xf32>
    %521 = arith.addf %518, %520 : vector<64x128xf32>
    %c0_144 = arith.constant 0 : index
    %c0_145 = arith.constant 0 : index
    %522 = vector.load %arg10[%c0_144, %c0_145] : memref<1x128xf32, #tpu.memory_space<vmem>>, vector<1x128xf32>
    %523 = vector.broadcast %522 : vector<1x128xf32> to vector<64x128xf32>
    %524 = arith.addf %521, %523 : vector<64x128xf32>
    %c0_146 = arith.constant 0 : index
    %c0_147 = arith.constant 0 : index
    %525 = vector.load %arg15[%c0_146, %c0_147] : memref<64x128xf32, #tpu.memory_space<vmem>>, vector<64x128xf32>
    tpu.vector_store %arg15[%c0_146, %c0_147], %516 {strides = array<i32>} : memref<64x128xf32, #tpu.memory_space<vmem>>, vector<64x128xf32>,
    %c0_148 = arith.constant 0 : index
    %c0_149 = arith.constant 0 : index
    %526 = vector.load %arg16[%c0_148, %c0_149] : memref<64x128xf32, #tpu.memory_space<vmem>>, vector<64x128xf32>
    tpu.vector_store %arg16[%c0_148, %c0_149], %524 {strides = array<i32>} : memref<64x128xf32, #tpu.memory_space<vmem>>, vector<64x128xf32>,
    %c0_150 = arith.constant 0 : index
    %c0_151 = arith.constant 0 : index
    %527 = vector.load %arg11[%c0_150, %c0_151] : memref<64x256xbf16, #tpu.memory_space<vmem>>, vector<64x256xbf16>
    %cst_152 = arith.constant 0.000000e+00 : f32
    %528 = vector.broadcast %cst_152 : f32 to vector<8x32xf32>
    %529 = tpu.concatenate %528, %528 in 1 : vector<8x32xf32>, vector<8x32xf32> -> vector<8x64xf32>
    %530 = arith.truncf %529 : vector<8x64xf32> to vector<8x64xbf16>
    %cst_153 = arith.constant dense<0.000000e+00> : vector<8x256xf32>
    %531 = tpu.matmul %530, %527, %cst_153 {dimension_numbers = #tpu.dot_dimension_numbers<[1], [0], [0], [1], [0, 0, 1, 1], [], []>} : vector<8x64xbf16>, vector<64x256xbf16>, vector<8x256xf32> -> vector<8x256xf32>
    %c0_154 = arith.constant 0 : index
    %c0_155 = arith.constant 0 : index
    %532 = vector.load %arg15[%c0_154, %c0_155] : memref<64x128xf32, #tpu.memory_space<vmem>>, vector<8x128xf32>
    %533 = vector.extract_strided_slice %531 {offsets = [0, 0], sizes = [8, 128], strides = [1, 1]} : vector<8x256xf32> to vector<8x128xf32>
    %534 = arith.addf %532, %533 : vector<8x128xf32>
    %c56_156 = arith.constant 56 : index
    %c0_157 = arith.constant 0 : index
    %535 = vector.load %arg16[%c56_156, %c0_157] : memref<64x128xf32, #tpu.memory_space<vmem>>, vector<8x128xf32>
    %536 = vector.extract_strided_slice %531 {offsets = [0, 128], sizes = [8, 128], strides = [1, 1]} : vector<8x256xf32> to vector<8x128xf32>
    %537 = arith.addf %535, %536 : vector<8x128xf32>
    %538 = vector.extract_strided_slice %534 {offsets = [0, 0], sizes = [8, 32], strides = [1, 1]} : vector<8x128xf32> to vector<8x32xf32>
    %539 = arith.negf %538 : vector<8x32xf32>
    %540 = math.exp %539 : vector<8x32xf32>
    %cst_158 = arith.constant 1.000000e+00 : f32
    %541 = vector.broadcast %cst_158 : f32 to vector<8x32xf32>
    %542 = arith.addf %541, %540 : vector<8x32xf32>
    %543 = arith.divf %541, %542 : vector<8x32xf32>
    %544 = vector.extract_strided_slice %534 {offsets = [0, 32], sizes = [8, 32], strides = [1, 1]} : vector<8x128xf32> to vector<8x32xf32>
    %545 = arith.negf %544 : vector<8x32xf32>
    %546 = math.exp %545 : vector<8x32xf32>
    %cst_159 = arith.constant 1.000000e+00 : f32
    %547 = vector.broadcast %cst_159 : f32 to vector<8x32xf32>
    %548 = arith.addf %547, %546 : vector<8x32xf32>
    %549 = arith.divf %547, %548 : vector<8x32xf32>
    %550 = vector.extract_strided_slice %534 {offsets = [0, 64], sizes = [8, 32], strides = [1, 1]} : vector<8x128xf32> to vector<8x32xf32>
    %551 = math.tanh %550 : vector<8x32xf32>
    %552 = vector.extract_strided_slice %534 {offsets = [0, 96], sizes = [8, 32], strides = [1, 1]} : vector<8x128xf32> to vector<8x32xf32>
    %553 = arith.negf %552 : vector<8x32xf32>
    %554 = math.exp %553 : vector<8x32xf32>
    %cst_160 = arith.constant 1.000000e+00 : f32
    %555 = vector.broadcast %cst_160 : f32 to vector<8x32xf32>
    %556 = arith.addf %555, %554 : vector<8x32xf32>
    %557 = arith.divf %555, %556 : vector<8x32xf32>
    %558 = arith.mulf %549, %528 : vector<8x32xf32>
    %559 = arith.mulf %543, %551 : vector<8x32xf32>
    %560 = arith.addf %558, %559 : vector<8x32xf32>
    %561 = math.tanh %560 : vector<8x32xf32>
    %562 = arith.mulf %557, %561 : vector<8x32xf32>
    %563 = vector.extract_strided_slice %537 {offsets = [0, 0], sizes = [8, 32], strides = [1, 1]} : vector<8x128xf32> to vector<8x32xf32>
    %564 = arith.negf %563 : vector<8x32xf32>
    %565 = math.exp %564 : vector<8x32xf32>
    %cst_161 = arith.constant 1.000000e+00 : f32
    %566 = vector.broadcast %cst_161 : f32 to vector<8x32xf32>
    %567 = arith.addf %566, %565 : vector<8x32xf32>
    %568 = arith.divf %566, %567 : vector<8x32xf32>
    %569 = vector.extract_strided_slice %537 {offsets = [0, 32], sizes = [8, 32], strides = [1, 1]} : vector<8x128xf32> to vector<8x32xf32>
    %570 = arith.negf %569 : vector<8x32xf32>
    %571 = math.exp %570 : vector<8x32xf32>
    %cst_162 = arith.constant 1.000000e+00 : f32
    %572 = vector.broadcast %cst_162 : f32 to vector<8x32xf32>
    %573 = arith.addf %572, %571 : vector<8x32xf32>
    %574 = arith.divf %572, %573 : vector<8x32xf32>
    %575 = vector.extract_strided_slice %537 {offsets = [0, 64], sizes = [8, 32], strides = [1, 1]} : vector<8x128xf32> to vector<8x32xf32>
    %576 = math.tanh %575 : vector<8x32xf32>
    %577 = vector.extract_strided_slice %537 {offsets = [0, 96], sizes = [8, 32], strides = [1, 1]} : vector<8x128xf32> to vector<8x32xf32>
    %578 = arith.negf %577 : vector<8x32xf32>
    %579 = math.exp %578 : vector<8x32xf32>
    %cst_163 = arith.constant 1.000000e+00 : f32
    %580 = vector.broadcast %cst_163 : f32 to vector<8x32xf32>
    %581 = arith.addf %580, %579 : vector<8x32xf32>
    %582 = arith.divf %580, %581 : vector<8x32xf32>
    %583 = arith.mulf %574, %528 : vector<8x32xf32>
    %584 = arith.mulf %568, %576 : vector<8x32xf32>
    %585 = arith.addf %583, %584 : vector<8x32xf32>
    %586 = math.tanh %585 : vector<8x32xf32>
    %587 = arith.mulf %582, %586 : vector<8x32xf32>
    %c0_164 = arith.constant 0 : index
    %c0_165 = arith.constant 0 : index
    %588 = vector.load %arg17[%c0_164, %c0_165] : memref<64x32xf32, #tpu.memory_space<vmem>>, vector<8x32xf32>
    tpu.vector_store %arg17[%c0_164, %c0_165], %562 {strides = array<i32>} : memref<64x32xf32, #tpu.memory_space<vmem>>, vector<8x32xf32>,
    %c56_166 = arith.constant 56 : index
    %c0_167 = arith.constant 0 : index
    %589 = vector.load %arg18[%c56_166, %c0_167] : memref<64x32xf32, #tpu.memory_space<vmem>>, vector<8x32xf32>
    tpu.vector_store %arg18[%c56_166, %c0_167], %587 {strides = array<i32>} : memref<64x32xf32, #tpu.memory_space<vmem>>, vector<8x32xf32>,
    %590 = tpu.concatenate %562, %587 in 1 : vector<8x32xf32>, vector<8x32xf32> -> vector<8x64xf32>
    %591 = arith.truncf %590 : vector<8x64xf32> to vector<8x64xbf16>
    %cst_168 = arith.constant dense<0.000000e+00> : vector<8x256xf32>
    %592 = tpu.matmul %591, %527, %cst_168 {dimension_numbers = #tpu.dot_dimension_numbers<[1], [0], [0], [1], [0, 0, 1, 1], [], []>} : vector<8x64xbf16>, vector<64x256xbf16>, vector<8x256xf32> -> vector<8x256xf32>
    %c8_169 = arith.constant 8 : index
    %c0_170 = arith.constant 0 : index
    %593 = vector.load %arg15[%c8_169, %c0_170] : memref<64x128xf32, #tpu.memory_space<vmem>>, vector<8x128xf32>
    %594 = vector.extract_strided_slice %592 {offsets = [0, 0], sizes = [8, 128], strides = [1, 1]} : vector<8x256xf32> to vector<8x128xf32>
    %595 = arith.addf %593, %594 : vector<8x128xf32>
    %c48_171 = arith.constant 48 : index
    %c0_172 = arith.constant 0 : index
    %596 = vector.load %arg16[%c48_171, %c0_172] : memref<64x128xf32, #tpu.memory_space<vmem>>, vector<8x128xf32>
    %597 = vector.extract_strided_slice %592 {offsets = [0, 128], sizes = [8, 128], strides = [1, 1]} : vector<8x256xf32> to vector<8x128xf32>
    %598 = arith.addf %596, %597 : vector<8x128xf32>
    %599 = vector.extract_strided_slice %595 {offsets = [0, 0], sizes = [8, 32], strides = [1, 1]} : vector<8x128xf32> to vector<8x32xf32>
    %600 = arith.negf %599 : vector<8x32xf32>
    %601 = math.exp %600 : vector<8x32xf32>
    %cst_173 = arith.constant 1.000000e+00 : f32
    %602 = vector.broadcast %cst_173 : f32 to vector<8x32xf32>
    %603 = arith.addf %602, %601 : vector<8x32xf32>
    %604 = arith.divf %602, %603 : vector<8x32xf32>
    %605 = vector.extract_strided_slice %595 {offsets = [0, 32], sizes = [8, 32], strides = [1, 1]} : vector<8x128xf32> to vector<8x32xf32>
    %606 = arith.negf %605 : vector<8x32xf32>
    %607 = math.exp %606 : vector<8x32xf32>
    %cst_174 = arith.constant 1.000000e+00 : f32
    %608 = vector.broadcast %cst_174 : f32 to vector<8x32xf32>
    %609 = arith.addf %608, %607 : vector<8x32xf32>
    %610 = arith.divf %608, %609 : vector<8x32xf32>
    %611 = vector.extract_strided_slice %595 {offsets = [0, 64], sizes = [8, 32], strides = [1, 1]} : vector<8x128xf32> to vector<8x32xf32>
    %612 = math.tanh %611 : vector<8x32xf32>
    %613 = vector.extract_strided_slice %595 {offsets = [0, 96], sizes = [8, 32], strides = [1, 1]} : vector<8x128xf32> to vector<8x32xf32>
    %614 = arith.negf %613 : vector<8x32xf32>
    %615 = math.exp %614 : vector<8x32xf32>
    %cst_175 = arith.constant 1.000000e+00 : f32
    %616 = vector.broadcast %cst_175 : f32 to vector<8x32xf32>
    %617 = arith.addf %616, %615 : vector<8x32xf32>
    %618 = arith.divf %616, %617 : vector<8x32xf32>
    %619 = arith.mulf %610, %560 : vector<8x32xf32>
    %620 = arith.mulf %604, %612 : vector<8x32xf32>
    %621 = arith.addf %619, %620 : vector<8x32xf32>
    %622 = math.tanh %621 : vector<8x32xf32>
    %623 = arith.mulf %618, %622 : vector<8x32xf32>
    %624 = vector.extract_strided_slice %598 {offsets = [0, 0], sizes = [8, 32], strides = [1, 1]} : vector<8x128xf32> to vector<8x32xf32>
    %625 = arith.negf %624 : vector<8x32xf32>
    %626 = math.exp %625 : vector<8x32xf32>
    %cst_176 = arith.constant 1.000000e+00 : f32
    %627 = vector.broadcast %cst_176 : f32 to vector<8x32xf32>
    %628 = arith.addf %627, %626 : vector<8x32xf32>
    %629 = arith.divf %627, %628 : vector<8x32xf32>
    %630 = vector.extract_strided_slice %598 {offsets = [0, 32], sizes = [8, 32], strides = [1, 1]} : vector<8x128xf32> to vector<8x32xf32>
    %631 = arith.negf %630 : vector<8x32xf32>
    %632 = math.exp %631 : vector<8x32xf32>
    %cst_177 = arith.constant 1.000000e+00 : f32
    %633 = vector.broadcast %cst_177 : f32 to vector<8x32xf32>
    %634 = arith.addf %633, %632 : vector<8x32xf32>
    %635 = arith.divf %633, %634 : vector<8x32xf32>
    %636 = vector.extract_strided_slice %598 {offsets = [0, 64], sizes = [8, 32], strides = [1, 1]} : vector<8x128xf32> to vector<8x32xf32>
    %637 = math.tanh %636 : vector<8x32xf32>
    %638 = vector.extract_strided_slice %598 {offsets = [0, 96], sizes = [8, 32], strides = [1, 1]} : vector<8x128xf32> to vector<8x32xf32>
    %639 = arith.negf %638 : vector<8x32xf32>
    %640 = math.exp %639 : vector<8x32xf32>
    %cst_178 = arith.constant 1.000000e+00 : f32
    %641 = vector.broadcast %cst_178 : f32 to vector<8x32xf32>
    %642 = arith.addf %641, %640 : vector<8x32xf32>
    %643 = arith.divf %641, %642 : vector<8x32xf32>
    %644 = arith.mulf %635, %585 : vector<8x32xf32>
    %645 = arith.mulf %629, %637 : vector<8x32xf32>
    %646 = arith.addf %644, %645 : vector<8x32xf32>
    %647 = math.tanh %646 : vector<8x32xf32>
    %648 = arith.mulf %643, %647 : vector<8x32xf32>
    %c8_179 = arith.constant 8 : index
    %c0_180 = arith.constant 0 : index
    %649 = vector.load %arg17[%c8_179, %c0_180] : memref<64x32xf32, #tpu.memory_space<vmem>>, vector<8x32xf32>
    tpu.vector_store %arg17[%c8_179, %c0_180], %623 {strides = array<i32>} : memref<64x32xf32, #tpu.memory_space<vmem>>, vector<8x32xf32>,
    %c48_181 = arith.constant 48 : index
    %c0_182 = arith.constant 0 : index
    %650 = vector.load %arg18[%c48_181, %c0_182] : memref<64x32xf32, #tpu.memory_space<vmem>>, vector<8x32xf32>
    tpu.vector_store %arg18[%c48_181, %c0_182], %648 {strides = array<i32>} : memref<64x32xf32, #tpu.memory_space<vmem>>, vector<8x32xf32>,
    %651 = tpu.concatenate %623, %648 in 1 : vector<8x32xf32>, vector<8x32xf32> -> vector<8x64xf32>
    %652 = arith.truncf %651 : vector<8x64xf32> to vector<8x64xbf16>
    %cst_183 = arith.constant dense<0.000000e+00> : vector<8x256xf32>
    %653 = tpu.matmul %652, %527, %cst_183 {dimension_numbers = #tpu.dot_dimension_numbers<[1], [0], [0], [1], [0, 0, 1, 1], [], []>} : vector<8x64xbf16>, vector<64x256xbf16>, vector<8x256xf32> -> vector<8x256xf32>
    %c16_184 = arith.constant 16 : index
    %c0_185 = arith.constant 0 : index
    %654 = vector.load %arg15[%c16_184, %c0_185] : memref<64x128xf32, #tpu.memory_space<vmem>>, vector<8x128xf32>
    %655 = vector.extract_strided_slice %653 {offsets = [0, 0], sizes = [8, 128], strides = [1, 1]} : vector<8x256xf32> to vector<8x128xf32>
    %656 = arith.addf %654, %655 : vector<8x128xf32>
    %c40_186 = arith.constant 40 : index
    %c0_187 = arith.constant 0 : index
    %657 = vector.load %arg16[%c40_186, %c0_187] : memref<64x128xf32, #tpu.memory_space<vmem>>, vector<8x128xf32>
    %658 = vector.extract_strided_slice %653 {offsets = [0, 128], sizes = [8, 128], strides = [1, 1]} : vector<8x256xf32> to vector<8x128xf32>
    %659 = arith.addf %657, %658 : vector<8x128xf32>
    %660 = vector.extract_strided_slice %656 {offsets = [0, 0], sizes = [8, 32], strides = [1, 1]} : vector<8x128xf32> to vector<8x32xf32>
    %661 = arith.negf %660 : vector<8x32xf32>
    %662 = math.exp %661 : vector<8x32xf32>
    %cst_188 = arith.constant 1.000000e+00 : f32
    %663 = vector.broadcast %cst_188 : f32 to vector<8x32xf32>
    %664 = arith.addf %663, %662 : vector<8x32xf32>
    %665 = arith.divf %663, %664 : vector<8x32xf32>
    %666 = vector.extract_strided_slice %656 {offsets = [0, 32], sizes = [8, 32], strides = [1, 1]} : vector<8x128xf32> to vector<8x32xf32>
    %667 = arith.negf %666 : vector<8x32xf32>
    %668 = math.exp %667 : vector<8x32xf32>
    %cst_189 = arith.constant 1.000000e+00 : f32
    %669 = vector.broadcast %cst_189 : f32 to vector<8x32xf32>
    %670 = arith.addf %669, %668 : vector<8x32xf32>
    %671 = arith.divf %669, %670 : vector<8x32xf32>
    %672 = vector.extract_strided_slice %656 {offsets = [0, 64], sizes = [8, 32], strides = [1, 1]} : vector<8x128xf32> to vector<8x32xf32>
    %673 = math.tanh %672 : vector<8x32xf32>
    %674 = vector.extract_strided_slice %656 {offsets = [0, 96], sizes = [8, 32], strides = [1, 1]} : vector<8x128xf32> to vector<8x32xf32>
    %675 = arith.negf %674 : vector<8x32xf32>
    %676 = math.exp %675 : vector<8x32xf32>
    %cst_190 = arith.constant 1.000000e+00 : f32
    %677 = vector.broadcast %cst_190 : f32 to vector<8x32xf32>
    %678 = arith.addf %677, %676 : vector<8x32xf32>
    %679 = arith.divf %677, %678 : vector<8x32xf32>
    %680 = arith.mulf %671, %621 : vector<8x32xf32>
    %681 = arith.mulf %665, %673 : vector<8x32xf32>
    %682 = arith.addf %680, %681 : vector<8x32xf32>
    %683 = math.tanh %682 : vector<8x32xf32>
    %684 = arith.mulf %679, %683 : vector<8x32xf32>
    %685 = vector.extract_strided_slice %659 {offsets = [0, 0], sizes = [8, 32], strides = [1, 1]} : vector<8x128xf32> to vector<8x32xf32>
    %686 = arith.negf %685 : vector<8x32xf32>
    %687 = math.exp %686 : vector<8x32xf32>
    %cst_191 = arith.constant 1.000000e+00 : f32
    %688 = vector.broadcast %cst_191 : f32 to vector<8x32xf32>
    %689 = arith.addf %688, %687 : vector<8x32xf32>
    %690 = arith.divf %688, %689 : vector<8x32xf32>
    %691 = vector.extract_strided_slice %659 {offsets = [0, 32], sizes = [8, 32], strides = [1, 1]} : vector<8x128xf32> to vector<8x32xf32>
    %692 = arith.negf %691 : vector<8x32xf32>
    %693 = math.exp %692 : vector<8x32xf32>
    %cst_192 = arith.constant 1.000000e+00 : f32
    %694 = vector.broadcast %cst_192 : f32 to vector<8x32xf32>
    %695 = arith.addf %694, %693 : vector<8x32xf32>
    %696 = arith.divf %694, %695 : vector<8x32xf32>
    %697 = vector.extract_strided_slice %659 {offsets = [0, 64], sizes = [8, 32], strides = [1, 1]} : vector<8x128xf32> to vector<8x32xf32>
    %698 = math.tanh %697 : vector<8x32xf32>
    %699 = vector.extract_strided_slice %659 {offsets = [0, 96], sizes = [8, 32], strides = [1, 1]} : vector<8x128xf32> to vector<8x32xf32>
    %700 = arith.negf %699 : vector<8x32xf32>
    %701 = math.exp %700 : vector<8x32xf32>
    %cst_193 = arith.constant 1.000000e+00 : f32
    %702 = vector.broadcast %cst_193 : f32 to vector<8x32xf32>
    %703 = arith.addf %702, %701 : vector<8x32xf32>
    %704 = arith.divf %702, %703 : vector<8x32xf32>
    %705 = arith.mulf %696, %646 : vector<8x32xf32>
    %706 = arith.mulf %690, %698 : vector<8x32xf32>
    %707 = arith.addf %705, %706 : vector<8x32xf32>
    %708 = math.tanh %707 : vector<8x32xf32>
    %709 = arith.mulf %704, %708 : vector<8x32xf32>
    %c16_194 = arith.constant 16 : index
    %c0_195 = arith.constant 0 : index
    %710 = vector.load %arg17[%c16_194, %c0_195] : memref<64x32xf32, #tpu.memory_space<vmem>>, vector<8x32xf32>
    tpu.vector_store %arg17[%c16_194, %c0_195], %684 {strides = array<i32>} : memref<64x32xf32, #tpu.memory_space<vmem>>, vector<8x32xf32>,
    %c40_196 = arith.constant 40 : index
    %c0_197 = arith.constant 0 : index
    %711 = vector.load %arg18[%c40_196, %c0_197] : memref<64x32xf32, #tpu.memory_space<vmem>>, vector<8x32xf32>
    tpu.vector_store %arg18[%c40_196, %c0_197], %709 {strides = array<i32>} : memref<64x32xf32, #tpu.memory_space<vmem>>, vector<8x32xf32>,
    %712 = tpu.concatenate %684, %709 in 1 : vector<8x32xf32>, vector<8x32xf32> -> vector<8x64xf32>
    %713 = arith.truncf %712 : vector<8x64xf32> to vector<8x64xbf16>
    %cst_198 = arith.constant dense<0.000000e+00> : vector<8x256xf32>
    %714 = tpu.matmul %713, %527, %cst_198 {dimension_numbers = #tpu.dot_dimension_numbers<[1], [0], [0], [1], [0, 0, 1, 1], [], []>} : vector<8x64xbf16>, vector<64x256xbf16>, vector<8x256xf32> -> vector<8x256xf32>
    %c24_199 = arith.constant 24 : index
    %c0_200 = arith.constant 0 : index
    %715 = vector.load %arg15[%c24_199, %c0_200] : memref<64x128xf32, #tpu.memory_space<vmem>>, vector<8x128xf32>
    %716 = vector.extract_strided_slice %714 {offsets = [0, 0], sizes = [8, 128], strides = [1, 1]} : vector<8x256xf32> to vector<8x128xf32>
    %717 = arith.addf %715, %716 : vector<8x128xf32>
    %c32_201 = arith.constant 32 : index
    %c0_202 = arith.constant 0 : index
    %718 = vector.load %arg16[%c32_201, %c0_202] : memref<64x128xf32, #tpu.memory_space<vmem>>, vector<8x128xf32>
    %719 = vector.extract_strided_slice %714 {offsets = [0, 128], sizes = [8, 128], strides = [1, 1]} : vector<8x256xf32> to vector<8x128xf32>
    %720 = arith.addf %718, %719 : vector<8x128xf32>
    %721 = vector.extract_strided_slice %717 {offsets = [0, 0], sizes = [8, 32], strides = [1, 1]} : vector<8x128xf32> to vector<8x32xf32>
    %722 = arith.negf %721 : vector<8x32xf32>
    %723 = math.exp %722 : vector<8x32xf32>
    %cst_203 = arith.constant 1.000000e+00 : f32
    %724 = vector.broadcast %cst_203 : f32 to vector<8x32xf32>
    %725 = arith.addf %724, %723 : vector<8x32xf32>
    %726 = arith.divf %724, %725 : vector<8x32xf32>
    %727 = vector.extract_strided_slice %717 {offsets = [0, 32], sizes = [8, 32], strides = [1, 1]} : vector<8x128xf32> to vector<8x32xf32>
    %728 = arith.negf %727 : vector<8x32xf32>
    %729 = math.exp %728 : vector<8x32xf32>
    %cst_204 = arith.constant 1.000000e+00 : f32
    %730 = vector.broadcast %cst_204 : f32 to vector<8x32xf32>
    %731 = arith.addf %730, %729 : vector<8x32xf32>
    %732 = arith.divf %730, %731 : vector<8x32xf32>
    %733 = vector.extract_strided_slice %717 {offsets = [0, 64], sizes = [8, 32], strides = [1, 1]} : vector<8x128xf32> to vector<8x32xf32>
    %734 = math.tanh %733 : vector<8x32xf32>
    %735 = vector.extract_strided_slice %717 {offsets = [0, 96], sizes = [8, 32], strides = [1, 1]} : vector<8x128xf32> to vector<8x32xf32>
    %736 = arith.negf %735 : vector<8x32xf32>
    %737 = math.exp %736 : vector<8x32xf32>
    %cst_205 = arith.constant 1.000000e+00 : f32
    %738 = vector.broadcast %cst_205 : f32 to vector<8x32xf32>
    %739 = arith.addf %738, %737 : vector<8x32xf32>
    %740 = arith.divf %738, %739 : vector<8x32xf32>
    %741 = arith.mulf %732, %682 : vector<8x32xf32>
    %742 = arith.mulf %726, %734 : vector<8x32xf32>
    %743 = arith.addf %741, %742 : vector<8x32xf32>
    %744 = math.tanh %743 : vector<8x32xf32>
    %745 = arith.mulf %740, %744 : vector<8x32xf32>
    %746 = vector.extract_strided_slice %720 {offsets = [0, 0], sizes = [8, 32], strides = [1, 1]} : vector<8x128xf32> to vector<8x32xf32>
    %747 = arith.negf %746 : vector<8x32xf32>
    %748 = math.exp %747 : vector<8x32xf32>
    %cst_206 = arith.constant 1.000000e+00 : f32
    %749 = vector.broadcast %cst_206 : f32 to vector<8x32xf32>
    %750 = arith.addf %749, %748 : vector<8x32xf32>
    %751 = arith.divf %749, %750 : vector<8x32xf32>
    %752 = vector.extract_strided_slice %720 {offsets = [0, 32], sizes = [8, 32], strides = [1, 1]} : vector<8x128xf32> to vector<8x32xf32>
    %753 = arith.negf %752 : vector<8x32xf32>
    %754 = math.exp %753 : vector<8x32xf32>
    %cst_207 = arith.constant 1.000000e+00 : f32
    %755 = vector.broadcast %cst_207 : f32 to vector<8x32xf32>
    %756 = arith.addf %755, %754 : vector<8x32xf32>
    %757 = arith.divf %755, %756 : vector<8x32xf32>
    %758 = vector.extract_strided_slice %720 {offsets = [0, 64], sizes = [8, 32], strides = [1, 1]} : vector<8x128xf32> to vector<8x32xf32>
    %759 = math.tanh %758 : vector<8x32xf32>
    %760 = vector.extract_strided_slice %720 {offsets = [0, 96], sizes = [8, 32], strides = [1, 1]} : vector<8x128xf32> to vector<8x32xf32>
    %761 = arith.negf %760 : vector<8x32xf32>
    %762 = math.exp %761 : vector<8x32xf32>
    %cst_208 = arith.constant 1.000000e+00 : f32
    %763 = vector.broadcast %cst_208 : f32 to vector<8x32xf32>
    %764 = arith.addf %763, %762 : vector<8x32xf32>
    %765 = arith.divf %763, %764 : vector<8x32xf32>
    %766 = arith.mulf %757, %707 : vector<8x32xf32>
    %767 = arith.mulf %751, %759 : vector<8x32xf32>
    %768 = arith.addf %766, %767 : vector<8x32xf32>
    %769 = math.tanh %768 : vector<8x32xf32>
    %770 = arith.mulf %765, %769 : vector<8x32xf32>
    %c24_209 = arith.constant 24 : index
    %c0_210 = arith.constant 0 : index
    %771 = vector.load %arg17[%c24_209, %c0_210] : memref<64x32xf32, #tpu.memory_space<vmem>>, vector<8x32xf32>
    tpu.vector_store %arg17[%c24_209, %c0_210], %745 {strides = array<i32>} : memref<64x32xf32, #tpu.memory_space<vmem>>, vector<8x32xf32>,
    %c32_211 = arith.constant 32 : index
    %c0_212 = arith.constant 0 : index
    %772 = vector.load %arg18[%c32_211, %c0_212] : memref<64x32xf32, #tpu.memory_space<vmem>>, vector<8x32xf32>
    tpu.vector_store %arg18[%c32_211, %c0_212], %770 {strides = array<i32>} : memref<64x32xf32, #tpu.memory_space<vmem>>, vector<8x32xf32>,
    %773 = tpu.concatenate %745, %770 in 1 : vector<8x32xf32>, vector<8x32xf32> -> vector<8x64xf32>
    %774 = arith.truncf %773 : vector<8x64xf32> to vector<8x64xbf16>
    %cst_213 = arith.constant dense<0.000000e+00> : vector<8x256xf32>
    %775 = tpu.matmul %774, %527, %cst_213 {dimension_numbers = #tpu.dot_dimension_numbers<[1], [0], [0], [1], [0, 0, 1, 1], [], []>} : vector<8x64xbf16>, vector<64x256xbf16>, vector<8x256xf32> -> vector<8x256xf32>
    %c32_214 = arith.constant 32 : index
    %c0_215 = arith.constant 0 : index
    %776 = vector.load %arg15[%c32_214, %c0_215] : memref<64x128xf32, #tpu.memory_space<vmem>>, vector<8x128xf32>
    %777 = vector.extract_strided_slice %775 {offsets = [0, 0], sizes = [8, 128], strides = [1, 1]} : vector<8x256xf32> to vector<8x128xf32>
    %778 = arith.addf %776, %777 : vector<8x128xf32>
    %c24_216 = arith.constant 24 : index
    %c0_217 = arith.constant 0 : index
    %779 = vector.load %arg16[%c24_216, %c0_217] : memref<64x128xf32, #tpu.memory_space<vmem>>, vector<8x128xf32>
    %780 = vector.extract_strided_slice %775 {offsets = [0, 128], sizes = [8, 128], strides = [1, 1]} : vector<8x256xf32> to vector<8x128xf32>
    %781 = arith.addf %779, %780 : vector<8x128xf32>
    %782 = vector.extract_strided_slice %778 {offsets = [0, 0], sizes = [8, 32], strides = [1, 1]} : vector<8x128xf32> to vector<8x32xf32>
    %783 = arith.negf %782 : vector<8x32xf32>
    %784 = math.exp %783 : vector<8x32xf32>
    %cst_218 = arith.constant 1.000000e+00 : f32
    %785 = vector.broadcast %cst_218 : f32 to vector<8x32xf32>
    %786 = arith.addf %785, %784 : vector<8x32xf32>
    %787 = arith.divf %785, %786 : vector<8x32xf32>
    %788 = vector.extract_strided_slice %778 {offsets = [0, 32], sizes = [8, 32], strides = [1, 1]} : vector<8x128xf32> to vector<8x32xf32>
    %789 = arith.negf %788 : vector<8x32xf32>
    %790 = math.exp %789 : vector<8x32xf32>
    %cst_219 = arith.constant 1.000000e+00 : f32
    %791 = vector.broadcast %cst_219 : f32 to vector<8x32xf32>
    %792 = arith.addf %791, %790 : vector<8x32xf32>
    %793 = arith.divf %791, %792 : vector<8x32xf32>
    %794 = vector.extract_strided_slice %778 {offsets = [0, 64], sizes = [8, 32], strides = [1, 1]} : vector<8x128xf32> to vector<8x32xf32>
    %795 = math.tanh %794 : vector<8x32xf32>
    %796 = vector.extract_strided_slice %778 {offsets = [0, 96], sizes = [8, 32], strides = [1, 1]} : vector<8x128xf32> to vector<8x32xf32>
    %797 = arith.negf %796 : vector<8x32xf32>
    %798 = math.exp %797 : vector<8x32xf32>
    %cst_220 = arith.constant 1.000000e+00 : f32
    %799 = vector.broadcast %cst_220 : f32 to vector<8x32xf32>
    %800 = arith.addf %799, %798 : vector<8x32xf32>
    %801 = arith.divf %799, %800 : vector<8x32xf32>
    %802 = arith.mulf %793, %743 : vector<8x32xf32>
    %803 = arith.mulf %787, %795 : vector<8x32xf32>
    %804 = arith.addf %802, %803 : vector<8x32xf32>
    %805 = math.tanh %804 : vector<8x32xf32>
    %806 = arith.mulf %801, %805 : vector<8x32xf32>
    %807 = vector.extract_strided_slice %781 {offsets = [0, 0], sizes = [8, 32], strides = [1, 1]} : vector<8x128xf32> to vector<8x32xf32>
    %808 = arith.negf %807 : vector<8x32xf32>
    %809 = math.exp %808 : vector<8x32xf32>
    %cst_221 = arith.constant 1.000000e+00 : f32
    %810 = vector.broadcast %cst_221 : f32 to vector<8x32xf32>
    %811 = arith.addf %810, %809 : vector<8x32xf32>
    %812 = arith.divf %810, %811 : vector<8x32xf32>
    %813 = vector.extract_strided_slice %781 {offsets = [0, 32], sizes = [8, 32], strides = [1, 1]} : vector<8x128xf32> to vector<8x32xf32>
    %814 = arith.negf %813 : vector<8x32xf32>
    %815 = math.exp %814 : vector<8x32xf32>
    %cst_222 = arith.constant 1.000000e+00 : f32
    %816 = vector.broadcast %cst_222 : f32 to vector<8x32xf32>
    %817 = arith.addf %816, %815 : vector<8x32xf32>
    %818 = arith.divf %816, %817 : vector<8x32xf32>
    %819 = vector.extract_strided_slice %781 {offsets = [0, 64], sizes = [8, 32], strides = [1, 1]} : vector<8x128xf32> to vector<8x32xf32>
    %820 = math.tanh %819 : vector<8x32xf32>
    %821 = vector.extract_strided_slice %781 {offsets = [0, 96], sizes = [8, 32], strides = [1, 1]} : vector<8x128xf32> to vector<8x32xf32>
    %822 = arith.negf %821 : vector<8x32xf32>
    %823 = math.exp %822 : vector<8x32xf32>
    %cst_223 = arith.constant 1.000000e+00 : f32
    %824 = vector.broadcast %cst_223 : f32 to vector<8x32xf32>
    %825 = arith.addf %824, %823 : vector<8x32xf32>
    %826 = arith.divf %824, %825 : vector<8x32xf32>
    %827 = arith.mulf %818, %768 : vector<8x32xf32>
    %828 = arith.mulf %812, %820 : vector<8x32xf32>
    %829 = arith.addf %827, %828 : vector<8x32xf32>
    %830 = math.tanh %829 : vector<8x32xf32>
    %831 = arith.mulf %826, %830 : vector<8x32xf32>
    %c32_224 = arith.constant 32 : index
    %c0_225 = arith.constant 0 : index
    %832 = vector.load %arg17[%c32_224, %c0_225] : memref<64x32xf32, #tpu.memory_space<vmem>>, vector<8x32xf32>
    tpu.vector_store %arg17[%c32_224, %c0_225], %806 {strides = array<i32>} : memref<64x32xf32, #tpu.memory_space<vmem>>, vector<8x32xf32>,
    %c24_226 = arith.constant 24 : index
    %c0_227 = arith.constant 0 : index
    %833 = vector.load %arg18[%c24_226, %c0_227] : memref<64x32xf32, #tpu.memory_space<vmem>>, vector<8x32xf32>
    tpu.vector_store %arg18[%c24_226, %c0_227], %831 {strides = array<i32>} : memref<64x32xf32, #tpu.memory_space<vmem>>, vector<8x32xf32>,
    %834 = tpu.concatenate %806, %831 in 1 : vector<8x32xf32>, vector<8x32xf32> -> vector<8x64xf32>
    %835 = arith.truncf %834 : vector<8x64xf32> to vector<8x64xbf16>
    %cst_228 = arith.constant dense<0.000000e+00> : vector<8x256xf32>
    %836 = tpu.matmul %835, %527, %cst_228 {dimension_numbers = #tpu.dot_dimension_numbers<[1], [0], [0], [1], [0, 0, 1, 1], [], []>} : vector<8x64xbf16>, vector<64x256xbf16>, vector<8x256xf32> -> vector<8x256xf32>
    %c40_229 = arith.constant 40 : index
    %c0_230 = arith.constant 0 : index
    %837 = vector.load %arg15[%c40_229, %c0_230] : memref<64x128xf32, #tpu.memory_space<vmem>>, vector<8x128xf32>
    %838 = vector.extract_strided_slice %836 {offsets = [0, 0], sizes = [8, 128], strides = [1, 1]} : vector<8x256xf32> to vector<8x128xf32>
    %839 = arith.addf %837, %838 : vector<8x128xf32>
    %c16_231 = arith.constant 16 : index
    %c0_232 = arith.constant 0 : index
    %840 = vector.load %arg16[%c16_231, %c0_232] : memref<64x128xf32, #tpu.memory_space<vmem>>, vector<8x128xf32>
    %841 = vector.extract_strided_slice %836 {offsets = [0, 128], sizes = [8, 128], strides = [1, 1]} : vector<8x256xf32> to vector<8x128xf32>
    %842 = arith.addf %840, %841 : vector<8x128xf32>
    %843 = vector.extract_strided_slice %839 {offsets = [0, 0], sizes = [8, 32], strides = [1, 1]} : vector<8x128xf32> to vector<8x32xf32>
    %844 = arith.negf %843 : vector<8x32xf32>
    %845 = math.exp %844 : vector<8x32xf32>
    %cst_233 = arith.constant 1.000000e+00 : f32
    %846 = vector.broadcast %cst_233 : f32 to vector<8x32xf32>
    %847 = arith.addf %846, %845 : vector<8x32xf32>
    %848 = arith.divf %846, %847 : vector<8x32xf32>
    %849 = vector.extract_strided_slice %839 {offsets = [0, 32], sizes = [8, 32], strides = [1, 1]} : vector<8x128xf32> to vector<8x32xf32>
    %850 = arith.negf %849 : vector<8x32xf32>
    %851 = math.exp %850 : vector<8x32xf32>
    %cst_234 = arith.constant 1.000000e+00 : f32
    %852 = vector.broadcast %cst_234 : f32 to vector<8x32xf32>
    %853 = arith.addf %852, %851 : vector<8x32xf32>
    %854 = arith.divf %852, %853 : vector<8x32xf32>
    %855 = vector.extract_strided_slice %839 {offsets = [0, 64], sizes = [8, 32], strides = [1, 1]} : vector<8x128xf32> to vector<8x32xf32>
    %856 = math.tanh %855 : vector<8x32xf32>
    %857 = vector.extract_strided_slice %839 {offsets = [0, 96], sizes = [8, 32], strides = [1, 1]} : vector<8x128xf32> to vector<8x32xf32>
    %858 = arith.negf %857 : vector<8x32xf32>
    %859 = math.exp %858 : vector<8x32xf32>
    %cst_235 = arith.constant 1.000000e+00 : f32
    %860 = vector.broadcast %cst_235 : f32 to vector<8x32xf32>
    %861 = arith.addf %860, %859 : vector<8x32xf32>
    %862 = arith.divf %860, %861 : vector<8x32xf32>
    %863 = arith.mulf %854, %804 : vector<8x32xf32>
    %864 = arith.mulf %848, %856 : vector<8x32xf32>
    %865 = arith.addf %863, %864 : vector<8x32xf32>
    %866 = math.tanh %865 : vector<8x32xf32>
    %867 = arith.mulf %862, %866 : vector<8x32xf32>
    %868 = vector.extract_strided_slice %842 {offsets = [0, 0], sizes = [8, 32], strides = [1, 1]} : vector<8x128xf32> to vector<8x32xf32>
    %869 = arith.negf %868 : vector<8x32xf32>
    %870 = math.exp %869 : vector<8x32xf32>
    %cst_236 = arith.constant 1.000000e+00 : f32
    %871 = vector.broadcast %cst_236 : f32 to vector<8x32xf32>
    %872 = arith.addf %871, %870 : vector<8x32xf32>
    %873 = arith.divf %871, %872 : vector<8x32xf32>
    %874 = vector.extract_strided_slice %842 {offsets = [0, 32], sizes = [8, 32], strides = [1, 1]} : vector<8x128xf32> to vector<8x32xf32>
    %875 = arith.negf %874 : vector<8x32xf32>
    %876 = math.exp %875 : vector<8x32xf32>
    %cst_237 = arith.constant 1.000000e+00 : f32
    %877 = vector.broadcast %cst_237 : f32 to vector<8x32xf32>
    %878 = arith.addf %877, %876 : vector<8x32xf32>
    %879 = arith.divf %877, %878 : vector<8x32xf32>
    %880 = vector.extract_strided_slice %842 {offsets = [0, 64], sizes = [8, 32], strides = [1, 1]} : vector<8x128xf32> to vector<8x32xf32>
    %881 = math.tanh %880 : vector<8x32xf32>
    %882 = vector.extract_strided_slice %842 {offsets = [0, 96], sizes = [8, 32], strides = [1, 1]} : vector<8x128xf32> to vector<8x32xf32>
    %883 = arith.negf %882 : vector<8x32xf32>
    %884 = math.exp %883 : vector<8x32xf32>
    %cst_238 = arith.constant 1.000000e+00 : f32
    %885 = vector.broadcast %cst_238 : f32 to vector<8x32xf32>
    %886 = arith.addf %885, %884 : vector<8x32xf32>
    %887 = arith.divf %885, %886 : vector<8x32xf32>
    %888 = arith.mulf %879, %829 : vector<8x32xf32>
    %889 = arith.mulf %873, %881 : vector<8x32xf32>
    %890 = arith.addf %888, %889 : vector<8x32xf32>
    %891 = math.tanh %890 : vector<8x32xf32>
    %892 = arith.mulf %887, %891 : vector<8x32xf32>
    %c40_239 = arith.constant 40 : index
    %c0_240 = arith.constant 0 : index
    %893 = vector.load %arg17[%c40_239, %c0_240] : memref<64x32xf32, #tpu.memory_space<vmem>>, vector<8x32xf32>
    tpu.vector_store %arg17[%c40_239, %c0_240], %867 {strides = array<i32>} : memref<64x32xf32, #tpu.memory_space<vmem>>, vector<8x32xf32>,
    %c16_241 = arith.constant 16 : index
    %c0_242 = arith.constant 0 : index
    %894 = vector.load %arg18[%c16_241, %c0_242] : memref<64x32xf32, #tpu.memory_space<vmem>>, vector<8x32xf32>
    tpu.vector_store %arg18[%c16_241, %c0_242], %892 {strides = array<i32>} : memref<64x32xf32, #tpu.memory_space<vmem>>, vector<8x32xf32>,
    %895 = tpu.concatenate %867, %892 in 1 : vector<8x32xf32>, vector<8x32xf32> -> vector<8x64xf32>
    %896 = arith.truncf %895 : vector<8x64xf32> to vector<8x64xbf16>
    %cst_243 = arith.constant dense<0.000000e+00> : vector<8x256xf32>
    %897 = tpu.matmul %896, %527, %cst_243 {dimension_numbers = #tpu.dot_dimension_numbers<[1], [0], [0], [1], [0, 0, 1, 1], [], []>} : vector<8x64xbf16>, vector<64x256xbf16>, vector<8x256xf32> -> vector<8x256xf32>
    %c48_244 = arith.constant 48 : index
    %c0_245 = arith.constant 0 : index
    %898 = vector.load %arg15[%c48_244, %c0_245] : memref<64x128xf32, #tpu.memory_space<vmem>>, vector<8x128xf32>
    %899 = vector.extract_strided_slice %897 {offsets = [0, 0], sizes = [8, 128], strides = [1, 1]} : vector<8x256xf32> to vector<8x128xf32>
    %900 = arith.addf %898, %899 : vector<8x128xf32>
    %c8_246 = arith.constant 8 : index
    %c0_247 = arith.constant 0 : index
    %901 = vector.load %arg16[%c8_246, %c0_247] : memref<64x128xf32, #tpu.memory_space<vmem>>, vector<8x128xf32>
    %902 = vector.extract_strided_slice %897 {offsets = [0, 128], sizes = [8, 128], strides = [1, 1]} : vector<8x256xf32> to vector<8x128xf32>
    %903 = arith.addf %901, %902 : vector<8x128xf32>
    %904 = vector.extract_strided_slice %900 {offsets = [0, 0], sizes = [8, 32], strides = [1, 1]} : vector<8x128xf32> to vector<8x32xf32>
    %905 = arith.negf %904 : vector<8x32xf32>
    %906 = math.exp %905 : vector<8x32xf32>
    %cst_248 = arith.constant 1.000000e+00 : f32
    %907 = vector.broadcast %cst_248 : f32 to vector<8x32xf32>
    %908 = arith.addf %907, %906 : vector<8x32xf32>
    %909 = arith.divf %907, %908 : vector<8x32xf32>
    %910 = vector.extract_strided_slice %900 {offsets = [0, 32], sizes = [8, 32], strides = [1, 1]} : vector<8x128xf32> to vector<8x32xf32>
    %911 = arith.negf %910 : vector<8x32xf32>
    %912 = math.exp %911 : vector<8x32xf32>
    %cst_249 = arith.constant 1.000000e+00 : f32
    %913 = vector.broadcast %cst_249 : f32 to vector<8x32xf32>
    %914 = arith.addf %913, %912 : vector<8x32xf32>
    %915 = arith.divf %913, %914 : vector<8x32xf32>
    %916 = vector.extract_strided_slice %900 {offsets = [0, 64], sizes = [8, 32], strides = [1, 1]} : vector<8x128xf32> to vector<8x32xf32>
    %917 = math.tanh %916 : vector<8x32xf32>
    %918 = vector.extract_strided_slice %900 {offsets = [0, 96], sizes = [8, 32], strides = [1, 1]} : vector<8x128xf32> to vector<8x32xf32>
    %919 = arith.negf %918 : vector<8x32xf32>
    %920 = math.exp %919 : vector<8x32xf32>
    %cst_250 = arith.constant 1.000000e+00 : f32
    %921 = vector.broadcast %cst_250 : f32 to vector<8x32xf32>
    %922 = arith.addf %921, %920 : vector<8x32xf32>
    %923 = arith.divf %921, %922 : vector<8x32xf32>
    %924 = arith.mulf %915, %865 : vector<8x32xf32>
    %925 = arith.mulf %909, %917 : vector<8x32xf32>
    %926 = arith.addf %924, %925 : vector<8x32xf32>
    %927 = math.tanh %926 : vector<8x32xf32>
    %928 = arith.mulf %923, %927 : vector<8x32xf32>
    %929 = vector.extract_strided_slice %903 {offsets = [0, 0], sizes = [8, 32], strides = [1, 1]} : vector<8x128xf32> to vector<8x32xf32>
    %930 = arith.negf %929 : vector<8x32xf32>
    %931 = math.exp %930 : vector<8x32xf32>
    %cst_251 = arith.constant 1.000000e+00 : f32
    %932 = vector.broadcast %cst_251 : f32 to vector<8x32xf32>
    %933 = arith.addf %932, %931 : vector<8x32xf32>
    %934 = arith.divf %932, %933 : vector<8x32xf32>
    %935 = vector.extract_strided_slice %903 {offsets = [0, 32], sizes = [8, 32], strides = [1, 1]} : vector<8x128xf32> to vector<8x32xf32>
    %936 = arith.negf %935 : vector<8x32xf32>
    %937 = math.exp %936 : vector<8x32xf32>
    %cst_252 = arith.constant 1.000000e+00 : f32
    %938 = vector.broadcast %cst_252 : f32 to vector<8x32xf32>
    %939 = arith.addf %938, %937 : vector<8x32xf32>
    %940 = arith.divf %938, %939 : vector<8x32xf32>
    %941 = vector.extract_strided_slice %903 {offsets = [0, 64], sizes = [8, 32], strides = [1, 1]} : vector<8x128xf32> to vector<8x32xf32>
    %942 = math.tanh %941 : vector<8x32xf32>
    %943 = vector.extract_strided_slice %903 {offsets = [0, 96], sizes = [8, 32], strides = [1, 1]} : vector<8x128xf32> to vector<8x32xf32>
    %944 = arith.negf %943 : vector<8x32xf32>
    %945 = math.exp %944 : vector<8x32xf32>
    %cst_253 = arith.constant 1.000000e+00 : f32
    %946 = vector.broadcast %cst_253 : f32 to vector<8x32xf32>
    %947 = arith.addf %946, %945 : vector<8x32xf32>
    %948 = arith.divf %946, %947 : vector<8x32xf32>
    %949 = arith.mulf %940, %890 : vector<8x32xf32>
    %950 = arith.mulf %934, %942 : vector<8x32xf32>
    %951 = arith.addf %949, %950 : vector<8x32xf32>
    %952 = math.tanh %951 : vector<8x32xf32>
    %953 = arith.mulf %948, %952 : vector<8x32xf32>
    %c48_254 = arith.constant 48 : index
    %c0_255 = arith.constant 0 : index
    %954 = vector.load %arg17[%c48_254, %c0_255] : memref<64x32xf32, #tpu.memory_space<vmem>>, vector<8x32xf32>
    tpu.vector_store %arg17[%c48_254, %c0_255], %928 {strides = array<i32>} : memref<64x32xf32, #tpu.memory_space<vmem>>, vector<8x32xf32>,
    %c8_256 = arith.constant 8 : index
    %c0_257 = arith.constant 0 : index
    %955 = vector.load %arg18[%c8_256, %c0_257] : memref<64x32xf32, #tpu.memory_space<vmem>>, vector<8x32xf32>
    tpu.vector_store %arg18[%c8_256, %c0_257], %953 {strides = array<i32>} : memref<64x32xf32, #tpu.memory_space<vmem>>, vector<8x32xf32>,
    %956 = tpu.concatenate %928, %953 in 1 : vector<8x32xf32>, vector<8x32xf32> -> vector<8x64xf32>
    %957 = arith.truncf %956 : vector<8x64xf32> to vector<8x64xbf16>
    %cst_258 = arith.constant dense<0.000000e+00> : vector<8x256xf32>
    %958 = tpu.matmul %957, %527, %cst_258 {dimension_numbers = #tpu.dot_dimension_numbers<[1], [0], [0], [1], [0, 0, 1, 1], [], []>} : vector<8x64xbf16>, vector<64x256xbf16>, vector<8x256xf32> -> vector<8x256xf32>
    %c56_259 = arith.constant 56 : index
    %c0_260 = arith.constant 0 : index
    %959 = vector.load %arg15[%c56_259, %c0_260] : memref<64x128xf32, #tpu.memory_space<vmem>>, vector<8x128xf32>
    %960 = vector.extract_strided_slice %958 {offsets = [0, 0], sizes = [8, 128], strides = [1, 1]} : vector<8x256xf32> to vector<8x128xf32>
    %961 = arith.addf %959, %960 : vector<8x128xf32>
    %c0_261 = arith.constant 0 : index
    %c0_262 = arith.constant 0 : index
    %962 = vector.load %arg16[%c0_261, %c0_262] : memref<64x128xf32, #tpu.memory_space<vmem>>, vector<8x128xf32>
    %963 = vector.extract_strided_slice %958 {offsets = [0, 128], sizes = [8, 128], strides = [1, 1]} : vector<8x256xf32> to vector<8x128xf32>
    %964 = arith.addf %962, %963 : vector<8x128xf32>
    %965 = vector.extract_strided_slice %961 {offsets = [0, 0], sizes = [8, 32], strides = [1, 1]} : vector<8x128xf32> to vector<8x32xf32>
    %966 = arith.negf %965 : vector<8x32xf32>
    %967 = math.exp %966 : vector<8x32xf32>
    %cst_263 = arith.constant 1.000000e+00 : f32
    %968 = vector.broadcast %cst_263 : f32 to vector<8x32xf32>
    %969 = arith.addf %968, %967 : vector<8x32xf32>
    %970 = arith.divf %968, %969 : vector<8x32xf32>
    %971 = vector.extract_strided_slice %961 {offsets = [0, 32], sizes = [8, 32], strides = [1, 1]} : vector<8x128xf32> to vector<8x32xf32>
    %972 = arith.negf %971 : vector<8x32xf32>
    %973 = math.exp %972 : vector<8x32xf32>
    %cst_264 = arith.constant 1.000000e+00 : f32
    %974 = vector.broadcast %cst_264 : f32 to vector<8x32xf32>
    %975 = arith.addf %974, %973 : vector<8x32xf32>
    %976 = arith.divf %974, %975 : vector<8x32xf32>
    %977 = vector.extract_strided_slice %961 {offsets = [0, 64], sizes = [8, 32], strides = [1, 1]} : vector<8x128xf32> to vector<8x32xf32>
    %978 = math.tanh %977 : vector<8x32xf32>
    %979 = vector.extract_strided_slice %961 {offsets = [0, 96], sizes = [8, 32], strides = [1, 1]} : vector<8x128xf32> to vector<8x32xf32>
    %980 = arith.negf %979 : vector<8x32xf32>
    %981 = math.exp %980 : vector<8x32xf32>
    %cst_265 = arith.constant 1.000000e+00 : f32
    %982 = vector.broadcast %cst_265 : f32 to vector<8x32xf32>
    %983 = arith.addf %982, %981 : vector<8x32xf32>
    %984 = arith.divf %982, %983 : vector<8x32xf32>
    %985 = arith.mulf %976, %926 : vector<8x32xf32>
    %986 = arith.mulf %970, %978 : vector<8x32xf32>
    %987 = arith.addf %985, %986 : vector<8x32xf32>
    %988 = math.tanh %987 : vector<8x32xf32>
    %989 = arith.mulf %984, %988 : vector<8x32xf32>
    %990 = vector.extract_strided_slice %964 {offsets = [0, 0], sizes = [8, 32], strides = [1, 1]} : vector<8x128xf32> to vector<8x32xf32>
    %991 = arith.negf %990 : vector<8x32xf32>
    %992 = math.exp %991 : vector<8x32xf32>
    %cst_266 = arith.constant 1.000000e+00 : f32
    %993 = vector.broadcast %cst_266 : f32 to vector<8x32xf32>
    %994 = arith.addf %993, %992 : vector<8x32xf32>
    %995 = arith.divf %993, %994 : vector<8x32xf32>
    %996 = vector.extract_strided_slice %964 {offsets = [0, 32], sizes = [8, 32], strides = [1, 1]} : vector<8x128xf32> to vector<8x32xf32>
    %997 = arith.negf %996 : vector<8x32xf32>
    %998 = math.exp %997 : vector<8x32xf32>
    %cst_267 = arith.constant 1.000000e+00 : f32
    %999 = vector.broadcast %cst_267 : f32 to vector<8x32xf32>
    %1000 = arith.addf %999, %998 : vector<8x32xf32>
    %1001 = arith.divf %999, %1000 : vector<8x32xf32>
    %1002 = vector.extract_strided_slice %964 {offsets = [0, 64], sizes = [8, 32], strides = [1, 1]} : vector<8x128xf32> to vector<8x32xf32>
    %1003 = math.tanh %1002 : vector<8x32xf32>
    %1004 = vector.extract_strided_slice %964 {offsets = [0, 96], sizes = [8, 32], strides = [1, 1]} : vector<8x128xf32> to vector<8x32xf32>
    %1005 = arith.negf %1004 : vector<8x32xf32>
    %1006 = math.exp %1005 : vector<8x32xf32>
    %cst_268 = arith.constant 1.000000e+00 : f32
    %1007 = vector.broadcast %cst_268 : f32 to vector<8x32xf32>
    %1008 = arith.addf %1007, %1006 : vector<8x32xf32>
    %1009 = arith.divf %1007, %1008 : vector<8x32xf32>
    %1010 = arith.mulf %1001, %951 : vector<8x32xf32>
    %1011 = arith.mulf %995, %1003 : vector<8x32xf32>
    %1012 = arith.addf %1010, %1011 : vector<8x32xf32>
    %1013 = math.tanh %1012 : vector<8x32xf32>
    %1014 = arith.mulf %1009, %1013 : vector<8x32xf32>
    %c56_269 = arith.constant 56 : index
    %c0_270 = arith.constant 0 : index
    %1015 = vector.load %arg17[%c56_269, %c0_270] : memref<64x32xf32, #tpu.memory_space<vmem>>, vector<8x32xf32>
    tpu.vector_store %arg17[%c56_269, %c0_270], %989 {strides = array<i32>} : memref<64x32xf32, #tpu.memory_space<vmem>>, vector<8x32xf32>,
    %c0_271 = arith.constant 0 : index
    %c0_272 = arith.constant 0 : index
    %1016 = vector.load %arg18[%c0_271, %c0_272] : memref<64x32xf32, #tpu.memory_space<vmem>>, vector<8x32xf32>
    tpu.vector_store %arg18[%c0_271, %c0_272], %1014 {strides = array<i32>} : memref<64x32xf32, #tpu.memory_space<vmem>>, vector<8x32xf32>,
    %c0_273 = arith.constant 0 : index
    %c0_274 = arith.constant 0 : index
    %1017 = vector.load %arg12[%c0_273, %c0_274] : memref<64x128xbf16, #tpu.memory_space<vmem>>, vector<64x128xbf16>
    %c0_275 = arith.constant 0 : index
    %c0_276 = arith.constant 0 : index
    %1018 = vector.load %arg17[%c0_275, %c0_276] : memref<64x32xf32, #tpu.memory_space<vmem>>, vector<64x32xf32>
    %1019 = arith.truncf %1018 : vector<64x32xf32> to vector<64x32xbf16>
    %c0_277 = arith.constant 0 : index
    %c0_278 = arith.constant 0 : index
    %1020 = vector.load %arg18[%c0_277, %c0_278] : memref<64x32xf32, #tpu.memory_space<vmem>>, vector<64x32xf32>
    %1021 = arith.truncf %1020 : vector<64x32xf32> to vector<64x32xbf16>
    %1022 = vector.extract_strided_slice %1017 {offsets = [0, 0], sizes = [32, 128], strides = [1, 1]} : vector<64x128xbf16> to vector<32x128xbf16>
    %cst_279 = arith.constant dense<0.000000e+00> : vector<64x128xf32>
    %1023 = tpu.matmul %1019, %1022, %cst_279 {dimension_numbers = #tpu.dot_dimension_numbers<[1], [0], [0], [1], [0, 0, 1, 1], [], []>} : vector<64x32xbf16>, vector<32x128xbf16>, vector<64x128xf32> -> vector<64x128xf32>
    %1024 = vector.extract_strided_slice %1017 {offsets = [32, 0], sizes = [32, 128], strides = [1, 1]} : vector<64x128xbf16> to vector<32x128xbf16>
    %cst_280 = arith.constant dense<0.000000e+00> : vector<64x128xf32>
    %1025 = tpu.matmul %1021, %1024, %cst_280 {dimension_numbers = #tpu.dot_dimension_numbers<[1], [0], [0], [1], [0, 0, 1, 1], [], []>} : vector<64x32xbf16>, vector<32x128xbf16>, vector<64x128xf32> -> vector<64x128xf32>
    %1026 = arith.addf %1023, %1025 : vector<64x128xf32>
    %c0_281 = arith.constant 0 : index
    %c0_282 = arith.constant 0 : index
    %1027 = vector.load %arg13[%c0_281, %c0_282] : memref<1x128xf32, #tpu.memory_space<vmem>>, vector<1x128xf32>
    %1028 = vector.broadcast %1027 : vector<1x128xf32> to vector<64x128xf32>
    %1029 = arith.addf %1026, %1028 : vector<64x128xf32>
    %c0_283 = arith.constant 0 : index
    %c0_284 = arith.constant 0 : index
    %1030 = vector.load %arg14[%c0_283, %c0_284] : memref<64x128xf32, #tpu.memory_space<vmem>>, vector<64x128xf32>
    tpu.vector_store %arg14[%c0_283, %c0_284], %1029 {strides = array<i32>} : memref<64x128xf32, #tpu.memory_space<vmem>>, vector<64x128xf32>,
    return
  }
  func.func @transform_0(%arg0: i32) -> (i32, i32) {
    %c0_i32 = arith.constant 0 : i32
    %c0_i32_0 = arith.constant 0 : i32
    %c0_i32_1 = arith.constant 0 : i32
    return %c0_i32, %c0_i32_0 : i32, i32
  }
  func.func @transform_1(%arg0: i32) -> (i32, i32) {
    %c0_i32 = arith.constant 0 : i32
    %c0_i32_0 = arith.constant 0 : i32
    %c0_i32_1 = arith.constant 0 : i32
    return %c0_i32, %c0_i32_0 : i32, i32
  }
  func.func @transform_2(%arg0: i32) -> (i32, i32) {
    %c0_i32 = arith.constant 0 : i32
    %c0_i32_0 = arith.constant 0 : i32
    %c0_i32_1 = arith.constant 0 : i32
    return %c0_i32, %c0_i32_0 : i32, i32
  }
  func.func @transform_3(%arg0: i32) -> (i32, i32) {
    %c0_i32 = arith.constant 0 : i32
    %c0_i32_0 = arith.constant 0 : i32
    %c0_i32_1 = arith.constant 0 : i32
    return %c0_i32, %c0_i32_0 : i32, i32
  }
  func.func @transform_4(%arg0: i32) -> (i32, i32) {
    %c0_i32 = arith.constant 0 : i32
    %c0_i32_0 = arith.constant 0 : i32
    %c0_i32_1 = arith.constant 0 : i32
    return %c0_i32, %c0_i32_0 : i32, i32
  }
  func.func @transform_5(%arg0: i32) -> (i32, i32) {
    %c0_i32 = arith.constant 0 : i32
    %c0_i32_0 = arith.constant 0 : i32
    %c0_i32_1 = arith.constant 0 : i32
    return %c0_i32, %c0_i32_0 : i32, i32
  }
  func.func @transform_6(%arg0: i32) -> (i32, i32) {
    %c0_i32 = arith.constant 0 : i32
    %c0_i32_0 = arith.constant 0 : i32
    %c0_i32_1 = arith.constant 0 : i32
    return %c0_i32, %c0_i32_0 : i32, i32
  }
  func.func @transform_7(%arg0: i32) -> (i32, i32) {
    %c0_i32 = arith.constant 0 : i32
    %c0_i32_0 = arith.constant 0 : i32
    %c0_i32_1 = arith.constant 0 : i32
    return %c0_i32, %c0_i32_0 : i32, i32
  }
  func.func @transform_8(%arg0: i32) -> (i32, i32) {
    %c0_i32 = arith.constant 0 : i32
    %c0_i32_0 = arith.constant 0 : i32
    %c0_i32_1 = arith.constant 0 : i32
    return %c0_i32, %c0_i32_0 : i32, i32
  }
  func.func @transform_9(%arg0: i32) -> (i32, i32) {
    %c0_i32 = arith.constant 0 : i32
    %c0_i32_0 = arith.constant 0 : i32
    %c0_i32_1 = arith.constant 0 : i32
    return %c0_i32, %c0_i32_0 : i32, i32
  }
  func.func @transform_10(%arg0: i32) -> (i32, i32) {
    %c0_i32 = arith.constant 0 : i32
    %c0_i32_0 = arith.constant 0 : i32
    %c0_i32_1 = arith.constant 0 : i32
    return %c0_i32, %c0_i32_0 : i32, i32
  }
  func.func @transform_11(%arg0: i32) -> (i32, i32) {
    %c0_i32 = arith.constant 0 : i32
    %c0_i32_0 = arith.constant 0 : i32
    %c0_i32_1 = arith.constant 0 : i32
    return %c0_i32, %c0_i32_0 : i32, i32
  }
  func.func @transform_12(%arg0: i32) -> (i32, i32) {
    %c0_i32 = arith.constant 0 : i32
    %c0_i32_0 = arith.constant 0 : i32
    %c0_i32_1 = arith.constant 0 : i32
    return %c0_i32, %c0_i32_0 : i32, i32
  }
  func.func @transform_13(%arg0: i32) -> (i32, i32) {
    %c0_i32 = arith.constant 0 : i32
    %c0_i32_0 = arith.constant 0 : i32
    %c0_i32_1 = arith.constant 0 : i32
    return %c0_i32, %c0_i32_0 : i32, i32
  }
}

</mosaic_0001>

<llo_original>
// kernel: tpu_custom_call.1
$region0: #{tpu_custom_call.1}
  #allocation0 [shape = 'u32[]', space=smem, size = 0x4, offset = 0x4, fixed_abs, tag = 'smem constant byte address 0x4 - core index']
  #allocation1 [shape = 'u32[144,128]{1,0:T(1,128)}', space=vmem, size = 0x12000, scoped, tag = 'internal scratch']
  #allocation2 [shape = 'f32[64,128]{1,0:T(8,128)}', space=vmem, size = 0x8000, scoped, tag = 'scratch operand']
  #allocation3 [shape = 'f32[64,128]{1,0:T(8,128)}', space=vmem, size = 0x8000, scoped, tag = 'scratch operand']
  #allocation4 [shape = 'f32[64,32]{1,0:T(8,128)}', space=vmem, size = 0x8000, scoped, tag = 'scratch operand']
  #allocation5 [shape = 'f32[64,32]{1,0:T(8,128)}', space=vmem, size = 0x8000, scoped, tag = 'scratch operand']
  %s0 = inlined_call_operand.vmem [shape: bf16[64,32], index: 0, kind: input, shape index: {}]
  %s1 = inlined_call_operand.hbm [shape: bf16[32,128], index: 1, kind: input, shape index: {}]
  %s2 = inlined_call_operand.hbm [shape: bf16[32,128], index: 2, kind: input, shape index: {}]
  %s3 = inlined_call_operand.vmem [shape: f32[1,128], index: 3, kind: input, shape index: {}]
  %s4 = inlined_call_operand.vmem [shape: f32[1,128], index: 4, kind: input, shape index: {}]
  %s5 = inlined_call_operand.hbm [shape: bf16[64,256], index: 5, kind: input, shape index: {}]
  %s6 = inlined_call_operand.hbm [shape: bf16[64,128], index: 6, kind: input, shape index: {}]
  %s7 = inlined_call_operand.hbm [shape: bf16[64,128], index: 7, kind: input, shape index: {}]
  %s8 = inlined_call_operand.hbm [shape: f32[1,128], index: 8, kind: input, shape index: {}]
  %s9 = inlined_call_operand.hbm [shape: f32[1,128], index: 9, kind: input, shape index: {}]
  %s10 = inlined_call_operand.vmem [shape: bf16[64,256], index: 10, kind: input, shape index: {}]
  %s11 = inlined_call_operand.hbm [shape: bf16[64,128], index: 11, kind: input, shape index: {}]
  %s12 = inlined_call_operand.vmem [shape: f32[1,128], index: 12, kind: input, shape index: {}]
  %s13 = inlined_call_operand.hbm [shape: f32[64,128], index: 13, kind: output, shape index: {}]
  %s14 = sld [smem:[#allocation0]]
  $region94: #{tpu_custom_call.1} parent=0
    _
  %s16 = ssub.s32 1, %s14
  %s17 = scalar_select 0, %s16, %s14
  $region1: #{tpu_custom_call.1} parent=0
    #allocation6 [shape = 'u8[8192]{0}', space=vmem, size = 0x2000, scoped, tag = 'input window, operand 1, single buffered']
    #allocation7 [shape = 's32[1]{0}', space=sflag, size = 0x4, scoped, tag = 'scoped memory for tpu_custom_call.1']
    #allocation8 [shape = 's32[1]{0}', space=sflag, size = 0x4, scoped, tag = 'scoped memory for tpu_custom_call.1']
    #allocation9 [shape = 'u8[8192]{0}', space=vmem, size = 0x2000, scoped, tag = 'input window, operand 2, single buffered']
    #allocation10 [shape = 's32[1]{0}', space=sflag, size = 0x4, scoped, tag = 'scoped memory for tpu_custom_call.1']
    #allocation11 [shape = 'u8[32768]{0}', space=vmem, size = 0x8000, scoped, tag = 'input window, operand 5, single buffered']
    #allocation12 [shape = 'u8[16384]{0}', space=vmem, size = 0x4000, scoped, tag = 'input window, operand 6, single buffered']
    #allocation13 [shape = 's32[1]{0}', space=sflag, size = 0x4, scoped, tag = 'scoped memory for tpu_custom_call.1']
    #allocation14 [shape = 'u8[16384]{0}', space=vmem, size = 0x4000, scoped, tag = 'input window, operand 7, single buffered']
    #allocation15 [shape = 'u8[512]{0}', space=vmem, size = 0x400, scoped, tag = 'input window, operand 8, single buffered']
    #allocation16 [shape = 's32[1]{0}', space=sflag, size = 0x4, scoped, tag = 'scoped memory for tpu_custom_call.1']
    #allocation17 [shape = 'u8[512]{0}', space=vmem, size = 0x400, scoped, tag = 'input window, operand 9, single buffered']
    #allocation18 [shape = 'u8[16384]{0}', space=vmem, size = 0x4000, scoped, tag = 'input window, operand 11, single buffered']
    #allocation19 [shape = 's32[1]{0}', space=sflag, size = 0x4, scoped, tag = 'scoped memory for tpu_custom_call.1']
    #allocation20 [shape = 'u8[32768]{0}', space=vmem, size = 0x8000, scoped, tag = 'output window, operand 0, single buffered']
    %18 = vsyncpa [#allocation7], 0
    %19 = vsyncpa [#allocation10], 0
    %20 = vsyncpa [#allocation13], 0
    %21 = vsyncpa [#allocation16], 0
    %22 = vsyncpa [#allocation19], 0
    %23 = vsyncpa [#allocation8], 0
    // Predicated region
    $region2: #{tpu_custom_call.1} parent=1 // pred_check
      _
    $region3: #{tpu_custom_call.1} parent=1 // pred_check_branch
      %25 = sbr.rel (0) target = $region5
    $region4: #{tpu_custom_call.1} parent=1 // pred_region
      _
    $region5: #{tpu_custom_call.1} parent=1 // pred_fallthru
      _
    // Predicated region
    $region6: #{tpu_custom_call.1} parent=1 // pred_check
      _
    $region7: #{tpu_custom_call.1} parent=1 // pred_check_branch
      %27 = sbr.rel (0) target = $region9
    $region8: #{tpu_custom_call.1} parent=1 // pred_region
      %s29 = ssub.s32 256, 256
      %30 = vsyncadd [#allocation7], %s29
      %s31 = sshll.u32 [#allocation6], 4
      %s32 = int_to_ptr.vmem [resolvable:$true] %s31
      %37 = dma.hbm_to_vmem [thread:$0]  %s1, 256, %s32, [#allocation7], 64, 64, 4
    $region9: #{tpu_custom_call.1} parent=1 // pred_fallthru
      _
    // Predicated region
    $region10: #{tpu_custom_call.1} parent=1 // pred_check
      _
    $region11: #{tpu_custom_call.1} parent=1 // pred_check_branch
      %39 = sbr.rel (0) target = $region13
    $region12: #{tpu_custom_call.1} parent=1 // pred_region
      %s41 = ssub.s32 256, 256
      %42 = vsyncadd [#allocation10], %s41
      %s43 = sshll.u32 [#allocation9], 4
      %s44 = int_to_ptr.vmem [resolvable:$true] %s43
      %49 = dma.hbm_to_vmem [thread:$0]  %s2, 256, %s44, [#allocation10], 64, 64, 4
    $region13: #{tpu_custom_call.1} parent=1 // pred_fallthru
      _
    // Predicated region
    $region14: #{tpu_custom_call.1} parent=1 // pred_check
      _
    $region15: #{tpu_custom_call.1} parent=1 // pred_check_branch
      %51 = sbr.rel (0) target = $region17
    $region16: #{tpu_custom_call.1} parent=1 // pred_region
      _
    $region17: #{tpu_custom_call.1} parent=1 // pred_fallthru
      _
    // Predicated region
    $region18: #{tpu_custom_call.1} parent=1 // pred_check
      _
    $region19: #{tpu_custom_call.1} parent=1 // pred_check_branch
      %53 = sbr.rel (0) target = $region21
    $region20: #{tpu_custom_call.1} parent=1 // pred_region
      _
    $region21: #{tpu_custom_call.1} parent=1 // pred_fallthru
      _
    // Predicated region
    $region22: #{tpu_custom_call.1} parent=1 // pred_check
      _
    $region23: #{tpu_custom_call.1} parent=1 // pred_check_branch
      %55 = sbr.rel (0) target = $region25
    $region24: #{tpu_custom_call.1} parent=1 // pred_region
      %s57 = ssub.s32 1024, 1024
      %58 = vsyncadd [#allocation10], %s57
      %s59 = sshll.u32 [#allocation11], 4
      %s60 = int_to_ptr.vmem [resolvable:$true] %s59
      %65 = dma.hbm_to_vmem [thread:$0]  %s5, 1024, %s60, [#allocation10], 128, 128, 8
    $region25: #{tpu_custom_call.1} parent=1 // pred_fallthru
      _
    // Predicated region
    $region26: #{tpu_custom_call.1} parent=1 // pred_check
      _
    $region27: #{tpu_custom_call.1} parent=1 // pred_check_branch
      %67 = sbr.rel (0) target = $region29
    $region28: #{tpu_custom_call.1} parent=1 // pred_region
      %s69 = ssub.s32 512, 512
      %70 = vsyncadd [#allocation13], %s69
      %s71 = sshll.u32 [#allocation12], 4
      %s72 = int_to_ptr.vmem [resolvable:$true] %s71
      %77 = dma.hbm_to_vmem [thread:$0]  %s6, 512, %s72, [#allocation13], 64, 64, 4
    $region29: #{tpu_custom_call.1} parent=1 // pred_fallthru
      _
    // Predicated region
    $region30: #{tpu_custom_call.1} parent=1 // pred_check
      _
    $region31: #{tpu_custom_call.1} parent=1 // pred_check_branch
      %79 = sbr.rel (0) target = $region33
    $region32: #{tpu_custom_call.1} parent=1 // pred_region
      %s81 = ssub.s32 512, 512
      %82 = vsyncadd [#allocation13], %s81
      %s83 = sshll.u32 [#allocation14], 4
      %s84 = int_to_ptr.vmem [resolvable:$true] %s83
      %89 = dma.hbm_to_vmem [thread:$0]  %s7, 512, %s84, [#allocation13], 64, 64, 4
    $region33: #{tpu_custom_call.1} parent=1 // pred_fallthru
      _
    // Predicated region
    $region34: #{tpu_custom_call.1} parent=1 // pred_check
      _
    $region35: #{tpu_custom_call.1} parent=1 // pred_check_branch
      %91 = sbr.rel (0) target = $region37
    $region36: #{tpu_custom_call.1} parent=1 // pred_region
      %s93 = ssub.s32 16, 16
      %94 = vsyncadd [#allocation16], %s93
      %s96 = sshll.u32 [#allocation15], 4
      %s97 = int_to_ptr.vmem [resolvable:$true] %s96
      %99 = dma.hbm_to_vmem [thread:$0]  %s8, 16, %s97, [#allocation16]
    $region37: #{tpu_custom_call.1} parent=1 // pred_fallthru
      _
    // Predicated region
    $region38: #{tpu_custom_call.1} parent=1 // pred_check
      _
    $region39: #{tpu_custom_call.1} parent=1 // pred_check_branch
      %101 = sbr.rel (0) target = $region41
    $region40: #{tpu_custom_call.1} parent=1 // pred_region
      %s103 = ssub.s32 16, 16
      %104 = vsyncadd [#allocation16], %s103
      %s106 = sshll.u32 [#allocation17], 4
      %s107 = int_to_ptr.vmem [resolvable:$true] %s106
      %109 = dma.hbm_to_vmem [thread:$0]  %s9, 16, %s107, [#allocation16]
    $region41: #{tpu_custom_call.1} parent=1 // pred_fallthru
      _
    // Predicated region
    $region42: #{tpu_custom_call.1} parent=1 // pred_check
      _
    $region43: #{tpu_custom_call.1} parent=1 // pred_check_branch
      %111 = sbr.rel (0) target = $region45
    $region44: #{tpu_custom_call.1} parent=1 // pred_region
      _
    $region45: #{tpu_custom_call.1} parent=1 // pred_fallthru
      _
    // Predicated region
    $region46: #{tpu_custom_call.1} parent=1 // pred_check
      _
    $region47: #{tpu_custom_call.1} parent=1 // pred_check_branch
      %113 = sbr.rel (0) target = $region49
    $region48: #{tpu_custom_call.1} parent=1 // pred_region
      %s115 = ssub.s32 512, 512
      %116 = vsyncadd [#allocation19], %s115
      %s117 = sshll.u32 [#allocation18], 4
      %s118 = int_to_ptr.vmem [resolvable:$true] %s117
      %123 = dma.hbm_to_vmem [thread:$0]  %s11, 512, %s118, [#allocation19], 64, 64, 4
    $region49: #{tpu_custom_call.1} parent=1 // pred_fallthru
      _
    // Predicated region
    $region50: #{tpu_custom_call.1} parent=1 // pred_check
      _
    $region51: #{tpu_custom_call.1} parent=1 // pred_check_branch
      %125 = sbr.rel (0) target = $region53
    $region52: #{tpu_custom_call.1} parent=1 // pred_region
      _
    $region53: #{tpu_custom_call.1} parent=1 // pred_fallthru
      _
    // Predicated region
    $region54: #{tpu_custom_call.1} parent=1 // pred_check
      _
    $region55: #{tpu_custom_call.1} parent=1 // pred_check_branch
      %127 = sbr.rel (0) target = $region57
    $region56: #{tpu_custom_call.1} parent=1 // pred_region
      %128 = dma.done [#allocation7], 256
    $region57: #{tpu_custom_call.1} parent=1 // pred_fallthru
      _
    // Predicated region
    $region58: #{tpu_custom_call.1} parent=1 // pred_check
      _
    $region59: #{tpu_custom_call.1} parent=1 // pred_check_branch
      %130 = sbr.rel (0) target = $region61
    $region60: #{tpu_custom_call.1} parent=1 // pred_region
      %131 = dma.done [#allocation10], 256
    $region61: #{tpu_custom_call.1} parent=1 // pred_fallthru
      _
    // Predicated region
    $region62: #{tpu_custom_call.1} parent=1 // pred_check
      _
    $region63: #{tpu_custom_call.1} parent=1 // pred_check_branch
      %133 = sbr.rel (0) target = $region65
    $region64: #{tpu_custom_call.1} parent=1 // pred_region
      %134 = dma.done [#allocation10], 1024
    $region65: #{tpu_custom_call.1} parent=1 // pred_fallthru
      _
    // Predicated region
    $region66: #{tpu_custom_call.1} parent=1 // pred_check
      _
    $region67: #{tpu_custom_call.1} parent=1 // pred_check_branch
      %136 = sbr.rel (0) target = $region69
    $region68: #{tpu_custom_call.1} parent=1 // pred_region
      %137 = dma.done [#allocation13], 512
    $region69: #{tpu_custom_call.1} parent=1 // pred_fallthru
      _
    // Predicated region
    $region70: #{tpu_custom_call.1} parent=1 // pred_check
      _
    $region71: #{tpu_custom_call.1} parent=1 // pred_check_branch
      %139 = sbr.rel (0) target = $region73
    $region72: #{tpu_custom_call.1} parent=1 // pred_region
      %140 = dma.done [#allocation13], 512
    $region73: #{tpu_custom_call.1} parent=1 // pred_fallthru
      _
    // Predicated region
    $region74: #{tpu_custom_call.1} parent=1 // pred_check
      _
    $region75: #{tpu_custom_call.1} parent=1 // pred_check_branch
      %142 = sbr.rel (0) target = $region77
    $region76: #{tpu_custom_call.1} parent=1 // pred_region
      %143 = dma.done [#allocation16], 16
    $region77: #{tpu_custom_call.1} parent=1 // pred_fallthru
      _
    // Predicated region
    $region78: #{tpu_custom_call.1} parent=1 // pred_check
      _
    $region79: #{tpu_custom_call.1} parent=1 // pred_check_branch
      %145 = sbr.rel (0) target = $region81
    $region80: #{tpu_custom_call.1} parent=1 // pred_region
      %146 = dma.done [#allocation16], 16
    $region81: #{tpu_custom_call.1} parent=1 // pred_fallthru
      _
    // Predicated region
    $region82: #{tpu_custom_call.1} parent=1 // pred_check
      _
    $region83: #{tpu_custom_call.1} parent=1 // pred_check_branch
      %148 = sbr.rel (0) target = $region85
    $region84: #{tpu_custom_call.1} parent=1 // pred_region
      %149 = dma.done [#allocation19], 512
    $region85: #{tpu_custom_call.1} parent=1 // pred_fallthru
      _
    %v151 = vld [vmem:[%s0] sm:$0xf]
    %v152 = vld [vmem:[%s0 + $0x4] sm:$0xf]
    %v153 = vld [vmem:[%s0 + $0x8] sm:$0xf]
    %v154 = vld [vmem:[%s0 + $0xc] sm:$0xf]
    %v155 = vld [vmem:[%s0 + $0x10] sm:$0xf]
    %v156 = vld [vmem:[%s0 + $0x14] sm:$0xf]
    %v157 = vld [vmem:[%s0 + $0x18] sm:$0xf]
    %v158 = vld [vmem:[%s0 + $0x1c] sm:$0xf]
    %v159 = vld [vmem:[#allocation6] sm:$0xf]
    %v160 = vld [vmem:[#allocation6 + $0x4] sm:$0xf]
    %v161 = vld [vmem:[#allocation6 + $0x8] sm:$0xf]
    %v162 = vld [vmem:[#allocation6 + $0xc] sm:$0xf]
    %v163 = vld [vmem:[%s3] sm:$0x1]
    %v165 = vlaneseq
    %v166 = vshrl.u32 %v165, 7
    %v167 = vsub.s32 0, %v166
    %v168 = vrot.slane %v163, %v167
    %v178 = vunpack.c.l.b16 %v151
    %v179 = vunpack.c.l.b16 %v152
    %v180 = vunpack.c.l.b16 %v153
    %v181 = vunpack.c.l.b16 %v154
    %v182 = vunpack.c.l.b16 %v155
    %v183 = vunpack.c.l.b16 %v156
    %v184 = vunpack.c.l.b16 %v157
    %v185 = vunpack.c.l.b16 %v158
    %v186 = vpack.c.b16 %v179, %v178
    %v187 = vpack.c.b16 %v181, %v180
    %v188 = vpack.c.b16 %v183, %v182
    %v189 = vpack.c.b16 %v185, %v184
    %v194 = vunpack.c.l.b16 %v159
    %v195 = vunpack.c.l.b16 %v160
    %v196 = vunpack.c.l.b16 %v161
    %v197 = vunpack.c.l.b16 %v162
    %v198 = vpack.c.b16 %v195, %v194
    %v199 = vpack.c.b16 %v197, %v196
    %vm202 = vcmask 261120
    %v204 = vsel %vm202, %v186, 0
    %v207 = vsel %vm202, %v187, 0
    %v210 = vsel %vm202, %v188, 0
    %v213 = vsel %vm202, %v189, 0
    %215 = vmatprep.subr.bf16.mxu0 0
    %216 = vmatpush1.bf16.msra.mxu0 0
    %217 = vmatprep.subr.bf16.mxu0 0
    %218 = vmatpush1.bf16.msra.mxu0 0
    %219 = vmatprep.subr.bf16.mxu0 0
    %220 = vmatpush1.bf16.msra.mxu0 0
    %221 = vmatprep.subr.bf16.mxu0 0
    %222 = vmatpush1.bf16.msra.mxu0 0
    %223 = vmatprep.subr.bf16.mxu0 0
    %224 = vmatpush1.bf16.msra.mxu0 0
    %225 = vmatprep.subr.bf16.mxu0 0
    %226 = vmatpush1.bf16.msra.mxu0 0
    %227 = vmatprep.subr.bf16.mxu0 0
    %228 = vmatpush1.bf16.msra.mxu0 %v199
    %229 = vmatprep.subr.bf16.mxu0 0
    %230 = vmatpush1.bf16.msra.mxu0 %v198
    %231 = vmatprep.subr.bf16.mxu0 0
    %232 = vmatpush2.bf16.msra.mxu0 0
    %233 = vmatprep.subr.bf16.mxu0 0
    %234 = vmatpush2.bf16.msra.mxu0 0
    %235 = vmatprep.subr.bf16.mxu0 0
    %236 = vmatpush2.bf16.msra.mxu0 0
    %237 = vmatprep.subr.bf16.mxu0 0
    %238 = vmatpush2.bf16.msra.mxu0 0
    %239 = vmatprep.subr.bf16.mxu0 0
    %240 = vmatpush2.bf16.msra.mxu0 0
    %241 = vmatprep.subr.bf16.mxu0 0
    %242 = vmatpush2.bf16.msra.mxu0 0
    %243 = vmatprep.subr.bf16.mxu0 0
    %244 = vmatpush2.bf16.msra.mxu0 0
    %245 = vmatprep.subr.bf16.mxu0 0
    %246 = vmatpush2.bf16.msra.mxu0 0
    %247 = vmatprep.mubr.bf16.mxu0 0
    %248 = vmatmul.mubr.bf16.gmra.mxu0 %v204
    %v249 = vpop.f32.mrf.mxu0
    %v250 = vadd.f32 %v168, %v249
    %v251 = vpop.f32.mrf.mxu0
    %v252 = vpop.f32.mrf.mxu0
    %v253 = vadd.f32 %v168, %v252
    %v254 = vpop.f32.mrf.mxu0
    %255 = vmatprep.mubr.bf16.mxu0 0
    %256 = vmatmul.mubr.bf16.gmra.mxu0 %v207
    %v257 = vpop.f32.mrf.mxu0
    %v258 = vadd.f32 %v168, %v257
    %v259 = vpop.f32.mrf.mxu0
    %v260 = vpop.f32.mrf.mxu0
    %v261 = vadd.f32 %v168, %v260
    %v262 = vpop.f32.mrf.mxu0
    %263 = vmatprep.mubr.bf16.mxu0 0
    %264 = vmatmul.mubr.bf16.gmra.mxu0 %v210
    %v265 = vpop.f32.mrf.mxu0
    %v266 = vadd.f32 %v168, %v265
    %v267 = vpop.f32.mrf.mxu0
    %v268 = vpop.f32.mrf.mxu0
    %v269 = vadd.f32 %v168, %v268
    %v270 = vpop.f32.mrf.mxu0
    %271 = vmatprep.mubr.bf16.mxu0 0
    %272 = vmatmul.mubr.bf16.gmra.mxu0 %v213
    %v273 = vpop.f32.mrf.mxu0
    %v274 = vadd.f32 %v168, %v273
    %v275 = vpop.f32.mrf.mxu0
    %v276 = vpop.f32.mrf.mxu0
    %v277 = vadd.f32 %v168, %v276
    %v278 = vpop.f32.mrf.mxu0
    %279 = vdwg.mxu0
    %v280 = vld [vmem:[#allocation9] sm:$0xf]
    %v281 = vld [vmem:[#allocation9 + $0x4] sm:$0xf]
    %v282 = vld [vmem:[#allocation9 + $0x8] sm:$0xf]
    %v283 = vld [vmem:[#allocation9 + $0xc] sm:$0xf]
    %v284 = vld [vmem:[%s4] sm:$0x1]
    %v286 = vlaneseq
    %v287 = vshrl.u32 %v286, 7
    %v288 = vsub.s32 0, %v287
    %v289 = vrot.slane %v284, %v288
    %v295 = vunpack.c.l.b16 %v280
    %v296 = vunpack.c.l.b16 %v281
    %v297 = vunpack.c.l.b16 %v282
    %v298 = vunpack.c.l.b16 %v283
    %v299 = vpack.c.b16 %v296, %v295
    %v300 = vpack.c.b16 %v298, %v297
    %303 = vmatprep.subr.bf16.mxu0 0
    %304 = vmatpush1.bf16.msra.mxu0 0
    %305 = vmatprep.subr.bf16.mxu0 0
    %306 = vmatpush1.bf16.msra.mxu0 0
    %307 = vmatprep.subr.bf16.mxu0 0
    %308 = vmatpush1.bf16.msra.mxu0 0
    %309 = vmatprep.subr.bf16.mxu0 0
    %310 = vmatpush1.bf16.msra.mxu0 0
    %311 = vmatprep.subr.bf16.mxu0 0
    %312 = vmatpush1.bf16.msra.mxu0 0
    %313 = vmatprep.subr.bf16.mxu0 0
    %314 = vmatpush1.bf16.msra.mxu0 0
    %315 = vmatprep.subr.bf16.mxu0 0
    %316 = vmatpush1.bf16.msra.mxu0 %v300
    %317 = vmatprep.subr.bf16.mxu0 0
    %318 = vmatpush1.bf16.msra.mxu0 %v299
    %319 = vmatprep.subr.bf16.mxu0 0
    %320 = vmatpush2.bf16.msra.mxu0 0
    %321 = vmatprep.subr.bf16.mxu0 0
    %322 = vmatpush2.bf16.msra.mxu0 0
    %323 = vmatprep.subr.bf16.mxu0 0
    %324 = vmatpush2.bf16.msra.mxu0 0
    %325 = vmatprep.subr.bf16.mxu0 0
    %326 = vmatpush2.bf16.msra.mxu0 0
    %327 = vmatprep.subr.bf16.mxu0 0
    %328 = vmatpush2.bf16.msra.mxu0 0
    %329 = vmatprep.subr.bf16.mxu0 0
    %330 = vmatpush2.bf16.msra.mxu0 0
    %331 = vmatprep.subr.bf16.mxu0 0
    %332 = vmatpush2.bf16.msra.mxu0 0
    %333 = vmatprep.subr.bf16.mxu0 0
    %334 = vmatpush2.bf16.msra.mxu0 0
    %335 = vmatprep.mubr.bf16.mxu0 0
    %336 = vmatmul.mubr.bf16.gmra.mxu0 %v204
    %v337 = vpop.f32.mrf.mxu0
    %v338 = vadd.f32 %v289, %v337
    %v339 = vpop.f32.mrf.mxu0
    %v340 = vpop.f32.mrf.mxu0
    %v341 = vadd.f32 %v289, %v340
    %v342 = vpop.f32.mrf.mxu0
    %343 = vmatprep.mubr.bf16.mxu0 0
    %344 = vmatmul.mubr.bf16.gmra.mxu0 %v207
    %v345 = vpop.f32.mrf.mxu0
    %v346 = vadd.f32 %v289, %v345
    %v347 = vpop.f32.mrf.mxu0
    %v348 = vpop.f32.mrf.mxu0
    %v349 = vadd.f32 %v289, %v348
    %v350 = vpop.f32.mrf.mxu0
    %351 = vmatprep.mubr.bf16.mxu0 0
    %352 = vmatmul.mubr.bf16.gmra.mxu0 %v210
    %v353 = vpop.f32.mrf.mxu0
    %v354 = vadd.f32 %v289, %v353
    %v355 = vpop.f32.mrf.mxu0
    %v356 = vpop.f32.mrf.mxu0
    %v357 = vadd.f32 %v289, %v356
    %v358 = vpop.f32.mrf.mxu0
    %359 = vmatprep.mubr.bf16.mxu0 0
    %360 = vmatmul.mubr.bf16.gmra.mxu0 %v213
    %v361 = vpop.f32.mrf.mxu0
    %v362 = vadd.f32 %v289, %v361
    %v363 = vpop.f32.mrf.mxu0
    %v364 = vpop.f32.mrf.mxu0
    %v365 = vadd.f32 %v289, %v364
    %v366 = vpop.f32.mrf.mxu0
    %367 = vdwg.mxu0
    %368 = vst [vmem:[#allocation2] sm:$0xff] %v250
    %369 = vst [vmem:[#allocation2 + $0x8] sm:$0xff] %v253
    %370 = vst [vmem:[#allocation2 + $0x10] sm:$0xff] %v258
    %371 = vst [vmem:[#allocation2 + $0x18] sm:$0xff] %v261
    %372 = vst [vmem:[#allocation2 + $0x20] sm:$0xff] %v266
    %373 = vst [vmem:[#allocation2 + $0x28] sm:$0xff] %v269
    %374 = vst [vmem:[#allocation2 + $0x30] sm:$0xff] %v274
    %375 = vst [vmem:[#allocation2 + $0x38] sm:$0xff] %v277
    %376 = vst [vmem:[#allocation3] sm:$0xff] %v338
    %377 = vst [vmem:[#allocation3 + $0x8] sm:$0xff] %v341
    %378 = vst [vmem:[#allocation3 + $0x10] sm:$0xff] %v346
    %379 = vst [vmem:[#allocation3 + $0x18] sm:$0xff] %v349
    %380 = vst [vmem:[#allocation3 + $0x20] sm:$0xff] %v354
    %381 = vst [vmem:[#allocation3 + $0x28] sm:$0xff] %v357
    %382 = vst [vmem:[#allocation3 + $0x30] sm:$0xff] %v362
    %383 = vst [vmem:[#allocation3 + $0x38] sm:$0xff] %v365
    %v384 = vld [vmem:[#allocation11] sm:$0xff]
    %v385 = vld [vmem:[#allocation11 + $0x8] sm:$0xff]
    %v386 = vld [vmem:[#allocation11 + $0x10] sm:$0xff]
    %v387 = vld [vmem:[#allocation11 + $0x18] sm:$0xff]
    %v388 = vld [vmem:[#allocation11 + $0x20] sm:$0xff]
    %v389 = vld [vmem:[#allocation11 + $0x28] sm:$0xff]
    %v390 = vld [vmem:[#allocation11 + $0x30] sm:$0xff]
    %v391 = vld [vmem:[#allocation11 + $0x38] sm:$0xff]
    %v392 = vpack.c.bf16 0.0, 0.0
    %v401 = vunpack.c.l.b16 %v384
    %v402 = vunpack.c.h.b16 %v384
    %v403 = vunpack.c.l.b16 %v385
    %v404 = vunpack.c.h.b16 %v385
    %v405 = vunpack.c.l.b16 %v386
    %v406 = vunpack.c.h.b16 %v386
    %v407 = vunpack.c.l.b16 %v387
    %v408 = vunpack.c.h.b16 %v387
    %v409 = vunpack.c.l.b16 %v388
    %v410 = vunpack.c.h.b16 %v388
    %v411 = vunpack.c.l.b16 %v389
    %v412 = vunpack.c.h.b16 %v389
    %v413 = vunpack.c.l.b16 %v390
    %v414 = vunpack.c.h.b16 %v390
    %v415 = vunpack.c.l.b16 %v391
    %v416 = vunpack.c.h.b16 %v391
    %v417 = vpack.c.b16 %v403, %v401
    %v418 = vpack.c.b16 %v404, %v402
    %v419 = vpack.c.b16 %v407, %v405
    %v420 = vpack.c.b16 %v408, %v406
    %v421 = vpack.c.b16 %v411, %v409
    %v422 = vpack.c.b16 %v412, %v410
    %v423 = vpack.c.b16 %v415, %v413
    %v424 = vpack.c.b16 %v416, %v414
    %vm433 = vcmask 523264
    %v435 = vsel %vm433, %v392, 0
    %437 = vmatprep.subr.bf16.mxu0 0
    %438 = vmatpush1.bf16.msra.mxu0 0
    %439 = vmatprep.subr.bf16.mxu0 0
    %440 = vmatpush1.bf16.msra.mxu0 0
    %441 = vmatprep.subr.bf16.mxu0 0
    %442 = vmatpush1.bf16.msra.mxu0 0
    %443 = vmatprep.subr.bf16.mxu0 0
    %444 = vmatpush1.bf16.msra.mxu0 0
    %445 = vmatprep.subr.bf16.mxu0 %v424
    %446 = vmatpush1.bf16.msra.mxu0 %v423
    %447 = vmatprep.subr.bf16.mxu0 %v422
    %448 = vmatpush1.bf16.msra.mxu0 %v421
    %449 = vmatprep.subr.bf16.mxu0 %v420
    %450 = vmatpush1.bf16.msra.mxu0 %v419
    %451 = vmatprep.subr.bf16.mxu0 %v418
    %452 = vmatpush1.bf16.msra.mxu0 %v417
    %453 = vmatprep.subr.bf16.mxu0 0
    %454 = vmatpush2.bf16.msra.mxu0 0
    %455 = vmatprep.subr.bf16.mxu0 0
    %456 = vmatpush2.bf16.msra.mxu0 0
    %457 = vmatprep.subr.bf16.mxu0 0
    %458 = vmatpush2.bf16.msra.mxu0 0
    %459 = vmatprep.subr.bf16.mxu0 0
    %460 = vmatpush2.bf16.msra.mxu0 0
    %461 = vmatprep.subr.bf16.mxu0 0
    %462 = vmatpush2.bf16.msra.mxu0 0
    %463 = vmatprep.subr.bf16.mxu0 0
    %464 = vmatpush2.bf16.msra.mxu0 0
    %465 = vmatprep.subr.bf16.mxu0 0
    %466 = vmatpush2.bf16.msra.mxu0 0
    %467 = vmatprep.subr.bf16.mxu0 0
    %468 = vmatpush2.bf16.msra.mxu0 0
    %469 = vmatprep.mubr.bf16.mxu0 0
    %470 = vmatmul.mubr.bf16.gmra.mxu0 %v435
    %v471 = vpop.f32.mrf.mxu0
    %v472 = vadd.f32 0.0, %v471
    %v473 = vpop.f32.mrf.mxu0
    %v474 = vadd.f32 0.0, %v473
    %v475 = vpop.f32.mrf.mxu0
    %v476 = vpop.f32.mrf.mxu0
    %477 = vdwg.mxu0
    %v478 = vld [vmem:[#allocation2] sm:$0xff]
    %v479 = vadd.f32 %v478, %v472
    %v480 = vld [vmem:[#allocation3 + $0x38] sm:$0xff]
    %v481 = vadd.f32 %v480, %v474
    %v482 = vxor.u32 %v479, 2147483648
    %v483 = vmul.f32 %v482, 1.442695
    %v484 = vpow.pop %v483
    %v485 = vadd.f32 %v484, 1.0
    %v486 = vrcp.pop %v485
    %v487 = vmul.f32 1.0, %v486
    %v488 = vtanh.pop %v479
    %v489 = vmul.f32 %v487, 0.0
    %491 = vrot.lane.b32.xlu0 %v488, 64
    %v492 = vpop.permute.xlu0 %491
    %v494 = vmul.f32 %v487, %v492
    %496 = vrot.lane.b32.xlu0 %v494, 32
    %v497 = vpop.permute.xlu0 %496
    %v499 = vadd.f32 %v489, %v497
    %v500 = vtanh.pop %v499
    %502 = vrot.lane.b32.xlu0 %v500, 64
    %v503 = vpop.permute.xlu0 %502
    %v505 = vmul.f32 %v487, %v503
    %v506 = vxor.u32 %v481, 2147483648
    %v507 = vmul.f32 %v506, 1.442695
    %v508 = vpow.pop %v507
    %v509 = vadd.f32 %v508, 1.0
    %v510 = vrcp.pop %v509
    %v511 = vmul.f32 1.0, %v510
    %v512 = vtanh.pop %v481
    %v513 = vmul.f32 %v511, 0.0
    %515 = vrot.lane.b32.xlu0 %v512, 64
    %v516 = vpop.permute.xlu0 %515
    %v518 = vmul.f32 %v511, %v516
    %520 = vrot.lane.b32.xlu0 %v518, 32
    %v521 = vpop.permute.xlu0 %520
    %v523 = vadd.f32 %v513, %v521
    %v524 = vtanh.pop %v523
    %526 = vrot.lane.b32.xlu0 %v524, 64
    %v527 = vpop.permute.xlu0 %526
    %v529 = vmul.f32 %v511, %v527
    %531 = vrot.lane.b32.xlu0 %v505, 32
    %v532 = vpop.permute.xlu0 %531
    %534 = vst.msk [vmem:[#allocation4] sm:$0xff] %vm202, %v532
    %536 = vrot.lane.b32.xlu0 %v529, 32
    %v537 = vpop.permute.xlu0 %536
    %539 = vst.msk [vmem:[#allocation5 + $0x38] sm:$0xff] %vm202, %v537
    %540 = vrot.lane.b32.xlu0 %v529, 64
    %v541 = vpop.permute.xlu0 %540
    %v543 = vsel %vm202, %v532, %v541
    %v544 = vpack.c.bf16 %v543, %v543
    %v546 = vsel %vm433, %v544, 0
    %548 = vmatprep.subr.bf16.mxu0 0
    %549 = vmatpush1.bf16.msra.mxu0 0
    %550 = vmatprep.subr.bf16.mxu0 0
    %551 = vmatpush1.bf16.msra.mxu0 0
    %552 = vmatprep.subr.bf16.mxu0 0
    %553 = vmatpush1.bf16.msra.mxu0 0
    %554 = vmatprep.subr.bf16.mxu0 0
    %555 = vmatpush1.bf16.msra.mxu0 0
    %556 = vmatprep.subr.bf16.mxu0 %v424
    %557 = vmatpush1.bf16.msra.mxu0 %v423
    %558 = vmatprep.subr.bf16.mxu0 %v422
    %559 = vmatpush1.bf16.msra.mxu0 %v421
    %560 = vmatprep.subr.bf16.mxu0 %v420
    %561 = vmatpush1.bf16.msra.mxu0 %v419
    %562 = vmatprep.subr.bf16.mxu0 %v418
    %563 = vmatpush1.bf16.msra.mxu0 %v417
    %564 = vmatprep.subr.bf16.mxu0 0
    %565 = vmatpush2.bf16.msra.mxu0 0
    %566 = vmatprep.subr.bf16.mxu0 0
    %567 = vmatpush2.bf16.msra.mxu0 0
    %568 = vmatprep.subr.bf16.mxu0 0
    %569 = vmatpush2.bf16.msra.mxu0 0
    %570 = vmatprep.subr.bf16.mxu0 0
    %571 = vmatpush2.bf16.msra.mxu0 0
    %572 = vmatprep.subr.bf16.mxu0 0
    %573 = vmatpush2.bf16.msra.mxu0 0
    %574 = vmatprep.subr.bf16.mxu0 0
    %575 = vmatpush2.bf16.msra.mxu0 0
    %576 = vmatprep.subr.bf16.mxu0 0
    %577 = vmatpush2.bf16.msra.mxu0 0
    %578 = vmatprep.subr.bf16.mxu0 0
    %579 = vmatpush2.bf16.msra.mxu0 0
    %580 = vmatprep.mubr.bf16.mxu0 0
    %581 = vmatmul.mubr.bf16.gmra.mxu0 %v546
    %v582 = vpop.f32.mrf.mxu0
    %v583 = vadd.f32 0.0, %v582
    %v584 = vpop.f32.mrf.mxu0
    %v585 = vadd.f32 0.0, %v584
    %v586 = vpop.f32.mrf.mxu0
    %v587 = vpop.f32.mrf.mxu0
    %588 = vdwg.mxu0
    %v589 = vld [vmem:[#allocation2 + $0x8] sm:$0xff]
    %v590 = vadd.f32 %v589, %v583
    %v591 = vld [vmem:[#allocation3 + $0x30] sm:$0xff]
    %v592 = vadd.f32 %v591, %v585
    %v593 = vxor.u32 %v590, 2147483648
    %v594 = vmul.f32 %v593, 1.442695
    %v595 = vpow.pop %v594
    %v596 = vadd.f32 %v595, 1.0
    %v597 = vrcp.pop %v596
    %v598 = vmul.f32 1.0, %v597
    %v599 = vtanh.pop %v590
    %v600 = vmul.f32 %v598, %v499
    %602 = vrot.lane.b32.xlu0 %v599, 64
    %v603 = vpop.permute.xlu0 %602
    %v605 = vmul.f32 %v598, %v603
    %607 = vrot.lane.b32.xlu0 %v605, 32
    %v608 = vpop.permute.xlu0 %607
    %v610 = vadd.f32 %v600, %v608
    %v611 = vtanh.pop %v610
    %613 = vrot.lane.b32.xlu0 %v611, 64
    %v614 = vpop.permute.xlu0 %613
    %v616 = vmul.f32 %v598, %v614
    %v617 = vxor.u32 %v592, 2147483648
    %v618 = vmul.f32 %v617, 1.442695
    %v619 = vpow.pop %v618
    %v620 = vadd.f32 %v619, 1.0
    %v621 = vrcp.pop %v620
    %v622 = vmul.f32 1.0, %v621
    %v623 = vtanh.pop %v592
    %v624 = vmul.f32 %v622, %v523
    %626 = vrot.lane.b32.xlu0 %v623, 64
    %v627 = vpop.permute.xlu0 %626
    %v629 = vmul.f32 %v622, %v627
    %631 = vrot.lane.b32.xlu0 %v629, 32
    %v632 = vpop.permute.xlu0 %631
    %v634 = vadd.f32 %v624, %v632
    %v635 = vtanh.pop %v634
    %637 = vrot.lane.b32.xlu0 %v635, 64
    %v638 = vpop.permute.xlu0 %637
    %v640 = vmul.f32 %v622, %v638
    %642 = vrot.lane.b32.xlu0 %v616, 32
    %v643 = vpop.permute.xlu0 %642
    %645 = vst.msk [vmem:[#allocation4 + $0x8] sm:$0xff] %vm202, %v643
    %647 = vrot.lane.b32.xlu0 %v640, 32
    %v648 = vpop.permute.xlu0 %647
    %650 = vst.msk [vmem:[#allocation5 + $0x30] sm:$0xff] %vm202, %v648
    %651 = vrot.lane.b32.xlu0 %v640, 64
    %v652 = vpop.permute.xlu0 %651
    %v654 = vsel %vm202, %v643, %v652
    %v655 = vpack.c.bf16 %v654, %v654
    %v657 = vsel %vm433, %v655, 0
    %659 = vmatprep.subr.bf16.mxu0 0
    %660 = vmatpush1.bf16.msra.mxu0 0
    %661 = vmatprep.subr.bf16.mxu0 0
    %662 = vmatpush1.bf16.msra.mxu0 0
    %663 = vmatprep.subr.bf16.mxu0 0
    %664 = vmatpush1.bf16.msra.mxu0 0
    %665 = vmatprep.subr.bf16.mxu0 0
    %666 = vmatpush1.bf16.msra.mxu0 0
    %667 = vmatprep.subr.bf16.mxu0 %v424
    %668 = vmatpush1.bf16.msra.mxu0 %v423
    %669 = vmatprep.subr.bf16.mxu0 %v422
    %670 = vmatpush1.bf16.msra.mxu0 %v421
    %671 = vmatprep.subr.bf16.mxu0 %v420
    %672 = vmatpush1.bf16.msra.mxu0 %v419
    %673 = vmatprep.subr.bf16.mxu0 %v418
    %674 = vmatpush1.bf16.msra.mxu0 %v417
    %675 = vmatprep.subr.bf16.mxu0 0
    %676 = vmatpush2.bf16.msra.mxu0 0
    %677 = vmatprep.subr.bf16.mxu0 0
    %678 = vmatpush2.bf16.msra.mxu0 0
    %679 = vmatprep.subr.bf16.mxu0 0
    %680 = vmatpush2.bf16.msra.mxu0 0
    %681 = vmatprep.subr.bf16.mxu0 0
    %682 = vmatpush2.bf16.msra.mxu0 0
    %683 = vmatprep.subr.bf16.mxu0 0
    %684 = vmatpush2.bf16.msra.mxu0 0
    %685 = vmatprep.subr.bf16.mxu0 0
    %686 = vmatpush2.bf16.msra.mxu0 0
    %687 = vmatprep.subr.bf16.mxu0 0
    %688 = vmatpush2.bf16.msra.mxu0 0
    %689 = vmatprep.subr.bf16.mxu0 0
    %690 = vmatpush2.bf16.msra.mxu0 0
    %691 = vmatprep.mubr.bf16.mxu0 0
    %692 = vmatmul.mubr.bf16.gmra.mxu0 %v657
    %v693 = vpop.f32.mrf.mxu0
    %v694 = vadd.f32 0.0, %v693
    %v695 = vpop.f32.mrf.mxu0
    %v696 = vadd.f32 0.0, %v695
    %v697 = vpop.f32.mrf.mxu0
    %v698 = vpop.f32.mrf.mxu0
    %699 = vdwg.mxu0
    %v700 = vld [vmem:[#allocation2 + $0x10] sm:$0xff]
    %v701 = vadd.f32 %v700, %v694
    %v702 = vld [vmem:[#allocation3 + $0x28] sm:$0xff]
    %v703 = vadd.f32 %v702, %v696
    %v704 = vxor.u32 %v701, 2147483648
    %v705 = vmul.f32 %v704, 1.442695
    %v706 = vpow.pop %v705
    %v707 = vadd.f32 %v706, 1.0
    %v708 = vrcp.pop %v707
    %v709 = vmul.f32 1.0, %v708
    %v710 = vtanh.pop %v701
    %v711 = vmul.f32 %v709, %v610
    %713 = vrot.lane.b32.xlu0 %v710, 64
    %v714 = vpop.permute.xlu0 %713
    %v716 = vmul.f32 %v709, %v714
    %718 = vrot.lane.b32.xlu0 %v716, 32
    %v719 = vpop.permute.xlu0 %718
    %v721 = vadd.f32 %v711, %v719
    %v722 = vtanh.pop %v721
    %724 = vrot.lane.b32.xlu0 %v722, 64
    %v725 = vpop.permute.xlu0 %724
    %v727 = vmul.f32 %v709, %v725
    %v728 = vxor.u32 %v703, 2147483648
    %v729 = vmul.f32 %v728, 1.442695
    %v730 = vpow.pop %v729
    %v731 = vadd.f32 %v730, 1.0
    %v732 = vrcp.pop %v731
    %v733 = vmul.f32 1.0, %v732
    %v734 = vtanh.pop %v703
    %v735 = vmul.f32 %v733, %v634
    %737 = vrot.lane.b32.xlu0 %v734, 64
    %v738 = vpop.permute.xlu0 %737
    %v740 = vmul.f32 %v733, %v738
    %742 = vrot.lane.b32.xlu0 %v740, 32
    %v743 = vpop.permute.xlu0 %742
    %v745 = vadd.f32 %v735, %v743
    %v746 = vtanh.pop %v745
    %748 = vrot.lane.b32.xlu0 %v746, 64
    %v749 = vpop.permute.xlu0 %748
    %v751 = vmul.f32 %v733, %v749
    %753 = vrot.lane.b32.xlu0 %v727, 32
    %v754 = vpop.permute.xlu0 %753
    %756 = vst.msk [vmem:[#allocation4 + $0x10] sm:$0xff] %vm202, %v754
    %758 = vrot.lane.b32.xlu0 %v751, 32
    %v759 = vpop.permute.xlu0 %758
    %761 = vst.msk [vmem:[#allocation5 + $0x28] sm:$0xff] %vm202, %v759
    %762 = vrot.lane.b32.xlu0 %v751, 64
    %v763 = vpop.permute.xlu0 %762
    %v765 = vsel %vm202, %v754, %v763
    %v766 = vpack.c.bf16 %v765, %v765
    %v768 = vsel %vm433, %v766, 0
    %770 = vmatprep.subr.bf16.mxu0 0
    %771 = vmatpush1.bf16.msra.mxu0 0
    %772 = vmatprep.subr.bf16.mxu0 0
    %773 = vmatpush1.bf16.msra.mxu0 0
    %774 = vmatprep.subr.bf16.mxu0 0
    %775 = vmatpush1.bf16.msra.mxu0 0
    %776 = vmatprep.subr.bf16.mxu0 0
    %777 = vmatpush1.bf16.msra.mxu0 0
    %778 = vmatprep.subr.bf16.mxu0 %v424
    %779 = vmatpush1.bf16.msra.mxu0 %v423
    %780 = vmatprep.subr.bf16.mxu0 %v422
    %781 = vmatpush1.bf16.msra.mxu0 %v421
    %782 = vmatprep.subr.bf16.mxu0 %v420
    %783 = vmatpush1.bf16.msra.mxu0 %v419
    %784 = vmatprep.subr.bf16.mxu0 %v418
    %785 = vmatpush1.bf16.msra.mxu0 %v417
    %786 = vmatprep.subr.bf16.mxu0 0
    %787 = vmatpush2.bf16.msra.mxu0 0
    %788 = vmatprep.subr.bf16.mxu0 0
    %789 = vmatpush2.bf16.msra.mxu0 0
    %790 = vmatprep.subr.bf16.mxu0 0
    %791 = vmatpush2.bf16.msra.mxu0 0
    %792 = vmatprep.subr.bf16.mxu0 0
    %793 = vmatpush2.bf16.msra.mxu0 0
    %794 = vmatprep.subr.bf16.mxu0 0
    %795 = vmatpush2.bf16.msra.mxu0 0
    %796 = vmatprep.subr.bf16.mxu0 0
    %797 = vmatpush2.bf16.msra.mxu0 0
    %798 = vmatprep.subr.bf16.mxu0 0
    %799 = vmatpush2.bf16.msra.mxu0 0
    %800 = vmatprep.subr.bf16.mxu0 0
    %801 = vmatpush2.bf16.msra.mxu0 0
    %802 = vmatprep.mubr.bf16.mxu0 0
    %803 = vmatmul.mubr.bf16.gmra.mxu0 %v768
    %v804 = vpop.f32.mrf.mxu0
    %v805 = vadd.f32 0.0, %v804
    %v806 = vpop.f32.mrf.mxu0
    %v807 = vadd.f32 0.0, %v806
    %v808 = vpop.f32.mrf.mxu0
    %v809 = vpop.f32.mrf.mxu0
    %810 = vdwg.mxu0
    %v811 = vld [vmem:[#allocation2 + $0x18] sm:$0xff]
    %v812 = vadd.f32 %v811, %v805
    %v813 = vld [vmem:[#allocation3 + $0x20] sm:$0xff]
    %v814 = vadd.f32 %v813, %v807
    %v815 = vxor.u32 %v812, 2147483648
    %v816 = vmul.f32 %v815, 1.442695
    %v817 = vpow.pop %v816
    %v818 = vadd.f32 %v817, 1.0
    %v819 = vrcp.pop %v818
    %v820 = vmul.f32 1.0, %v819
    %v821 = vtanh.pop %v812
    %v822 = vmul.f32 %v820, %v721
    %824 = vrot.lane.b32.xlu0 %v821, 64
    %v825 = vpop.permute.xlu0 %824
    %v827 = vmul.f32 %v820, %v825
    %829 = vrot.lane.b32.xlu0 %v827, 32
    %v830 = vpop.permute.xlu0 %829
    %v832 = vadd.f32 %v822, %v830
    %v833 = vtanh.pop %v832
    %835 = vrot.lane.b32.xlu0 %v833, 64
    %v836 = vpop.permute.xlu0 %835
    %v838 = vmul.f32 %v820, %v836
    %v839 = vxor.u32 %v814, 2147483648
    %v840 = vmul.f32 %v839, 1.442695
    %v841 = vpow.pop %v840
    %v842 = vadd.f32 %v841, 1.0
    %v843 = vrcp.pop %v842
    %v844 = vmul.f32 1.0, %v843
    %v845 = vtanh.pop %v814
    %v846 = vmul.f32 %v844, %v745
    %848 = vrot.lane.b32.xlu0 %v845, 64
    %v849 = vpop.permute.xlu0 %848
    %v851 = vmul.f32 %v844, %v849
    %853 = vrot.lane.b32.xlu0 %v851, 32
    %v854 = vpop.permute.xlu0 %853
    %v856 = vadd.f32 %v846, %v854
    %v857 = vtanh.pop %v856
    %859 = vrot.lane.b32.xlu0 %v857, 64
    %v860 = vpop.permute.xlu0 %859
    %v862 = vmul.f32 %v844, %v860
    %864 = vrot.lane.b32.xlu0 %v838, 32
    %v865 = vpop.permute.xlu0 %864
    %867 = vst.msk [vmem:[#allocation4 + $0x18] sm:$0xff] %vm202, %v865
    %869 = vrot.lane.b32.xlu0 %v862, 32
    %v870 = vpop.permute.xlu0 %869
    %872 = vst.msk [vmem:[#allocation5 + $0x20] sm:$0xff] %vm202, %v870
    %873 = vrot.lane.b32.xlu0 %v862, 64
    %v874 = vpop.permute.xlu0 %873
    %v876 = vsel %vm202, %v865, %v874
    %v877 = vpack.c.bf16 %v876, %v876
    %v879 = vsel %vm433, %v877, 0
    %881 = vmatprep.subr.bf16.mxu0 0
    %882 = vmatpush1.bf16.msra.mxu0 0
    %883 = vmatprep.subr.bf16.mxu0 0
    %884 = vmatpush1.bf16.msra.mxu0 0
    %885 = vmatprep.subr.bf16.mxu0 0
    %886 = vmatpush1.bf16.msra.mxu0 0
    %887 = vmatprep.subr.bf16.mxu0 0
    %888 = vmatpush1.bf16.msra.mxu0 0
    %889 = vmatprep.subr.bf16.mxu0 %v424
    %890 = vmatpush1.bf16.msra.mxu0 %v423
    %891 = vmatprep.subr.bf16.mxu0 %v422
    %892 = vmatpush1.bf16.msra.mxu0 %v421
    %893 = vmatprep.subr.bf16.mxu0 %v420
    %894 = vmatpush1.bf16.msra.mxu0 %v419
    %895 = vmatprep.subr.bf16.mxu0 %v418
    %896 = vmatpush1.bf16.msra.mxu0 %v417
    %897 = vmatprep.subr.bf16.mxu0 0
    %898 = vmatpush2.bf16.msra.mxu0 0
    %899 = vmatprep.subr.bf16.mxu0 0
    %900 = vmatpush2.bf16.msra.mxu0 0
    %901 = vmatprep.subr.bf16.mxu0 0
    %902 = vmatpush2.bf16.msra.mxu0 0
    %903 = vmatprep.subr.bf16.mxu0 0
    %904 = vmatpush2.bf16.msra.mxu0 0
    %905 = vmatprep.subr.bf16.mxu0 0
    %906 = vmatpush2.bf16.msra.mxu0 0
    %907 = vmatprep.subr.bf16.mxu0 0
    %908 = vmatpush2.bf16.msra.mxu0 0
    %909 = vmatprep.subr.bf16.mxu0 0
    %910 = vmatpush2.bf16.msra.mxu0 0
    %911 = vmatprep.subr.bf16.mxu0 0
    %912 = vmatpush2.bf16.msra.mxu0 0
    %913 = vmatprep.mubr.bf16.mxu0 0
    %914 = vmatmul.mubr.bf16.gmra.mxu0 %v879
    %v915 = vpop.f32.mrf.mxu0
    %v916 = vadd.f32 0.0, %v915
    %v917 = vpop.f32.mrf.mxu0
    %v918 = vadd.f32 0.0, %v917
    %v919 = vpop.f32.mrf.mxu0
    %v920 = vpop.f32.mrf.mxu0
    %921 = vdwg.mxu0
    %v922 = vld [vmem:[#allocation2 + $0x20] sm:$0xff]
    %v923 = vadd.f32 %v922, %v916
    %v924 = vld [vmem:[#allocation3 + $0x18] sm:$0xff]
    %v925 = vadd.f32 %v924, %v918
    %v926 = vxor.u32 %v923, 2147483648
    %v927 = vmul.f32 %v926, 1.442695
    %v928 = vpow.pop %v927
    %v929 = vadd.f32 %v928, 1.0
    %v930 = vrcp.pop %v929
    %v931 = vmul.f32 1.0, %v930
    %v932 = vtanh.pop %v923
    %v933 = vmul.f32 %v931, %v832
    %935 = vrot.lane.b32.xlu0 %v932, 64
    %v936 = vpop.permute.xlu0 %935
    %v938 = vmul.f32 %v931, %v936
    %940 = vrot.lane.b32.xlu0 %v938, 32
    %v941 = vpop.permute.xlu0 %940
    %v943 = vadd.f32 %v933, %v941
    %v944 = vtanh.pop %v943
    %946 = vrot.lane.b32.xlu0 %v944, 64
    %v947 = vpop.permute.xlu0 %946
    %v949 = vmul.f32 %v931, %v947
    %v950 = vxor.u32 %v925, 2147483648
    %v951 = vmul.f32 %v950, 1.442695
    %v952 = vpow.pop %v951
    %v953 = vadd.f32 %v952, 1.0
    %v954 = vrcp.pop %v953
    %v955 = vmul.f32 1.0, %v954
    %v956 = vtanh.pop %v925
    %v957 = vmul.f32 %v955, %v856
    %959 = vrot.lane.b32.xlu0 %v956, 64
    %v960 = vpop.permute.xlu0 %959
    %v962 = vmul.f32 %v955, %v960
    %964 = vrot.lane.b32.xlu0 %v962, 32
    %v965 = vpop.permute.xlu0 %964
    %v967 = vadd.f32 %v957, %v965
    %v968 = vtanh.pop %v967
    %970 = vrot.lane.b32.xlu0 %v968, 64
    %v971 = vpop.permute.xlu0 %970
    %v973 = vmul.f32 %v955, %v971
    %975 = vrot.lane.b32.xlu0 %v949, 32
    %v976 = vpop.permute.xlu0 %975
    %978 = vst.msk [vmem:[#allocation4 + $0x20] sm:$0xff] %vm202, %v976
    %980 = vrot.lane.b32.xlu0 %v973, 32
    %v981 = vpop.permute.xlu0 %980
    %983 = vst.msk [vmem:[#allocation5 + $0x18] sm:$0xff] %vm202, %v981
    %984 = vrot.lane.b32.xlu0 %v973, 64
    %v985 = vpop.permute.xlu0 %984
    %v987 = vsel %vm202, %v976, %v985
    %v988 = vpack.c.bf16 %v987, %v987
    %v990 = vsel %vm433, %v988, 0
    %992 = vmatprep.subr.bf16.mxu0 0
    %993 = vmatpush1.bf16.msra.mxu0 0
    %994 = vmatprep.subr.bf16.mxu0 0
    %995 = vmatpush1.bf16.msra.mxu0 0
    %996 = vmatprep.subr.bf16.mxu0 0
    %997 = vmatpush1.bf16.msra.mxu0 0
    %998 = vmatprep.subr.bf16.mxu0 0
    %999 = vmatpush1.bf16.msra.mxu0 0
    %1000 = vmatprep.subr.bf16.mxu0 %v424
    %1001 = vmatpush1.bf16.msra.mxu0 %v423
    %1002 = vmatprep.subr.bf16.mxu0 %v422
    %1003 = vmatpush1.bf16.msra.mxu0 %v421
    %1004 = vmatprep.subr.bf16.mxu0 %v420
    %1005 = vmatpush1.bf16.msra.mxu0 %v419
    %1006 = vmatprep.subr.bf16.mxu0 %v418
    %1007 = vmatpush1.bf16.msra.mxu0 %v417
    %1008 = vmatprep.subr.bf16.mxu0 0
    %1009 = vmatpush2.bf16.msra.mxu0 0
    %1010 = vmatprep.subr.bf16.mxu0 0
    %1011 = vmatpush2.bf16.msra.mxu0 0
    %1012 = vmatprep.subr.bf16.mxu0 0
    %1013 = vmatpush2.bf16.msra.mxu0 0
    %1014 = vmatprep.subr.bf16.mxu0 0
    %1015 = vmatpush2.bf16.msra.mxu0 0
    %1016 = vmatprep.subr.bf16.mxu0 0
    %1017 = vmatpush2.bf16.msra.mxu0 0
    %1018 = vmatprep.subr.bf16.mxu0 0
    %1019 = vmatpush2.bf16.msra.mxu0 0
    %1020 = vmatprep.subr.bf16.mxu0 0
    %1021 = vmatpush2.bf16.msra.mxu0 0
    %1022 = vmatprep.subr.bf16.mxu0 0
    %1023 = vmatpush2.bf16.msra.mxu0 0
    %1024 = vmatprep.mubr.bf16.mxu0 0
    %1025 = vmatmul.mubr.bf16.gmra.mxu0 %v990
    %v1026 = vpop.f32.mrf.mxu0
    %v1027 = vadd.f32 0.0, %v1026
    %v1028 = vpop.f32.mrf.mxu0
    %v1029 = vadd.f32 0.0, %v1028
    %v1030 = vpop.f32.mrf.mxu0
    %v1031 = vpop.f32.mrf.mxu0
    %1032 = vdwg.mxu0
    %v1033 = vld [vmem:[#allocation2 + $0x28] sm:$0xff]
    %v1034 = vadd.f32 %v1033, %v1027
    %v1035 = vld [vmem:[#allocation3 + $0x10] sm:$0xff]
    %v1036 = vadd.f32 %v1035, %v1029
    %v1037 = vxor.u32 %v1034, 2147483648
    %v1038 = vmul.f32 %v1037, 1.442695
    %v1039 = vpow.pop %v1038
    %v1040 = vadd.f32 %v1039, 1.0
    %v1041 = vrcp.pop %v1040
    %v1042 = vmul.f32 1.0, %v1041
    %v1043 = vtanh.pop %v1034
    %v1044 = vmul.f32 %v1042, %v943
    %1046 = vrot.lane.b32.xlu0 %v1043, 64
    %v1047 = vpop.permute.xlu0 %1046
    %v1049 = vmul.f32 %v1042, %v1047
    %1051 = vrot.lane.b32.xlu0 %v1049, 32
    %v1052 = vpop.permute.xlu0 %1051
    %v1054 = vadd.f32 %v1044, %v1052
    %v1055 = vtanh.pop %v1054
    %1057 = vrot.lane.b32.xlu0 %v1055, 64
    %v1058 = vpop.permute.xlu0 %1057
    %v1060 = vmul.f32 %v1042, %v1058
    %v1061 = vxor.u32 %v1036, 2147483648
    %v1062 = vmul.f32 %v1061, 1.442695
    %v1063 = vpow.pop %v1062
    %v1064 = vadd.f32 %v1063, 1.0
    %v1065 = vrcp.pop %v1064
    %v1066 = vmul.f32 1.0, %v1065
    %v1067 = vtanh.pop %v1036
    %v1068 = vmul.f32 %v1066, %v967
    %1070 = vrot.lane.b32.xlu0 %v1067, 64
    %v1071 = vpop.permute.xlu0 %1070
    %v1073 = vmul.f32 %v1066, %v1071
    %1075 = vrot.lane.b32.xlu0 %v1073, 32
    %v1076 = vpop.permute.xlu0 %1075
    %v1078 = vadd.f32 %v1068, %v1076
    %v1079 = vtanh.pop %v1078
    %1081 = vrot.lane.b32.xlu0 %v1079, 64
    %v1082 = vpop.permute.xlu0 %1081
    %v1084 = vmul.f32 %v1066, %v1082
    %1086 = vrot.lane.b32.xlu0 %v1060, 32
    %v1087 = vpop.permute.xlu0 %1086
    %1089 = vst.msk [vmem:[#allocation4 + $0x28] sm:$0xff] %vm202, %v1087
    %1091 = vrot.lane.b32.xlu0 %v1084, 32
    %v1092 = vpop.permute.xlu0 %1091
    %1094 = vst.msk [vmem:[#allocation5 + $0x10] sm:$0xff] %vm202, %v1092
    %1095 = vrot.lane.b32.xlu0 %v1084, 64
    %v1096 = vpop.permute.xlu0 %1095
    %v1098 = vsel %vm202, %v1087, %v1096
    %v1099 = vpack.c.bf16 %v1098, %v1098
    %v1101 = vsel %vm433, %v1099, 0
    %1103 = vmatprep.subr.bf16.mxu0 0
    %1104 = vmatpush1.bf16.msra.mxu0 0
    %1105 = vmatprep.subr.bf16.mxu0 0
    %1106 = vmatpush1.bf16.msra.mxu0 0
    %1107 = vmatprep.subr.bf16.mxu0 0
    %1108 = vmatpush1.bf16.msra.mxu0 0
    %1109 = vmatprep.subr.bf16.mxu0 0
    %1110 = vmatpush1.bf16.msra.mxu0 0
    %1111 = vmatprep.subr.bf16.mxu0 %v424
    %1112 = vmatpush1.bf16.msra.mxu0 %v423
    %1113 = vmatprep.subr.bf16.mxu0 %v422
    %1114 = vmatpush1.bf16.msra.mxu0 %v421
    %1115 = vmatprep.subr.bf16.mxu0 %v420
    %1116 = vmatpush1.bf16.msra.mxu0 %v419
    %1117 = vmatprep.subr.bf16.mxu0 %v418
    %1118 = vmatpush1.bf16.msra.mxu0 %v417
    %1119 = vmatprep.subr.bf16.mxu0 0
    %1120 = vmatpush2.bf16.msra.mxu0 0
    %1121 = vmatprep.subr.bf16.mxu0 0
    %1122 = vmatpush2.bf16.msra.mxu0 0
    %1123 = vmatprep.subr.bf16.mxu0 0
    %1124 = vmatpush2.bf16.msra.mxu0 0
    %1125 = vmatprep.subr.bf16.mxu0 0
    %1126 = vmatpush2.bf16.msra.mxu0 0
    %1127 = vmatprep.subr.bf16.mxu0 0
    %1128 = vmatpush2.bf16.msra.mxu0 0
    %1129 = vmatprep.subr.bf16.mxu0 0
    %1130 = vmatpush2.bf16.msra.mxu0 0
    %1131 = vmatprep.subr.bf16.mxu0 0
    %1132 = vmatpush2.bf16.msra.mxu0 0
    %1133 = vmatprep.subr.bf16.mxu0 0
    %1134 = vmatpush2.bf16.msra.mxu0 0
    %1135 = vmatprep.mubr.bf16.mxu0 0
    %1136 = vmatmul.mubr.bf16.gmra.mxu0 %v1101
    %v1137 = vpop.f32.mrf.mxu0
    %v1138 = vadd.f32 0.0, %v1137
    %v1139 = vpop.f32.mrf.mxu0
    %v1140 = vadd.f32 0.0, %v1139
    %v1141 = vpop.f32.mrf.mxu0
    %v1142 = vpop.f32.mrf.mxu0
    %1143 = vdwg.mxu0
    %v1144 = vld [vmem:[#allocation2 + $0x30] sm:$0xff]
    %v1145 = vadd.f32 %v1144, %v1138
    %v1146 = vld [vmem:[#allocation3 + $0x8] sm:$0xff]
    %v1147 = vadd.f32 %v1146, %v1140
    %v1148 = vxor.u32 %v1145, 2147483648
    %v1149 = vmul.f32 %v1148, 1.442695
    %v1150 = vpow.pop %v1149
    %v1151 = vadd.f32 %v1150, 1.0
    %v1152 = vrcp.pop %v1151
    %v1153 = vmul.f32 1.0, %v1152
    %v1154 = vtanh.pop %v1145
    %v1155 = vmul.f32 %v1153, %v1054
    %1157 = vrot.lane.b32.xlu0 %v1154, 64
    %v1158 = vpop.permute.xlu0 %1157
    %v1160 = vmul.f32 %v1153, %v1158
    %1162 = vrot.lane.b32.xlu0 %v1160, 32
    %v1163 = vpop.permute.xlu0 %1162
    %v1165 = vadd.f32 %v1155, %v1163
    %v1166 = vtanh.pop %v1165
    %1168 = vrot.lane.b32.xlu0 %v1166, 64
    %v1169 = vpop.permute.xlu0 %1168
    %v1171 = vmul.f32 %v1153, %v1169
    %v1172 = vxor.u32 %v1147, 2147483648
    %v1173 = vmul.f32 %v1172, 1.442695
    %v1174 = vpow.pop %v1173
    %v1175 = vadd.f32 %v1174, 1.0
    %v1176 = vrcp.pop %v1175
    %v1177 = vmul.f32 1.0, %v1176
    %v1178 = vtanh.pop %v1147
    %v1179 = vmul.f32 %v1177, %v1078
    %1181 = vrot.lane.b32.xlu0 %v1178, 64
    %v1182 = vpop.permute.xlu0 %1181
    %v1184 = vmul.f32 %v1177, %v1182
    %1186 = vrot.lane.b32.xlu0 %v1184, 32
    %v1187 = vpop.permute.xlu0 %1186
    %v1189 = vadd.f32 %v1179, %v1187
    %v1190 = vtanh.pop %v1189
    %1192 = vrot.lane.b32.xlu0 %v1190, 64
    %v1193 = vpop.permute.xlu0 %1192
    %v1195 = vmul.f32 %v1177, %v1193
    %1197 = vrot.lane.b32.xlu0 %v1171, 32
    %v1198 = vpop.permute.xlu0 %1197
    %1200 = vst.msk [vmem:[#allocation4 + $0x30] sm:$0xff] %vm202, %v1198
    %1202 = vrot.lane.b32.xlu0 %v1195, 32
    %v1203 = vpop.permute.xlu0 %1202
    %1205 = vst.msk [vmem:[#allocation5 + $0x8] sm:$0xff] %vm202, %v1203
    %1206 = vrot.lane.b32.xlu0 %v1195, 64
    %v1207 = vpop.permute.xlu0 %1206
    %v1209 = vsel %vm202, %v1198, %v1207
    %v1210 = vpack.c.bf16 %v1209, %v1209
    %v1212 = vsel %vm433, %v1210, 0
    %1214 = vmatprep.subr.bf16.mxu0 0
    %1215 = vmatpush1.bf16.msra.mxu0 0
    %1216 = vmatprep.subr.bf16.mxu0 0
    %1217 = vmatpush1.bf16.msra.mxu0 0
    %1218 = vmatprep.subr.bf16.mxu0 0
    %1219 = vmatpush1.bf16.msra.mxu0 0
    %1220 = vmatprep.subr.bf16.mxu0 0
    %1221 = vmatpush1.bf16.msra.mxu0 0
    %1222 = vmatprep.subr.bf16.mxu0 %v424
    %1223 = vmatpush1.bf16.msra.mxu0 %v423
    %1224 = vmatprep.subr.bf16.mxu0 %v422
    %1225 = vmatpush1.bf16.msra.mxu0 %v421
    %1226 = vmatprep.subr.bf16.mxu0 %v420
    %1227 = vmatpush1.bf16.msra.mxu0 %v419
    %1228 = vmatprep.subr.bf16.mxu0 %v418
    %1229 = vmatpush1.bf16.msra.mxu0 %v417
    %1230 = vmatprep.subr.bf16.mxu0 0
    %1231 = vmatpush2.bf16.msra.mxu0 0
    %1232 = vmatprep.subr.bf16.mxu0 0
    %1233 = vmatpush2.bf16.msra.mxu0 0
    %1234 = vmatprep.subr.bf16.mxu0 0
    %1235 = vmatpush2.bf16.msra.mxu0 0
    %1236 = vmatprep.subr.bf16.mxu0 0
    %1237 = vmatpush2.bf16.msra.mxu0 0
    %1238 = vmatprep.subr.bf16.mxu0 0
    %1239 = vmatpush2.bf16.msra.mxu0 0
    %1240 = vmatprep.subr.bf16.mxu0 0
    %1241 = vmatpush2.bf16.msra.mxu0 0
    %1242 = vmatprep.subr.bf16.mxu0 0
    %1243 = vmatpush2.bf16.msra.mxu0 0
    %1244 = vmatprep.subr.bf16.mxu0 0
    %1245 = vmatpush2.bf16.msra.mxu0 0
    %1246 = vmatprep.mubr.bf16.mxu0 0
    %1247 = vmatmul.mubr.bf16.gmra.mxu0 %v1212
    %v1248 = vpop.f32.mrf.mxu0
    %v1249 = vadd.f32 0.0, %v1248
    %v1250 = vpop.f32.mrf.mxu0
    %v1251 = vadd.f32 0.0, %v1250
    %v1252 = vpop.f32.mrf.mxu0
    %v1253 = vpop.f32.mrf.mxu0
    %1254 = vdwg.mxu0
    %v1255 = vld [vmem:[#allocation2 + $0x38] sm:$0xff]
    %v1256 = vadd.f32 %v1255, %v1249
    %v1257 = vld [vmem:[#allocation3] sm:$0xff]
    %v1258 = vadd.f32 %v1257, %v1251
    %v1259 = vxor.u32 %v1256, 2147483648
    %v1260 = vmul.f32 %v1259, 1.442695
    %v1261 = vpow.pop %v1260
    %v1262 = vadd.f32 %v1261, 1.0
    %v1263 = vrcp.pop %v1262
    %v1264 = vmul.f32 1.0, %v1263
    %v1265 = vtanh.pop %v1256
    %v1266 = vmul.f32 %v1264, %v1165
    %1268 = vrot.lane.b32.xlu0 %v1265, 64
    %v1269 = vpop.permute.xlu0 %1268
    %v1271 = vmul.f32 %v1264, %v1269
    %1273 = vrot.lane.b32.xlu0 %v1271, 32
    %v1274 = vpop.permute.xlu0 %1273
    %v1276 = vadd.f32 %v1266, %v1274
    %v1277 = vtanh.pop %v1276
    %1279 = vrot.lane.b32.xlu0 %v1277, 64
    %v1280 = vpop.permute.xlu0 %1279
    %v1282 = vmul.f32 %v1264, %v1280
    %v1283 = vxor.u32 %v1258, 2147483648
    %v1284 = vmul.f32 %v1283, 1.442695
    %v1285 = vpow.pop %v1284
    %v1286 = vadd.f32 %v1285, 1.0
    %v1287 = vrcp.pop %v1286
    %v1288 = vmul.f32 1.0, %v1287
    %v1289 = vtanh.pop %v1258
    %v1290 = vmul.f32 %v1288, %v1189
    %1292 = vrot.lane.b32.xlu0 %v1289, 64
    %v1293 = vpop.permute.xlu0 %1292
    %v1295 = vmul.f32 %v1288, %v1293
    %1297 = vrot.lane.b32.xlu0 %v1295, 32
    %v1298 = vpop.permute.xlu0 %1297
    %v1300 = vadd.f32 %v1290, %v1298
    %v1301 = vtanh.pop %v1300
    %1303 = vrot.lane.b32.xlu0 %v1301, 64
    %v1304 = vpop.permute.xlu0 %1303
    %v1306 = vmul.f32 %v1288, %v1304
    %1308 = vrot.lane.b32.xlu0 %v1282, 32
    %v1309 = vpop.permute.xlu0 %1308
    %1311 = vst.msk [vmem:[#allocation4 + $0x38] sm:$0xff] %vm202, %v1309
    %1313 = vrot.lane.b32.xlu0 %v1306, 32
    %v1314 = vpop.permute.xlu0 %1313
    %1316 = vst.msk [vmem:[#allocation5] sm:$0xff] %vm202, %v1314
    %v1317 = vld [vmem:[#allocation4] sm:$0xff]
    %v1318 = vld [vmem:[#allocation4 + $0x8] sm:$0xff]
    %v1319 = vld [vmem:[#allocation4 + $0x10] sm:$0xff]
    %v1320 = vld [vmem:[#allocation4 + $0x18] sm:$0xff]
    %v1321 = vld [vmem:[#allocation4 + $0x20] sm:$0xff]
    %v1322 = vld [vmem:[#allocation4 + $0x28] sm:$0xff]
    %v1323 = vld [vmem:[#allocation4 + $0x30] sm:$0xff]
    %v1324 = vld [vmem:[#allocation4 + $0x38] sm:$0xff]
    %v1325 = vpack.c.bf16 %v1318, %v1317
    %v1326 = vpack.c.bf16 %v1320, %v1319
    %v1327 = vpack.c.bf16 %v1322, %v1321
    %v1328 = vpack.c.bf16 %v1324, %v1323
    %v1329 = vld [vmem:[#allocation5] sm:$0xff]
    %v1330 = vld [vmem:[#allocation5 + $0x8] sm:$0xff]
    %v1331 = vld [vmem:[#allocation5 + $0x10] sm:$0xff]
    %v1332 = vld [vmem:[#allocation5 + $0x18] sm:$0xff]
    %v1333 = vld [vmem:[#allocation5 + $0x20] sm:$0xff]
    %v1334 = vld [vmem:[#allocation5 + $0x28] sm:$0xff]
    %v1335 = vld [vmem:[#allocation5 + $0x30] sm:$0xff]
    %v1336 = vld [vmem:[#allocation5 + $0x38] sm:$0xff]
    %v1337 = vpack.c.bf16 %v1330, %v1329
    %v1338 = vpack.c.bf16 %v1332, %v1331
    %v1339 = vpack.c.bf16 %v1334, %v1333
    %v1340 = vpack.c.bf16 %v1336, %v1335
    %v1341 = vld [vmem:[#allocation12] sm:$0xf]
    %v1342 = vld [vmem:[#allocation12 + $0x4] sm:$0xf]
    %v1343 = vld [vmem:[#allocation12 + $0x8] sm:$0xf]
    %v1344 = vld [vmem:[#allocation12 + $0xc] sm:$0xf]
    %v1345 = vld [vmem:[#allocation12 + $0x10] sm:$0xf]
    %v1346 = vld [vmem:[#allocation12 + $0x14] sm:$0xf]
    %v1347 = vld [vmem:[#allocation12 + $0x18] sm:$0xf]
    %v1348 = vld [vmem:[#allocation12 + $0x1c] sm:$0xf]
    %v1349 = vld [vmem:[#allocation14] sm:$0xf]
    %v1350 = vld [vmem:[#allocation14 + $0x4] sm:$0xf]
    %v1351 = vld [vmem:[#allocation14 + $0x8] sm:$0xf]
    %v1352 = vld [vmem:[#allocation14 + $0xc] sm:$0xf]
    %v1353 = vld [vmem:[#allocation14 + $0x10] sm:$0xf]
    %v1354 = vld [vmem:[#allocation14 + $0x14] sm:$0xf]
    %v1355 = vld [vmem:[#allocation14 + $0x18] sm:$0xf]
    %v1356 = vld [vmem:[#allocation14 + $0x1c] sm:$0xf]
    %v1361 = vunpack.c.l.b16 %v1345
    %v1362 = vunpack.c.l.b16 %v1346
    %v1363 = vunpack.c.l.b16 %v1347
    %v1364 = vunpack.c.l.b16 %v1348
    %v1365 = vpack.c.b16 %v1362, %v1361
    %v1366 = vpack.c.b16 %v1364, %v1363
    %v1370 = vsel %vm202, %v1337, 0
    %v1373 = vsel %vm202, %v1338, 0
    %v1376 = vsel %vm202, %v1339, 0
    %v1379 = vsel %vm202, %v1340, 0
    %1381 = vmatprep.subr.bf16.mxu0 0
    %1382 = vmatpush1.bf16.msra.mxu0 0
    %1383 = vmatprep.subr.bf16.mxu0 0
    %1384 = vmatpush1.bf16.msra.mxu0 0
    %1385 = vmatprep.subr.bf16.mxu0 0
    %1386 = vmatpush1.bf16.msra.mxu0 0
    %1387 = vmatprep.subr.bf16.mxu0 0
    %1388 = vmatpush1.bf16.msra.mxu0 0
    %1389 = vmatprep.subr.bf16.mxu0 0
    %1390 = vmatpush1.bf16.msra.mxu0 0
    %1391 = vmatprep.subr.bf16.mxu0 0
    %1392 = vmatpush1.bf16.msra.mxu0 0
    %1393 = vmatprep.subr.bf16.mxu0 0
    %1394 = vmatpush1.bf16.msra.mxu0 %v1366
    %1395 = vmatprep.subr.bf16.mxu0 0
    %1396 = vmatpush1.bf16.msra.mxu0 %v1365
    %1397 = vmatprep.subr.bf16.mxu0 0
    %1398 = vmatpush2.bf16.msra.mxu0 0
    %1399 = vmatprep.subr.bf16.mxu0 0
    %1400 = vmatpush2.bf16.msra.mxu0 0
    %1401 = vmatprep.subr.bf16.mxu0 0
    %1402 = vmatpush2.bf16.msra.mxu0 0
    %1403 = vmatprep.subr.bf16.mxu0 0
    %1404 = vmatpush2.bf16.msra.mxu0 0
    %1405 = vmatprep.subr.bf16.mxu0 0
    %1406 = vmatpush2.bf16.msra.mxu0 0
    %1407 = vmatprep.subr.bf16.mxu0 0
    %1408 = vmatpush2.bf16.msra.mxu0 0
    %1409 = vmatprep.subr.bf16.mxu0 0
    %1410 = vmatpush2.bf16.msra.mxu0 0
    %1411 = vmatprep.subr.bf16.mxu0 0
    %1412 = vmatpush2.bf16.msra.mxu0 0
    %1413 = vmatprep.mubr.bf16.mxu0 0
    %1414 = vmatmul.mubr.bf16.gmra.mxu0 %v1370
    %v1415 = vpop.f32.mrf.mxu0
    %v1416 = vadd.f32 0.0, %v1415
    %v1417 = vpop.f32.mrf.mxu0
    %v1418 = vpop.f32.mrf.mxu0
    %v1419 = vadd.f32 0.0, %v1418
    %v1420 = vpop.f32.mrf.mxu0
    %1421 = vmatprep.mubr.bf16.mxu0 0
    %1422 = vmatmul.mubr.bf16.gmra.mxu0 %v1373
    %v1423 = vpop.f32.mrf.mxu0
    %v1424 = vadd.f32 0.0, %v1423
    %v1425 = vpop.f32.mrf.mxu0
    %v1426 = vpop.f32.mrf.mxu0
    %v1427 = vadd.f32 0.0, %v1426
    %v1428 = vpop.f32.mrf.mxu0
    %1429 = vmatprep.mubr.bf16.mxu0 0
    %1430 = vmatmul.mubr.bf16.gmra.mxu0 %v1376
    %v1431 = vpop.f32.mrf.mxu0
    %v1432 = vadd.f32 0.0, %v1431
    %v1433 = vpop.f32.mrf.mxu0
    %v1434 = vpop.f32.mrf.mxu0
    %v1435 = vadd.f32 0.0, %v1434
    %v1436 = vpop.f32.mrf.mxu0
    %1437 = vmatprep.mubr.bf16.mxu0 0
    %1438 = vmatmul.mubr.bf16.gmra.mxu0 %v1379
    %v1439 = vpop.f32.mrf.mxu0
    %v1440 = vadd.f32 0.0, %v1439
    %v1441 = vpop.f32.mrf.mxu0
    %v1442 = vpop.f32.mrf.mxu0
    %v1443 = vadd.f32 0.0, %v1442
    %v1444 = vpop.f32.mrf.mxu0
    %1445 = vdwg.mxu0
    %v1450 = vunpack.c.l.b16 %v1341
    %v1451 = vunpack.c.l.b16 %v1342
    %v1452 = vunpack.c.l.b16 %v1343
    %v1453 = vunpack.c.l.b16 %v1344
    %v1454 = vpack.c.b16 %v1451, %v1450
    %v1455 = vpack.c.b16 %v1453, %v1452
    %v1459 = vsel %vm202, %v1325, 0
    %v1462 = vsel %vm202, %v1326, 0
    %v1465 = vsel %vm202, %v1327, 0
    %v1468 = vsel %vm202, %v1328, 0
    %1470 = vmatprep.subr.bf16.mxu0 0
    %1471 = vmatpush1.bf16.msra.mxu0 0
    %1472 = vmatprep.subr.bf16.mxu0 0
    %1473 = vmatpush1.bf16.msra.mxu0 0
    %1474 = vmatprep.subr.bf16.mxu0 0
    %1475 = vmatpush1.bf16.msra.mxu0 0
    %1476 = vmatprep.subr.bf16.mxu0 0
    %1477 = vmatpush1.bf16.msra.mxu0 0
    %1478 = vmatprep.subr.bf16.mxu0 0
    %1479 = vmatpush1.bf16.msra.mxu0 0
    %1480 = vmatprep.subr.bf16.mxu0 0
    %1481 = vmatpush1.bf16.msra.mxu0 0
    %1482 = vmatprep.subr.bf16.mxu0 0
    %1483 = vmatpush1.bf16.msra.mxu0 %v1455
    %1484 = vmatprep.subr.bf16.mxu0 0
    %1485 = vmatpush1.bf16.msra.mxu0 %v1454
    %1486 = vmatprep.subr.bf16.mxu0 0
    %1487 = vmatpush2.bf16.msra.mxu0 0
    %1488 = vmatprep.subr.bf16.mxu0 0
    %1489 = vmatpush2.bf16.msra.mxu0 0
    %1490 = vmatprep.subr.bf16.mxu0 0
    %1491 = vmatpush2.bf16.msra.mxu0 0
    %1492 = vmatprep.subr.bf16.mxu0 0
    %1493 = vmatpush2.bf16.msra.mxu0 0
    %1494 = vmatprep.subr.bf16.mxu0 0
    %1495 = vmatpush2.bf16.msra.mxu0 0
    %1496 = vmatprep.subr.bf16.mxu0 0
    %1497 = vmatpush2.bf16.msra.mxu0 0
    %1498 = vmatprep.subr.bf16.mxu0 0
    %1499 = vmatpush2.bf16.msra.mxu0 0
    %1500 = vmatprep.subr.bf16.mxu0 0
    %1501 = vmatpush2.bf16.msra.mxu0 0
    %1502 = vmatprep.mubr.bf16.mxu0 0
    %1503 = vmatmul.mubr.bf16.gmra.mxu0 %v1459
    %v1504 = vpop.f32.mrf.mxu0
    %v1505 = vadd.f32 %v1416, %v1504
    %v1506 = vpop.f32.mrf.mxu0
    %v1507 = vpop.f32.mrf.mxu0
    %v1508 = vadd.f32 %v1419, %v1507
    %v1509 = vpop.f32.mrf.mxu0
    %1510 = vmatprep.mubr.bf16.mxu0 0
    %1511 = vmatmul.mubr.bf16.gmra.mxu0 %v1462
    %v1512 = vpop.f32.mrf.mxu0
    %v1513 = vadd.f32 %v1424, %v1512
    %v1514 = vpop.f32.mrf.mxu0
    %v1515 = vpop.f32.mrf.mxu0
    %v1516 = vadd.f32 %v1427, %v1515
    %v1517 = vpop.f32.mrf.mxu0
    %1518 = vmatprep.mubr.bf16.mxu0 0
    %1519 = vmatmul.mubr.bf16.gmra.mxu0 %v1465
    %v1520 = vpop.f32.mrf.mxu0
    %v1521 = vadd.f32 %v1432, %v1520
    %v1522 = vpop.f32.mrf.mxu0
    %v1523 = vpop.f32.mrf.mxu0
    %v1524 = vadd.f32 %v1435, %v1523
    %v1525 = vpop.f32.mrf.mxu0
    %1526 = vmatprep.mubr.bf16.mxu0 0
    %1527 = vmatmul.mubr.bf16.gmra.mxu0 %v1468
    %v1528 = vpop.f32.mrf.mxu0
    %v1529 = vadd.f32 %v1440, %v1528
    %v1530 = vpop.f32.mrf.mxu0
    %v1531 = vpop.f32.mrf.mxu0
    %v1532 = vadd.f32 %v1443, %v1531
    %v1533 = vpop.f32.mrf.mxu0
    %1534 = vdwg.mxu0
    %v1535 = vld [vmem:[#allocation15] sm:$0x1]
    %v1537 = vlaneseq
    %v1538 = vshrl.u32 %v1537, 7
    %v1539 = vsub.s32 0, %v1538
    %v1540 = vrot.slane %v1535, %v1539
    %v1542 = vadd.f32 %v1505, %v1540
    %v1543 = vadd.f32 %v1508, %v1540
    %v1544 = vadd.f32 %v1513, %v1540
    %v1545 = vadd.f32 %v1516, %v1540
    %v1546 = vadd.f32 %v1521, %v1540
    %v1547 = vadd.f32 %v1524, %v1540
    %v1548 = vadd.f32 %v1529, %v1540
    %v1549 = vadd.f32 %v1532, %v1540
    %v1554 = vunpack.c.l.b16 %v1353
    %v1555 = vunpack.c.l.b16 %v1354
    %v1556 = vunpack.c.l.b16 %v1355
    %v1557 = vunpack.c.l.b16 %v1356
    %v1558 = vpack.c.b16 %v1555, %v1554
    %v1559 = vpack.c.b16 %v1557, %v1556
    %1562 = vmatprep.subr.bf16.mxu0 0
    %1563 = vmatpush1.bf16.msra.mxu0 0
    %1564 = vmatprep.subr.bf16.mxu0 0
    %1565 = vmatpush1.bf16.msra.mxu0 0
    %1566 = vmatprep.subr.bf16.mxu0 0
    %1567 = vmatpush1.bf16.msra.mxu0 0
    %1568 = vmatprep.subr.bf16.mxu0 0
    %1569 = vmatpush1.bf16.msra.mxu0 0
    %1570 = vmatprep.subr.bf16.mxu0 0
    %1571 = vmatpush1.bf16.msra.mxu0 0
    %1572 = vmatprep.subr.bf16.mxu0 0
    %1573 = vmatpush1.bf16.msra.mxu0 0
    %1574 = vmatprep.subr.bf16.mxu0 0
    %1575 = vmatpush1.bf16.msra.mxu0 %v1559
    %1576 = vmatprep.subr.bf16.mxu0 0
    %1577 = vmatpush1.bf16.msra.mxu0 %v1558
    %1578 = vmatprep.subr.bf16.mxu0 0
    %1579 = vmatpush2.bf16.msra.mxu0 0
    %1580 = vmatprep.subr.bf16.mxu0 0
    %1581 = vmatpush2.bf16.msra.mxu0 0
    %1582 = vmatprep.subr.bf16.mxu0 0
    %1583 = vmatpush2.bf16.msra.mxu0 0
    %1584 = vmatprep.subr.bf16.mxu0 0
    %1585 = vmatpush2.bf16.msra.mxu0 0
    %1586 = vmatprep.subr.bf16.mxu0 0
    %1587 = vmatpush2.bf16.msra.mxu0 0
    %1588 = vmatprep.subr.bf16.mxu0 0
    %1589 = vmatpush2.bf16.msra.mxu0 0
    %1590 = vmatprep.subr.bf16.mxu0 0
    %1591 = vmatpush2.bf16.msra.mxu0 0
    %1592 = vmatprep.subr.bf16.mxu0 0
    %1593 = vmatpush2.bf16.msra.mxu0 0
    %1594 = vmatprep.mubr.bf16.mxu0 0
    %1595 = vmatmul.mubr.bf16.gmra.mxu0 %v1370
    %v1596 = vpop.f32.mrf.mxu0
    %v1597 = vadd.f32 0.0, %v1596
    %v1598 = vpop.f32.mrf.mxu0
    %v1599 = vpop.f32.mrf.mxu0
    %v1600 = vadd.f32 0.0, %v1599
    %v1601 = vpop.f32.mrf.mxu0
    %1602 = vmatprep.mubr.bf16.mxu0 0
    %1603 = vmatmul.mubr.bf16.gmra.mxu0 %v1373
    %v1604 = vpop.f32.mrf.mxu0
    %v1605 = vadd.f32 0.0, %v1604
    %v1606 = vpop.f32.mrf.mxu0
    %v1607 = vpop.f32.mrf.mxu0
    %v1608 = vadd.f32 0.0, %v1607
    %v1609 = vpop.f32.mrf.mxu0
    %1610 = vmatprep.mubr.bf16.mxu0 0
    %1611 = vmatmul.mubr.bf16.gmra.mxu0 %v1376
    %v1612 = vpop.f32.mrf.mxu0
    %v1613 = vadd.f32 0.0, %v1612
    %v1614 = vpop.f32.mrf.mxu0
    %v1615 = vpop.f32.mrf.mxu0
    %v1616 = vadd.f32 0.0, %v1615
    %v1617 = vpop.f32.mrf.mxu0
    %1618 = vmatprep.mubr.bf16.mxu0 0
    %1619 = vmatmul.mubr.bf16.gmra.mxu0 %v1379
    %v1620 = vpop.f32.mrf.mxu0
    %v1621 = vadd.f32 0.0, %v1620
    %v1622 = vpop.f32.mrf.mxu0
    %v1623 = vpop.f32.mrf.mxu0
    %v1624 = vadd.f32 0.0, %v1623
    %v1625 = vpop.f32.mrf.mxu0
    %1626 = vdwg.mxu0
    %v1631 = vunpack.c.l.b16 %v1349
    %v1632 = vunpack.c.l.b16 %v1350
    %v1633 = vunpack.c.l.b16 %v1351
    %v1634 = vunpack.c.l.b16 %v1352
    %v1635 = vpack.c.b16 %v1632, %v1631
    %v1636 = vpack.c.b16 %v1634, %v1633
    %1639 = vmatprep.subr.bf16.mxu0 0
    %1640 = vmatpush1.bf16.msra.mxu0 0
    %1641 = vmatprep.subr.bf16.mxu0 0
    %1642 = vmatpush1.bf16.msra.mxu0 0
    %1643 = vmatprep.subr.bf16.mxu0 0
    %1644 = vmatpush1.bf16.msra.mxu0 0
    %1645 = vmatprep.subr.bf16.mxu0 0
    %1646 = vmatpush1.bf16.msra.mxu0 0
    %1647 = vmatprep.subr.bf16.mxu0 0
    %1648 = vmatpush1.bf16.msra.mxu0 0
    %1649 = vmatprep.subr.bf16.mxu0 0
    %1650 = vmatpush1.bf16.msra.mxu0 0
    %1651 = vmatprep.subr.bf16.mxu0 0
    %1652 = vmatpush1.bf16.msra.mxu0 %v1636
    %1653 = vmatprep.subr.bf16.mxu0 0
    %1654 = vmatpush1.bf16.msra.mxu0 %v1635
    %1655 = vmatprep.subr.bf16.mxu0 0
    %1656 = vmatpush2.bf16.msra.mxu0 0
    %1657 = vmatprep.subr.bf16.mxu0 0
    %1658 = vmatpush2.bf16.msra.mxu0 0
    %1659 = vmatprep.subr.bf16.mxu0 0
    %1660 = vmatpush2.bf16.msra.mxu0 0
    %1661 = vmatprep.subr.bf16.mxu0 0
    %1662 = vmatpush2.bf16.msra.mxu0 0
    %1663 = vmatprep.subr.bf16.mxu0 0
    %1664 = vmatpush2.bf16.msra.mxu0 0
    %1665 = vmatprep.subr.bf16.mxu0 0
    %1666 = vmatpush2.bf16.msra.mxu0 0
    %1667 = vmatprep.subr.bf16.mxu0 0
    %1668 = vmatpush2.bf16.msra.mxu0 0
    %1669 = vmatprep.subr.bf16.mxu0 0
    %1670 = vmatpush2.bf16.msra.mxu0 0
    %1671 = vmatprep.mubr.bf16.mxu0 0
    %1672 = vmatmul.mubr.bf16.gmra.mxu0 %v1459
    %v1673 = vpop.f32.mrf.mxu0
    %v1674 = vadd.f32 %v1597, %v1673
    %v1675 = vpop.f32.mrf.mxu0
    %v1676 = vpop.f32.mrf.mxu0
    %v1677 = vadd.f32 %v1600, %v1676
    %v1678 = vpop.f32.mrf.mxu0
    %1679 = vmatprep.mubr.bf16.mxu0 0
    %1680 = vmatmul.mubr.bf16.gmra.mxu0 %v1462
    %v1681 = vpop.f32.mrf.mxu0
    %v1682 = vadd.f32 %v1605, %v1681
    %v1683 = vpop.f32.mrf.mxu0
    %v1684 = vpop.f32.mrf.mxu0
    %v1685 = vadd.f32 %v1608, %v1684
    %v1686 = vpop.f32.mrf.mxu0
    %1687 = vmatprep.mubr.bf16.mxu0 0
    %1688 = vmatmul.mubr.bf16.gmra.mxu0 %v1465
    %v1689 = vpop.f32.mrf.mxu0
    %v1690 = vadd.f32 %v1613, %v1689
    %v1691 = vpop.f32.mrf.mxu0
    %v1692 = vpop.f32.mrf.mxu0
    %v1693 = vadd.f32 %v1616, %v1692
    %v1694 = vpop.f32.mrf.mxu0
    %1695 = vmatprep.mubr.bf16.mxu0 0
    %1696 = vmatmul.mubr.bf16.gmra.mxu0 %v1468
    %v1697 = vpop.f32.mrf.mxu0
    %v1698 = vadd.f32 %v1621, %v1697
    %v1699 = vpop.f32.mrf.mxu0
    %v1700 = vpop.f32.mrf.mxu0
    %v1701 = vadd.f32 %v1624, %v1700
    %v1702 = vpop.f32.mrf.mxu0
    %1703 = vdwg.mxu0
    %v1704 = vld [vmem:[#allocation17] sm:$0x1]
    %v1706 = vlaneseq
    %v1707 = vshrl.u32 %v1706, 7
    %v1708 = vsub.s32 0, %v1707
    %v1709 = vrot.slane %v1704, %v1708
    %v1711 = vadd.f32 %v1674, %v1709
    %v1712 = vadd.f32 %v1677, %v1709
    %v1713 = vadd.f32 %v1682, %v1709
    %v1714 = vadd.f32 %v1685, %v1709
    %v1715 = vadd.f32 %v1690, %v1709
    %v1716 = vadd.f32 %v1693, %v1709
    %v1717 = vadd.f32 %v1698, %v1709
    %v1718 = vadd.f32 %v1701, %v1709
    %1719 = vst [vmem:[#allocation2] sm:$0xff] %v1542
    %1720 = vst [vmem:[#allocation2 + $0x8] sm:$0xff] %v1543
    %1721 = vst [vmem:[#allocation2 + $0x10] sm:$0xff] %v1544
    %1722 = vst [vmem:[#allocation2 + $0x18] sm:$0xff] %v1545
    %1723 = vst [vmem:[#allocation2 + $0x20] sm:$0xff] %v1546
    %1724 = vst [vmem:[#allocation2 + $0x28] sm:$0xff] %v1547
    %1725 = vst [vmem:[#allocation2 + $0x30] sm:$0xff] %v1548
    %1726 = vst [vmem:[#allocation2 + $0x38] sm:$0xff] %v1549
    %1727 = vst [vmem:[#allocation3] sm:$0xff] %v1711
    %1728 = vst [vmem:[#allocation3 + $0x8] sm:$0xff] %v1712
    %1729 = vst [vmem:[#allocation3 + $0x10] sm:$0xff] %v1713
    %1730 = vst [vmem:[#allocation3 + $0x18] sm:$0xff] %v1714
    %1731 = vst [vmem:[#allocation3 + $0x20] sm:$0xff] %v1715
    %1732 = vst [vmem:[#allocation3 + $0x28] sm:$0xff] %v1716
    %1733 = vst [vmem:[#allocation3 + $0x30] sm:$0xff] %v1717
    %1734 = vst [vmem:[#allocation3 + $0x38] sm:$0xff] %v1718
    %v1735 = vld [vmem:[%s10] sm:$0xff]
    %v1736 = vld [vmem:[%s10 + $0x8] sm:$0xff]
    %v1737 = vld [vmem:[%s10 + $0x10] sm:$0xff]
    %v1738 = vld [vmem:[%s10 + $0x18] sm:$0xff]
    %v1739 = vld [vmem:[%s10 + $0x20] sm:$0xff]
    %v1740 = vld [vmem:[%s10 + $0x28] sm:$0xff]
    %v1741 = vld [vmem:[%s10 + $0x30] sm:$0xff]
    %v1742 = vld [vmem:[%s10 + $0x38] sm:$0xff]
    %v1751 = vunpack.c.l.b16 %v1735
    %v1752 = vunpack.c.h.b16 %v1735
    %v1753 = vunpack.c.l.b16 %v1736
    %v1754 = vunpack.c.h.b16 %v1736
    %v1755 = vunpack.c.l.b16 %v1737
    %v1756 = vunpack.c.h.b16 %v1737
    %v1757 = vunpack.c.l.b16 %v1738
    %v1758 = vunpack.c.h.b16 %v1738
    %v1759 = vunpack.c.l.b16 %v1739
    %v1760 = vunpack.c.h.b16 %v1739
    %v1761 = vunpack.c.l.b16 %v1740
    %v1762 = vunpack.c.h.b16 %v1740
    %v1763 = vunpack.c.l.b16 %v1741
    %v1764 = vunpack.c.h.b16 %v1741
    %v1765 = vunpack.c.l.b16 %v1742
    %v1766 = vunpack.c.h.b16 %v1742
    %v1767 = vpack.c.b16 %v1753, %v1751
    %v1768 = vpack.c.b16 %v1754, %v1752
    %v1769 = vpack.c.b16 %v1757, %v1755
    %v1770 = vpack.c.b16 %v1758, %v1756
    %v1771 = vpack.c.b16 %v1761, %v1759
    %v1772 = vpack.c.b16 %v1762, %v1760
    %v1773 = vpack.c.b16 %v1765, %v1763
    %v1774 = vpack.c.b16 %v1766, %v1764
    %1783 = vmatprep.subr.bf16.mxu0 0
    %1784 = vmatpush1.bf16.msra.mxu0 0
    %1785 = vmatprep.subr.bf16.mxu0 0
    %1786 = vmatpush1.bf16.msra.mxu0 0
    %1787 = vmatprep.subr.bf16.mxu0 0
    %1788 = vmatpush1.bf16.msra.mxu0 0
    %1789 = vmatprep.subr.bf16.mxu0 0
    %1790 = vmatpush1.bf16.msra.mxu0 0
    %1791 = vmatprep.subr.bf16.mxu0 %v1774
    %1792 = vmatpush1.bf16.msra.mxu0 %v1773
    %1793 = vmatprep.subr.bf16.mxu0 %v1772
    %1794 = vmatpush1.bf16.msra.mxu0 %v1771
    %1795 = vmatprep.subr.bf16.mxu0 %v1770
    %1796 = vmatpush1.bf16.msra.mxu0 %v1769
    %1797 = vmatprep.subr.bf16.mxu0 %v1768
    %1798 = vmatpush1.bf16.msra.mxu0 %v1767
    %1799 = vmatprep.subr.bf16.mxu0 0
    %1800 = vmatpush2.bf16.msra.mxu0 0
    %1801 = vmatprep.subr.bf16.mxu0 0
    %1802 = vmatpush2.bf16.msra.mxu0 0
    %1803 = vmatprep.subr.bf16.mxu0 0
    %1804 = vmatpush2.bf16.msra.mxu0 0
    %1805 = vmatprep.subr.bf16.mxu0 0
    %1806 = vmatpush2.bf16.msra.mxu0 0
    %1807 = vmatprep.subr.bf16.mxu0 0
    %1808 = vmatpush2.bf16.msra.mxu0 0
    %1809 = vmatprep.subr.bf16.mxu0 0
    %1810 = vmatpush2.bf16.msra.mxu0 0
    %1811 = vmatprep.subr.bf16.mxu0 0
    %1812 = vmatpush2.bf16.msra.mxu0 0
    %1813 = vmatprep.subr.bf16.mxu0 0
    %1814 = vmatpush2.bf16.msra.mxu0 0
    %1815 = vmatprep.mubr.bf16.mxu0 0
    %1816 = vmatmul.mubr.bf16.gmra.mxu0 %v435
    %v1817 = vpop.f32.mrf.mxu0
    %v1818 = vadd.f32 0.0, %v1817
    %v1819 = vpop.f32.mrf.mxu0
    %v1820 = vadd.f32 0.0, %v1819
    %v1821 = vpop.f32.mrf.mxu0
    %v1822 = vpop.f32.mrf.mxu0
    %1823 = vdwg.mxu0
    %v1824 = vld [vmem:[#allocation2] sm:$0xff]
    %v1825 = vadd.f32 %v1824, %v1818
    %v1826 = vld [vmem:[#allocation3 + $0x38] sm:$0xff]
    %v1827 = vadd.f32 %v1826, %v1820
    %v1828 = vxor.u32 %v1825, 2147483648
    %v1829 = vmul.f32 %v1828, 1.442695
    %v1830 = vpow.pop %v1829
    %v1831 = vadd.f32 %v1830, 1.0
    %v1832 = vrcp.pop %v1831
    %v1833 = vmul.f32 1.0, %v1832
    %v1834 = vtanh.pop %v1825
    %v1835 = vmul.f32 %v1833, 0.0
    %1837 = vrot.lane.b32.xlu0 %v1834, 64
    %v1838 = vpop.permute.xlu0 %1837
    %v1840 = vmul.f32 %v1833, %v1838
    %1842 = vrot.lane.b32.xlu0 %v1840, 32
    %v1843 = vpop.permute.xlu0 %1842
    %v1845 = vadd.f32 %v1835, %v1843
    %v1846 = vtanh.pop %v1845
    %1848 = vrot.lane.b32.xlu0 %v1846, 64
    %v1849 = vpop.permute.xlu0 %1848
    %v1851 = vmul.f32 %v1833, %v1849
    %v1852 = vxor.u32 %v1827, 2147483648
    %v1853 = vmul.f32 %v1852, 1.442695
    %v1854 = vpow.pop %v1853
    %v1855 = vadd.f32 %v1854, 1.0
    %v1856 = vrcp.pop %v1855
    %v1857 = vmul.f32 1.0, %v1856
    %v1858 = vtanh.pop %v1827
    %v1859 = vmul.f32 %v1857, 0.0
    %1861 = vrot.lane.b32.xlu0 %v1858, 64
    %v1862 = vpop.permute.xlu0 %1861
    %v1864 = vmul.f32 %v1857, %v1862
    %1866 = vrot.lane.b32.xlu0 %v1864, 32
    %v1867 = vpop.permute.xlu0 %1866
    %v1869 = vadd.f32 %v1859, %v1867
    %v1870 = vtanh.pop %v1869
    %1872 = vrot.lane.b32.xlu0 %v1870, 64
    %v1873 = vpop.permute.xlu0 %1872
    %v1875 = vmul.f32 %v1857, %v1873
    %1877 = vrot.lane.b32.xlu0 %v1851, 32
    %v1878 = vpop.permute.xlu0 %1877
    %1880 = vst.msk [vmem:[#allocation4] sm:$0xff] %vm202, %v1878
    %1882 = vrot.lane.b32.xlu0 %v1875, 32
    %v1883 = vpop.permute.xlu0 %1882
    %1885 = vst.msk [vmem:[#allocation5 + $0x38] sm:$0xff] %vm202, %v1883
    %1886 = vrot.lane.b32.xlu0 %v1875, 64
    %v1887 = vpop.permute.xlu0 %1886
    %v1889 = vsel %vm202, %v1878, %v1887
    %v1890 = vpack.c.bf16 %v1889, %v1889
    %v1892 = vsel %vm433, %v1890, 0
    %1894 = vmatprep.subr.bf16.mxu0 0
    %1895 = vmatpush1.bf16.msra.mxu0 0
    %1896 = vmatprep.subr.bf16.mxu0 0
    %1897 = vmatpush1.bf16.msra.mxu0 0
    %1898 = vmatprep.subr.bf16.mxu0 0
    %1899 = vmatpush1.bf16.msra.mxu0 0
    %1900 = vmatprep.subr.bf16.mxu0 0
    %1901 = vmatpush1.bf16.msra.mxu0 0
    %1902 = vmatprep.subr.bf16.mxu0 %v1774
    %1903 = vmatpush1.bf16.msra.mxu0 %v1773
    %1904 = vmatprep.subr.bf16.mxu0 %v1772
    %1905 = vmatpush1.bf16.msra.mxu0 %v1771
    %1906 = vmatprep.subr.bf16.mxu0 %v1770
    %1907 = vmatpush1.bf16.msra.mxu0 %v1769
    %1908 = vmatprep.subr.bf16.mxu0 %v1768
    %1909 = vmatpush1.bf16.msra.mxu0 %v1767
    %1910 = vmatprep.subr.bf16.mxu0 0
    %1911 = vmatpush2.bf16.msra.mxu0 0
    %1912 = vmatprep.subr.bf16.mxu0 0
    %1913 = vmatpush2.bf16.msra.mxu0 0
    %1914 = vmatprep.subr.bf16.mxu0 0
    %1915 = vmatpush2.bf16.msra.mxu0 0
    %1916 = vmatprep.subr.bf16.mxu0 0
    %1917 = vmatpush2.bf16.msra.mxu0 0
    %1918 = vmatprep.subr.bf16.mxu0 0
    %1919 = vmatpush2.bf16.msra.mxu0 0
    %1920 = vmatprep.subr.bf16.mxu0 0
    %1921 = vmatpush2.bf16.msra.mxu0 0
    %1922 = vmatprep.subr.bf16.mxu0 0
    %1923 = vmatpush2.bf16.msra.mxu0 0
    %1924 = vmatprep.subr.bf16.mxu0 0
    %1925 = vmatpush2.bf16.msra.mxu0 0
    %1926 = vmatprep.mubr.bf16.mxu0 0
    %1927 = vmatmul.mubr.bf16.gmra.mxu0 %v1892
    %v1928 = vpop.f32.mrf.mxu0
    %v1929 = vadd.f32 0.0, %v1928
    %v1930 = vpop.f32.mrf.mxu0
    %v1931 = vadd.f32 0.0, %v1930
    %v1932 = vpop.f32.mrf.mxu0
    %v1933 = vpop.f32.mrf.mxu0
    %1934 = vdwg.mxu0
    %v1935 = vld [vmem:[#allocation2 + $0x8] sm:$0xff]
    %v1936 = vadd.f32 %v1935, %v1929
    %v1937 = vld [vmem:[#allocation3 + $0x30] sm:$0xff]
    %v1938 = vadd.f32 %v1937, %v1931
    %v1939 = vxor.u32 %v1936, 2147483648
    %v1940 = vmul.f32 %v1939, 1.442695
    %v1941 = vpow.pop %v1940
    %v1942 = vadd.f32 %v1941, 1.0
    %v1943 = vrcp.pop %v1942
    %v1944 = vmul.f32 1.0, %v1943
    %v1945 = vtanh.pop %v1936
    %v1946 = vmul.f32 %v1944, %v1845
    %1948 = vrot.lane.b32.xlu0 %v1945, 64
    %v1949 = vpop.permute.xlu0 %1948
    %v1951 = vmul.f32 %v1944, %v1949
    %1953 = vrot.lane.b32.xlu0 %v1951, 32
    %v1954 = vpop.permute.xlu0 %1953
    %v1956 = vadd.f32 %v1946, %v1954
    %v1957 = vtanh.pop %v1956
    %1959 = vrot.lane.b32.xlu0 %v1957, 64
    %v1960 = vpop.permute.xlu0 %1959
    %v1962 = vmul.f32 %v1944, %v1960
    %v1963 = vxor.u32 %v1938, 2147483648
    %v1964 = vmul.f32 %v1963, 1.442695
    %v1965 = vpow.pop %v1964
    %v1966 = vadd.f32 %v1965, 1.0
    %v1967 = vrcp.pop %v1966
    %v1968 = vmul.f32 1.0, %v1967
    %v1969 = vtanh.pop %v1938
    %v1970 = vmul.f32 %v1968, %v1869
    %1972 = vrot.lane.b32.xlu0 %v1969, 64
    %v1973 = vpop.permute.xlu0 %1972
    %v1975 = vmul.f32 %v1968, %v1973
    %1977 = vrot.lane.b32.xlu0 %v1975, 32
    %v1978 = vpop.permute.xlu0 %1977
    %v1980 = vadd.f32 %v1970, %v1978
    %v1981 = vtanh.pop %v1980
    %1983 = vrot.lane.b32.xlu0 %v1981, 64
    %v1984 = vpop.permute.xlu0 %1983
    %v1986 = vmul.f32 %v1968, %v1984
    %1988 = vrot.lane.b32.xlu0 %v1962, 32
    %v1989 = vpop.permute.xlu0 %1988
    %1991 = vst.msk [vmem:[#allocation4 + $0x8] sm:$0xff] %vm202, %v1989
    %1993 = vrot.lane.b32.xlu0 %v1986, 32
    %v1994 = vpop.permute.xlu0 %1993
    %1996 = vst.msk [vmem:[#allocation5 + $0x30] sm:$0xff] %vm202, %v1994
    %1997 = vrot.lane.b32.xlu0 %v1986, 64
    %v1998 = vpop.permute.xlu0 %1997
    %v2000 = vsel %vm202, %v1989, %v1998
    %v2001 = vpack.c.bf16 %v2000, %v2000
    %v2003 = vsel %vm433, %v2001, 0
    %2005 = vmatprep.subr.bf16.mxu0 0
    %2006 = vmatpush1.bf16.msra.mxu0 0
    %2007 = vmatprep.subr.bf16.mxu0 0
    %2008 = vmatpush1.bf16.msra.mxu0 0
    %2009 = vmatprep.subr.bf16.mxu0 0
    %2010 = vmatpush1.bf16.msra.mxu0 0
    %2011 = vmatprep.subr.bf16.mxu0 0
    %2012 = vmatpush1.bf16.msra.mxu0 0
    %2013 = vmatprep.subr.bf16.mxu0 %v1774
    %2014 = vmatpush1.bf16.msra.mxu0 %v1773
    %2015 = vmatprep.subr.bf16.mxu0 %v1772
    %2016 = vmatpush1.bf16.msra.mxu0 %v1771
    %2017 = vmatprep.subr.bf16.mxu0 %v1770
    %2018 = vmatpush1.bf16.msra.mxu0 %v1769
    %2019 = vmatprep.subr.bf16.mxu0 %v1768
    %2020 = vmatpush1.bf16.msra.mxu0 %v1767
    %2021 = vmatprep.subr.bf16.mxu0 0
    %2022 = vmatpush2.bf16.msra.mxu0 0
    %2023 = vmatprep.subr.bf16.mxu0 0
    %2024 = vmatpush2.bf16.msra.mxu0 0
    %2025 = vmatprep.subr.bf16.mxu0 0
    %2026 = vmatpush2.bf16.msra.mxu0 0
    %2027 = vmatprep.subr.bf16.mxu0 0
    %2028 = vmatpush2.bf16.msra.mxu0 0
    %2029 = vmatprep.subr.bf16.mxu0 0
    %2030 = vmatpush2.bf16.msra.mxu0 0
    %2031 = vmatprep.subr.bf16.mxu0 0
    %2032 = vmatpush2.bf16.msra.mxu0 0
    %2033 = vmatprep.subr.bf16.mxu0 0
    %2034 = vmatpush2.bf16.msra.mxu0 0
    %2035 = vmatprep.subr.bf16.mxu0 0
    %2036 = vmatpush2.bf16.msra.mxu0 0
    %2037 = vmatprep.mubr.bf16.mxu0 0
    %2038 = vmatmul.mubr.bf16.gmra.mxu0 %v2003
    %v2039 = vpop.f32.mrf.mxu0
    %v2040 = vadd.f32 0.0, %v2039
    %v2041 = vpop.f32.mrf.mxu0
    %v2042 = vadd.f32 0.0, %v2041
    %v2043 = vpop.f32.mrf.mxu0
    %v2044 = vpop.f32.mrf.mxu0
    %2045 = vdwg.mxu0
    %v2046 = vld [vmem:[#allocation2 + $0x10] sm:$0xff]
    %v2047 = vadd.f32 %v2046, %v2040
    %v2048 = vld [vmem:[#allocation3 + $0x28] sm:$0xff]
    %v2049 = vadd.f32 %v2048, %v2042
    %v2050 = vxor.u32 %v2047, 2147483648
    %v2051 = vmul.f32 %v2050, 1.442695
    %v2052 = vpow.pop %v2051
    %v2053 = vadd.f32 %v2052, 1.0
    %v2054 = vrcp.pop %v2053
    %v2055 = vmul.f32 1.0, %v2054
    %v2056 = vtanh.pop %v2047
    %v2057 = vmul.f32 %v2055, %v1956
    %2059 = vrot.lane.b32.xlu0 %v2056, 64
    %v2060 = vpop.permute.xlu0 %2059
    %v2062 = vmul.f32 %v2055, %v2060
    %2064 = vrot.lane.b32.xlu0 %v2062, 32
    %v2065 = vpop.permute.xlu0 %2064
    %v2067 = vadd.f32 %v2057, %v2065
    %v2068 = vtanh.pop %v2067
    %2070 = vrot.lane.b32.xlu0 %v2068, 64
    %v2071 = vpop.permute.xlu0 %2070
    %v2073 = vmul.f32 %v2055, %v2071
    %v2074 = vxor.u32 %v2049, 2147483648
    %v2075 = vmul.f32 %v2074, 1.442695
    %v2076 = vpow.pop %v2075
    %v2077 = vadd.f32 %v2076, 1.0
    %v2078 = vrcp.pop %v2077
    %v2079 = vmul.f32 1.0, %v2078
    %v2080 = vtanh.pop %v2049
    %v2081 = vmul.f32 %v2079, %v1980
    %2083 = vrot.lane.b32.xlu0 %v2080, 64
    %v2084 = vpop.permute.xlu0 %2083
    %v2086 = vmul.f32 %v2079, %v2084
    %2088 = vrot.lane.b32.xlu0 %v2086, 32
    %v2089 = vpop.permute.xlu0 %2088
    %v2091 = vadd.f32 %v2081, %v2089
    %v2092 = vtanh.pop %v2091
    %2094 = vrot.lane.b32.xlu0 %v2092, 64
    %v2095 = vpop.permute.xlu0 %2094
    %v2097 = vmul.f32 %v2079, %v2095
    %2099 = vrot.lane.b32.xlu0 %v2073, 32
    %v2100 = vpop.permute.xlu0 %2099
    %2102 = vst.msk [vmem:[#allocation4 + $0x10] sm:$0xff] %vm202, %v2100
    %2104 = vrot.lane.b32.xlu0 %v2097, 32
    %v2105 = vpop.permute.xlu0 %2104
    %2107 = vst.msk [vmem:[#allocation5 + $0x28] sm:$0xff] %vm202, %v2105
    %2108 = vrot.lane.b32.xlu0 %v2097, 64
    %v2109 = vpop.permute.xlu0 %2108
    %v2111 = vsel %vm202, %v2100, %v2109
    %v2112 = vpack.c.bf16 %v2111, %v2111
    %v2114 = vsel %vm433, %v2112, 0
    %2116 = vmatprep.subr.bf16.mxu0 0
    %2117 = vmatpush1.bf16.msra.mxu0 0
    %2118 = vmatprep.subr.bf16.mxu0 0
    %2119 = vmatpush1.bf16.msra.mxu0 0
    %2120 = vmatprep.subr.bf16.mxu0 0
    %2121 = vmatpush1.bf16.msra.mxu0 0
    %2122 = vmatprep.subr.bf16.mxu0 0
    %2123 = vmatpush1.bf16.msra.mxu0 0
    %2124 = vmatprep.subr.bf16.mxu0 %v1774
    %2125 = vmatpush1.bf16.msra.mxu0 %v1773
    %2126 = vmatprep.subr.bf16.mxu0 %v1772
    %2127 = vmatpush1.bf16.msra.mxu0 %v1771
    %2128 = vmatprep.subr.bf16.mxu0 %v1770
    %2129 = vmatpush1.bf16.msra.mxu0 %v1769
    %2130 = vmatprep.subr.bf16.mxu0 %v1768
    %2131 = vmatpush1.bf16.msra.mxu0 %v1767
    %2132 = vmatprep.subr.bf16.mxu0 0
    %2133 = vmatpush2.bf16.msra.mxu0 0
    %2134 = vmatprep.subr.bf16.mxu0 0
    %2135 = vmatpush2.bf16.msra.mxu0 0
    %2136 = vmatprep.subr.bf16.mxu0 0
    %2137 = vmatpush2.bf16.msra.mxu0 0
    %2138 = vmatprep.subr.bf16.mxu0 0
    %2139 = vmatpush2.bf16.msra.mxu0 0
    %2140 = vmatprep.subr.bf16.mxu0 0
    %2141 = vmatpush2.bf16.msra.mxu0 0
    %2142 = vmatprep.subr.bf16.mxu0 0
    %2143 = vmatpush2.bf16.msra.mxu0 0
    %2144 = vmatprep.subr.bf16.mxu0 0
    %2145 = vmatpush2.bf16.msra.mxu0 0
    %2146 = vmatprep.subr.bf16.mxu0 0
    %2147 = vmatpush2.bf16.msra.mxu0 0
    %2148 = vmatprep.mubr.bf16.mxu0 0
    %2149 = vmatmul.mubr.bf16.gmra.mxu0 %v2114
    %v2150 = vpop.f32.mrf.mxu0
    %v2151 = vadd.f32 0.0, %v2150
    %v2152 = vpop.f32.mrf.mxu0
    %v2153 = vadd.f32 0.0, %v2152
    %v2154 = vpop.f32.mrf.mxu0
    %v2155 = vpop.f32.mrf.mxu0
    %2156 = vdwg.mxu0
    %v2157 = vld [vmem:[#allocation2 + $0x18] sm:$0xff]
    %v2158 = vadd.f32 %v2157, %v2151
    %v2159 = vld [vmem:[#allocation3 + $0x20] sm:$0xff]
    %v2160 = vadd.f32 %v2159, %v2153
    %v2161 = vxor.u32 %v2158, 2147483648
    %v2162 = vmul.f32 %v2161, 1.442695
    %v2163 = vpow.pop %v2162
    %v2164 = vadd.f32 %v2163, 1.0
    %v2165 = vrcp.pop %v2164
    %v2166 = vmul.f32 1.0, %v2165
    %v2167 = vtanh.pop %v2158
    %v2168 = vmul.f32 %v2166, %v2067
    %2170 = vrot.lane.b32.xlu0 %v2167, 64
    %v2171 = vpop.permute.xlu0 %2170
    %v2173 = vmul.f32 %v2166, %v2171
    %2175 = vrot.lane.b32.xlu0 %v2173, 32
    %v2176 = vpop.permute.xlu0 %2175
    %v2178 = vadd.f32 %v2168, %v2176
    %v2179 = vtanh.pop %v2178
    %2181 = vrot.lane.b32.xlu0 %v2179, 64
    %v2182 = vpop.permute.xlu0 %2181
    %v2184 = vmul.f32 %v2166, %v2182
    %v2185 = vxor.u32 %v2160, 2147483648
    %v2186 = vmul.f32 %v2185, 1.442695
    %v2187 = vpow.pop %v2186
    %v2188 = vadd.f32 %v2187, 1.0
    %v2189 = vrcp.pop %v2188
    %v2190 = vmul.f32 1.0, %v2189
    %v2191 = vtanh.pop %v2160
    %v2192 = vmul.f32 %v2190, %v2091
    %2194 = vrot.lane.b32.xlu0 %v2191, 64
    %v2195 = vpop.permute.xlu0 %2194
    %v2197 = vmul.f32 %v2190, %v2195
    %2199 = vrot.lane.b32.xlu0 %v2197, 32
    %v2200 = vpop.permute.xlu0 %2199
    %v2202 = vadd.f32 %v2192, %v2200
    %v2203 = vtanh.pop %v2202
    %2205 = vrot.lane.b32.xlu0 %v2203, 64
    %v2206 = vpop.permute.xlu0 %2205
    %v2208 = vmul.f32 %v2190, %v2206
    %2210 = vrot.lane.b32.xlu0 %v2184, 32
    %v2211 = vpop.permute.xlu0 %2210
    %2213 = vst.msk [vmem:[#allocation4 + $0x18] sm:$0xff] %vm202, %v2211
    %2215 = vrot.lane.b32.xlu0 %v2208, 32
    %v2216 = vpop.permute.xlu0 %2215
    %2218 = vst.msk [vmem:[#allocation5 + $0x20] sm:$0xff] %vm202, %v2216
    %2219 = vrot.lane.b32.xlu0 %v2208, 64
    %v2220 = vpop.permute.xlu0 %2219
    %v2222 = vsel %vm202, %v2211, %v2220
    %v2223 = vpack.c.bf16 %v2222, %v2222
    %v2225 = vsel %vm433, %v2223, 0
    %2227 = vmatprep.subr.bf16.mxu0 0
    %2228 = vmatpush1.bf16.msra.mxu0 0
    %2229 = vmatprep.subr.bf16.mxu0 0
    %2230 = vmatpush1.bf16.msra.mxu0 0
    %2231 = vmatprep.subr.bf16.mxu0 0
    %2232 = vmatpush1.bf16.msra.mxu0 0
    %2233 = vmatprep.subr.bf16.mxu0 0
    %2234 = vmatpush1.bf16.msra.mxu0 0
    %2235 = vmatprep.subr.bf16.mxu0 %v1774
    %2236 = vmatpush1.bf16.msra.mxu0 %v1773
    %2237 = vmatprep.subr.bf16.mxu0 %v1772
    %2238 = vmatpush1.bf16.msra.mxu0 %v1771
    %2239 = vmatprep.subr.bf16.mxu0 %v1770
    %2240 = vmatpush1.bf16.msra.mxu0 %v1769
    %2241 = vmatprep.subr.bf16.mxu0 %v1768
    %2242 = vmatpush1.bf16.msra.mxu0 %v1767
    %2243 = vmatprep.subr.bf16.mxu0 0
    %2244 = vmatpush2.bf16.msra.mxu0 0
    %2245 = vmatprep.subr.bf16.mxu0 0
    %2246 = vmatpush2.bf16.msra.mxu0 0
    %2247 = vmatprep.subr.bf16.mxu0 0
    %2248 = vmatpush2.bf16.msra.mxu0 0
    %2249 = vmatprep.subr.bf16.mxu0 0
    %2250 = vmatpush2.bf16.msra.mxu0 0
    %2251 = vmatprep.subr.bf16.mxu0 0
    %2252 = vmatpush2.bf16.msra.mxu0 0
    %2253 = vmatprep.subr.bf16.mxu0 0
    %2254 = vmatpush2.bf16.msra.mxu0 0
    %2255 = vmatprep.subr.bf16.mxu0 0
    %2256 = vmatpush2.bf16.msra.mxu0 0
    %2257 = vmatprep.subr.bf16.mxu0 0
    %2258 = vmatpush2.bf16.msra.mxu0 0
    %2259 = vmatprep.mubr.bf16.mxu0 0
    %2260 = vmatmul.mubr.bf16.gmra.mxu0 %v2225
    %v2261 = vpop.f32.mrf.mxu0
    %v2262 = vadd.f32 0.0, %v2261
    %v2263 = vpop.f32.mrf.mxu0
    %v2264 = vadd.f32 0.0, %v2263
    %v2265 = vpop.f32.mrf.mxu0
    %v2266 = vpop.f32.mrf.mxu0
    %2267 = vdwg.mxu0
    %v2268 = vld [vmem:[#allocation2 + $0x20] sm:$0xff]
    %v2269 = vadd.f32 %v2268, %v2262
    %v2270 = vld [vmem:[#allocation3 + $0x18] sm:$0xff]
    %v2271 = vadd.f32 %v2270, %v2264
    %v2272 = vxor.u32 %v2269, 2147483648
    %v2273 = vmul.f32 %v2272, 1.442695
    %v2274 = vpow.pop %v2273
    %v2275 = vadd.f32 %v2274, 1.0
    %v2276 = vrcp.pop %v2275
    %v2277 = vmul.f32 1.0, %v2276
    %v2278 = vtanh.pop %v2269
    %v2279 = vmul.f32 %v2277, %v2178
    %2281 = vrot.lane.b32.xlu0 %v2278, 64
    %v2282 = vpop.permute.xlu0 %2281
    %v2284 = vmul.f32 %v2277, %v2282
    %2286 = vrot.lane.b32.xlu0 %v2284, 32
    %v2287 = vpop.permute.xlu0 %2286
    %v2289 = vadd.f32 %v2279, %v2287
    %v2290 = vtanh.pop %v2289
    %2292 = vrot.lane.b32.xlu0 %v2290, 64
    %v2293 = vpop.permute.xlu0 %2292
    %v2295 = vmul.f32 %v2277, %v2293
    %v2296 = vxor.u32 %v2271, 2147483648
    %v2297 = vmul.f32 %v2296, 1.442695
    %v2298 = vpow.pop %v2297
    %v2299 = vadd.f32 %v2298, 1.0
    %v2300 = vrcp.pop %v2299
    %v2301 = vmul.f32 1.0, %v2300
    %v2302 = vtanh.pop %v2271
    %v2303 = vmul.f32 %v2301, %v2202
    %2305 = vrot.lane.b32.xlu0 %v2302, 64
    %v2306 = vpop.permute.xlu0 %2305
    %v2308 = vmul.f32 %v2301, %v2306
    %2310 = vrot.lane.b32.xlu0 %v2308, 32
    %v2311 = vpop.permute.xlu0 %2310
    %v2313 = vadd.f32 %v2303, %v2311
    %v2314 = vtanh.pop %v2313
    %2316 = vrot.lane.b32.xlu0 %v2314, 64
    %v2317 = vpop.permute.xlu0 %2316
    %v2319 = vmul.f32 %v2301, %v2317
    %2321 = vrot.lane.b32.xlu0 %v2295, 32
    %v2322 = vpop.permute.xlu0 %2321
    %2324 = vst.msk [vmem:[#allocation4 + $0x20] sm:$0xff] %vm202, %v2322
    %2326 = vrot.lane.b32.xlu0 %v2319, 32
    %v2327 = vpop.permute.xlu0 %2326
    %2329 = vst.msk [vmem:[#allocation5 + $0x18] sm:$0xff] %vm202, %v2327
    %2330 = vrot.lane.b32.xlu0 %v2319, 64
    %v2331 = vpop.permute.xlu0 %2330
    %v2333 = vsel %vm202, %v2322, %v2331
    %v2334 = vpack.c.bf16 %v2333, %v2333
    %v2336 = vsel %vm433, %v2334, 0
    %2338 = vmatprep.subr.bf16.mxu0 0
    %2339 = vmatpush1.bf16.msra.mxu0 0
    %2340 = vmatprep.subr.bf16.mxu0 0
    %2341 = vmatpush1.bf16.msra.mxu0 0
    %2342 = vmatprep.subr.bf16.mxu0 0
    %2343 = vmatpush1.bf16.msra.mxu0 0
    %2344 = vmatprep.subr.bf16.mxu0 0
    %2345 = vmatpush1.bf16.msra.mxu0 0
    %2346 = vmatprep.subr.bf16.mxu0 %v1774
    %2347 = vmatpush1.bf16.msra.mxu0 %v1773
    %2348 = vmatprep.subr.bf16.mxu0 %v1772
    %2349 = vmatpush1.bf16.msra.mxu0 %v1771
    %2350 = vmatprep.subr.bf16.mxu0 %v1770
    %2351 = vmatpush1.bf16.msra.mxu0 %v1769
    %2352 = vmatprep.subr.bf16.mxu0 %v1768
    %2353 = vmatpush1.bf16.msra.mxu0 %v1767
    %2354 = vmatprep.subr.bf16.mxu0 0
    %2355 = vmatpush2.bf16.msra.mxu0 0
    %2356 = vmatprep.subr.bf16.mxu0 0
    %2357 = vmatpush2.bf16.msra.mxu0 0
    %2358 = vmatprep.subr.bf16.mxu0 0
    %2359 = vmatpush2.bf16.msra.mxu0 0
    %2360 = vmatprep.subr.bf16.mxu0 0
    %2361 = vmatpush2.bf16.msra.mxu0 0
    %2362 = vmatprep.subr.bf16.mxu0 0
    %2363 = vmatpush2.bf16.msra.mxu0 0
    %2364 = vmatprep.subr.bf16.mxu0 0
    %2365 = vmatpush2.bf16.msra.mxu0 0
    %2366 = vmatprep.subr.bf16.mxu0 0
    %2367 = vmatpush2.bf16.msra.mxu0 0
    %2368 = vmatprep.subr.bf16.mxu0 0
    %2369 = vmatpush2.bf16.msra.mxu0 0
    %2370 = vmatprep.mubr.bf16.mxu0 0
    %2371 = vmatmul.mubr.bf16.gmra.mxu0 %v2336
    %v2372 = vpop.f32.mrf.mxu0
    %v2373 = vadd.f32 0.0, %v2372
    %v2374 = vpop.f32.mrf.mxu0
    %v2375 = vadd.f32 0.0, %v2374
    %v2376 = vpop.f32.mrf.mxu0
    %v2377 = vpop.f32.mrf.mxu0
    %2378 = vdwg.mxu0
    %v2379 = vld [vmem:[#allocation2 + $0x28] sm:$0xff]
    %v2380 = vadd.f32 %v2379, %v2373
    %v2381 = vld [vmem:[#allocation3 + $0x10] sm:$0xff]
    %v2382 = vadd.f32 %v2381, %v2375
    %v2383 = vxor.u32 %v2380, 2147483648
    %v2384 = vmul.f32 %v2383, 1.442695
    %v2385 = vpow.pop %v2384
    %v2386 = vadd.f32 %v2385, 1.0
    %v2387 = vrcp.pop %v2386
    %v2388 = vmul.f32 1.0, %v2387
    %v2389 = vtanh.pop %v2380
    %v2390 = vmul.f32 %v2388, %v2289
    %2392 = vrot.lane.b32.xlu0 %v2389, 64
    %v2393 = vpop.permute.xlu0 %2392
    %v2395 = vmul.f32 %v2388, %v2393
    %2397 = vrot.lane.b32.xlu0 %v2395, 32
    %v2398 = vpop.permute.xlu0 %2397
    %v2400 = vadd.f32 %v2390, %v2398
    %v2401 = vtanh.pop %v2400
    %2403 = vrot.lane.b32.xlu0 %v2401, 64
    %v2404 = vpop.permute.xlu0 %2403
    %v2406 = vmul.f32 %v2388, %v2404
    %v2407 = vxor.u32 %v2382, 2147483648
    %v2408 = vmul.f32 %v2407, 1.442695
    %v2409 = vpow.pop %v2408
    %v2410 = vadd.f32 %v2409, 1.0
    %v2411 = vrcp.pop %v2410
    %v2412 = vmul.f32 1.0, %v2411
    %v2413 = vtanh.pop %v2382
    %v2414 = vmul.f32 %v2412, %v2313
    %2416 = vrot.lane.b32.xlu0 %v2413, 64
    %v2417 = vpop.permute.xlu0 %2416
    %v2419 = vmul.f32 %v2412, %v2417
    %2421 = vrot.lane.b32.xlu0 %v2419, 32
    %v2422 = vpop.permute.xlu0 %2421
    %v2424 = vadd.f32 %v2414, %v2422
    %v2425 = vtanh.pop %v2424
    %2427 = vrot.lane.b32.xlu0 %v2425, 64
    %v2428 = vpop.permute.xlu0 %2427
    %v2430 = vmul.f32 %v2412, %v2428
    %2432 = vrot.lane.b32.xlu0 %v2406, 32
    %v2433 = vpop.permute.xlu0 %2432
    %2435 = vst.msk [vmem:[#allocation4 + $0x28] sm:$0xff] %vm202, %v2433
    %2437 = vrot.lane.b32.xlu0 %v2430, 32
    %v2438 = vpop.permute.xlu0 %2437
    %2440 = vst.msk [vmem:[#allocation5 + $0x10] sm:$0xff] %vm202, %v2438
    %2441 = vrot.lane.b32.xlu0 %v2430, 64
    %v2442 = vpop.permute.xlu0 %2441
    %v2444 = vsel %vm202, %v2433, %v2442
    %v2445 = vpack.c.bf16 %v2444, %v2444
    %v2447 = vsel %vm433, %v2445, 0
    %2449 = vmatprep.subr.bf16.mxu0 0
    %2450 = vmatpush1.bf16.msra.mxu0 0
    %2451 = vmatprep.subr.bf16.mxu0 0
    %2452 = vmatpush1.bf16.msra.mxu0 0
    %2453 = vmatprep.subr.bf16.mxu0 0
    %2454 = vmatpush1.bf16.msra.mxu0 0
    %2455 = vmatprep.subr.bf16.mxu0 0
    %2456 = vmatpush1.bf16.msra.mxu0 0
    %2457 = vmatprep.subr.bf16.mxu0 %v1774
    %2458 = vmatpush1.bf16.msra.mxu0 %v1773
    %2459 = vmatprep.subr.bf16.mxu0 %v1772
    %2460 = vmatpush1.bf16.msra.mxu0 %v1771
    %2461 = vmatprep.subr.bf16.mxu0 %v1770
    %2462 = vmatpush1.bf16.msra.mxu0 %v1769
    %2463 = vmatprep.subr.bf16.mxu0 %v1768
    %2464 = vmatpush1.bf16.msra.mxu0 %v1767
    %2465 = vmatprep.subr.bf16.mxu0 0
    %2466 = vmatpush2.bf16.msra.mxu0 0
    %2467 = vmatprep.subr.bf16.mxu0 0
    %2468 = vmatpush2.bf16.msra.mxu0 0
    %2469 = vmatprep.subr.bf16.mxu0 0
    %2470 = vmatpush2.bf16.msra.mxu0 0
    %2471 = vmatprep.subr.bf16.mxu0 0
    %2472 = vmatpush2.bf16.msra.mxu0 0
    %2473 = vmatprep.subr.bf16.mxu0 0
    %2474 = vmatpush2.bf16.msra.mxu0 0
    %2475 = vmatprep.subr.bf16.mxu0 0
    %2476 = vmatpush2.bf16.msra.mxu0 0
    %2477 = vmatprep.subr.bf16.mxu0 0
    %2478 = vmatpush2.bf16.msra.mxu0 0
    %2479 = vmatprep.subr.bf16.mxu0 0
    %2480 = vmatpush2.bf16.msra.mxu0 0
    %2481 = vmatprep.mubr.bf16.mxu0 0
    %2482 = vmatmul.mubr.bf16.gmra.mxu0 %v2447
    %v2483 = vpop.f32.mrf.mxu0
    %v2484 = vadd.f32 0.0, %v2483
    %v2485 = vpop.f32.mrf.mxu0
    %v2486 = vadd.f32 0.0, %v2485
    %v2487 = vpop.f32.mrf.mxu0
    %v2488 = vpop.f32.mrf.mxu0
    %2489 = vdwg.mxu0
    %v2490 = vld [vmem:[#allocation2 + $0x30] sm:$0xff]
    %v2491 = vadd.f32 %v2490, %v2484
    %v2492 = vld [vmem:[#allocation3 + $0x8] sm:$0xff]
    %v2493 = vadd.f32 %v2492, %v2486
    %v2494 = vxor.u32 %v2491, 2147483648
    %v2495 = vmul.f32 %v2494, 1.442695
    %v2496 = vpow.pop %v2495
    %v2497 = vadd.f32 %v2496, 1.0
    %v2498 = vrcp.pop %v2497
    %v2499 = vmul.f32 1.0, %v2498
    %v2500 = vtanh.pop %v2491
    %v2501 = vmul.f32 %v2499, %v2400
    %2503 = vrot.lane.b32.xlu0 %v2500, 64
    %v2504 = vpop.permute.xlu0 %2503
    %v2506 = vmul.f32 %v2499, %v2504
    %2508 = vrot.lane.b32.xlu0 %v2506, 32
    %v2509 = vpop.permute.xlu0 %2508
    %v2511 = vadd.f32 %v2501, %v2509
    %v2512 = vtanh.pop %v2511
    %2514 = vrot.lane.b32.xlu0 %v2512, 64
    %v2515 = vpop.permute.xlu0 %2514
    %v2517 = vmul.f32 %v2499, %v2515
    %v2518 = vxor.u32 %v2493, 2147483648
    %v2519 = vmul.f32 %v2518, 1.442695
    %v2520 = vpow.pop %v2519
    %v2521 = vadd.f32 %v2520, 1.0
    %v2522 = vrcp.pop %v2521
    %v2523 = vmul.f32 1.0, %v2522
    %v2524 = vtanh.pop %v2493
    %v2525 = vmul.f32 %v2523, %v2424
    %2527 = vrot.lane.b32.xlu0 %v2524, 64
    %v2528 = vpop.permute.xlu0 %2527
    %v2530 = vmul.f32 %v2523, %v2528
    %2532 = vrot.lane.b32.xlu0 %v2530, 32
    %v2533 = vpop.permute.xlu0 %2532
    %v2535 = vadd.f32 %v2525, %v2533
    %v2536 = vtanh.pop %v2535
    %2538 = vrot.lane.b32.xlu0 %v2536, 64
    %v2539 = vpop.permute.xlu0 %2538
    %v2541 = vmul.f32 %v2523, %v2539
    %2543 = vrot.lane.b32.xlu0 %v2517, 32
    %v2544 = vpop.permute.xlu0 %2543
    %2546 = vst.msk [vmem:[#allocation4 + $0x30] sm:$0xff] %vm202, %v2544
    %2548 = vrot.lane.b32.xlu0 %v2541, 32
    %v2549 = vpop.permute.xlu0 %2548
    %2551 = vst.msk [vmem:[#allocation5 + $0x8] sm:$0xff] %vm202, %v2549
    %2552 = vrot.lane.b32.xlu0 %v2541, 64
    %v2553 = vpop.permute.xlu0 %2552
    %v2555 = vsel %vm202, %v2544, %v2553
    %v2556 = vpack.c.bf16 %v2555, %v2555
    %v2558 = vsel %vm433, %v2556, 0
    %2560 = vmatprep.subr.bf16.mxu0 0
    %2561 = vmatpush1.bf16.msra.mxu0 0
    %2562 = vmatprep.subr.bf16.mxu0 0
    %2563 = vmatpush1.bf16.msra.mxu0 0
    %2564 = vmatprep.subr.bf16.mxu0 0
    %2565 = vmatpush1.bf16.msra.mxu0 0
    %2566 = vmatprep.subr.bf16.mxu0 0
    %2567 = vmatpush1.bf16.msra.mxu0 0
    %2568 = vmatprep.subr.bf16.mxu0 %v1774
    %2569 = vmatpush1.bf16.msra.mxu0 %v1773
    %2570 = vmatprep.subr.bf16.mxu0 %v1772
    %2571 = vmatpush1.bf16.msra.mxu0 %v1771
    %2572 = vmatprep.subr.bf16.mxu0 %v1770
    %2573 = vmatpush1.bf16.msra.mxu0 %v1769
    %2574 = vmatprep.subr.bf16.mxu0 %v1768
    %2575 = vmatpush1.bf16.msra.mxu0 %v1767
    %2576 = vmatprep.subr.bf16.mxu0 0
    %2577 = vmatpush2.bf16.msra.mxu0 0
    %2578 = vmatprep.subr.bf16.mxu0 0
    %2579 = vmatpush2.bf16.msra.mxu0 0
    %2580 = vmatprep.subr.bf16.mxu0 0
    %2581 = vmatpush2.bf16.msra.mxu0 0
    %2582 = vmatprep.subr.bf16.mxu0 0
    %2583 = vmatpush2.bf16.msra.mxu0 0
    %2584 = vmatprep.subr.bf16.mxu0 0
    %2585 = vmatpush2.bf16.msra.mxu0 0
    %2586 = vmatprep.subr.bf16.mxu0 0
    %2587 = vmatpush2.bf16.msra.mxu0 0
    %2588 = vmatprep.subr.bf16.mxu0 0
    %2589 = vmatpush2.bf16.msra.mxu0 0
    %2590 = vmatprep.subr.bf16.mxu0 0
    %2591 = vmatpush2.bf16.msra.mxu0 0
    %2592 = vmatprep.mubr.bf16.mxu0 0
    %2593 = vmatmul.mubr.bf16.gmra.mxu0 %v2558
    %v2594 = vpop.f32.mrf.mxu0
    %v2595 = vadd.f32 0.0, %v2594
    %v2596 = vpop.f32.mrf.mxu0
    %v2597 = vadd.f32 0.0, %v2596
    %v2598 = vpop.f32.mrf.mxu0
    %v2599 = vpop.f32.mrf.mxu0
    %2600 = vdwg.mxu0
    %v2601 = vld [vmem:[#allocation2 + $0x38] sm:$0xff]
    %v2602 = vadd.f32 %v2601, %v2595
    %v2603 = vld [vmem:[#allocation3] sm:$0xff]
    %v2604 = vadd.f32 %v2603, %v2597
    %v2605 = vxor.u32 %v2602, 2147483648
    %v2606 = vmul.f32 %v2605, 1.442695
    %v2607 = vpow.pop %v2606
    %v2608 = vadd.f32 %v2607, 1.0
    %v2609 = vrcp.pop %v2608
    %v2610 = vmul.f32 1.0, %v2609
    %v2611 = vtanh.pop %v2602
    %v2612 = vmul.f32 %v2610, %v2511
    %2614 = vrot.lane.b32.xlu0 %v2611, 64
    %v2615 = vpop.permute.xlu0 %2614
    %v2617 = vmul.f32 %v2610, %v2615
    %2619 = vrot.lane.b32.xlu0 %v2617, 32
    %v2620 = vpop.permute.xlu0 %2619
    %v2622 = vadd.f32 %v2612, %v2620
    %v2623 = vtanh.pop %v2622
    %2625 = vrot.lane.b32.xlu0 %v2623, 64
    %v2626 = vpop.permute.xlu0 %2625
    %v2628 = vmul.f32 %v2610, %v2626
    %v2629 = vxor.u32 %v2604, 2147483648
    %v2630 = vmul.f32 %v2629, 1.442695
    %v2631 = vpow.pop %v2630
    %v2632 = vadd.f32 %v2631, 1.0
    %v2633 = vrcp.pop %v2632
    %v2634 = vmul.f32 1.0, %v2633
    %v2635 = vtanh.pop %v2604
    %v2636 = vmul.f32 %v2634, %v2535
    %2638 = vrot.lane.b32.xlu0 %v2635, 64
    %v2639 = vpop.permute.xlu0 %2638
    %v2641 = vmul.f32 %v2634, %v2639
    %2643 = vrot.lane.b32.xlu0 %v2641, 32
    %v2644 = vpop.permute.xlu0 %2643
    %v2646 = vadd.f32 %v2636, %v2644
    %v2647 = vtanh.pop %v2646
    %2649 = vrot.lane.b32.xlu0 %v2647, 64
    %v2650 = vpop.permute.xlu0 %2649
    %v2652 = vmul.f32 %v2634, %v2650
    %2654 = vrot.lane.b32.xlu0 %v2628, 32
    %v2655 = vpop.permute.xlu0 %2654
    %2657 = vst.msk [vmem:[#allocation4 + $0x38] sm:$0xff] %vm202, %v2655
    %2659 = vrot.lane.b32.xlu0 %v2652, 32
    %v2660 = vpop.permute.xlu0 %2659
    %2662 = vst.msk [vmem:[#allocation5] sm:$0xff] %vm202, %v2660
    %v2663 = vld [vmem:[#allocation18] sm:$0xf]
    %v2664 = vld [vmem:[#allocation18 + $0x4] sm:$0xf]
    %v2665 = vld [vmem:[#allocation18 + $0x8] sm:$0xf]
    %v2666 = vld [vmem:[#allocation18 + $0xc] sm:$0xf]
    %v2667 = vld [vmem:[#allocation18 + $0x10] sm:$0xf]
    %v2668 = vld [vmem:[#allocation18 + $0x14] sm:$0xf]
    %v2669 = vld [vmem:[#allocation18 + $0x18] sm:$0xf]
    %v2670 = vld [vmem:[#allocation18 + $0x1c] sm:$0xf]
    %v2671 = vld [vmem:[#allocation4] sm:$0xff]
    %v2672 = vld [vmem:[#allocation4 + $0x8] sm:$0xff]
    %v2673 = vld [vmem:[#allocation4 + $0x10] sm:$0xff]
    %v2674 = vld [vmem:[#allocation4 + $0x18] sm:$0xff]
    %v2675 = vld [vmem:[#allocation4 + $0x20] sm:$0xff]
    %v2676 = vld [vmem:[#allocation4 + $0x28] sm:$0xff]
    %v2677 = vld [vmem:[#allocation4 + $0x30] sm:$0xff]
    %v2678 = vld [vmem:[#allocation4 + $0x38] sm:$0xff]
    %v2679 = vpack.c.bf16 %v2672, %v2671
    %v2680 = vpack.c.bf16 %v2674, %v2673
    %v2681 = vpack.c.bf16 %v2676, %v2675
    %v2682 = vpack.c.bf16 %v2678, %v2677
    %v2683 = vld [vmem:[#allocation5] sm:$0xff]
    %v2684 = vld [vmem:[#allocation5 + $0x8] sm:$0xff]
    %v2685 = vld [vmem:[#allocation5 + $0x10] sm:$0xff]
    %v2686 = vld [vmem:[#allocation5 + $0x18] sm:$0xff]
    %v2687 = vld [vmem:[#allocation5 + $0x20] sm:$0xff]
    %v2688 = vld [vmem:[#allocation5 + $0x28] sm:$0xff]
    %v2689 = vld [vmem:[#allocation5 + $0x30] sm:$0xff]
    %v2690 = vld [vmem:[#allocation5 + $0x38] sm:$0xff]
    %v2691 = vpack.c.bf16 %v2684, %v2683
    %v2692 = vpack.c.bf16 %v2686, %v2685
    %v2693 = vpack.c.bf16 %v2688, %v2687
    %v2694 = vpack.c.bf16 %v2690, %v2689
    %v2699 = vunpack.c.l.b16 %v2667
    %v2700 = vunpack.c.l.b16 %v2668
    %v2701 = vunpack.c.l.b16 %v2669
    %v2702 = vunpack.c.l.b16 %v2670
    %v2703 = vpack.c.b16 %v2700, %v2699
    %v2704 = vpack.c.b16 %v2702, %v2701
    %v2708 = vsel %vm202, %v2691, 0
    %v2711 = vsel %vm202, %v2692, 0
    %v2714 = vsel %vm202, %v2693, 0
    %v2717 = vsel %vm202, %v2694, 0
    %2719 = vmatprep.subr.bf16.mxu0 0
    %2720 = vmatpush1.bf16.msra.mxu0 0
    %2721 = vmatprep.subr.bf16.mxu0 0
    %2722 = vmatpush1.bf16.msra.mxu0 0
    %2723 = vmatprep.subr.bf16.mxu0 0
    %2724 = vmatpush1.bf16.msra.mxu0 0
    %2725 = vmatprep.subr.bf16.mxu0 0
    %2726 = vmatpush1.bf16.msra.mxu0 0
    %2727 = vmatprep.subr.bf16.mxu0 0
    %2728 = vmatpush1.bf16.msra.mxu0 0
    %2729 = vmatprep.subr.bf16.mxu0 0
    %2730 = vmatpush1.bf16.msra.mxu0 0
    %2731 = vmatprep.subr.bf16.mxu0 0
    %2732 = vmatpush1.bf16.msra.mxu0 %v2704
    %2733 = vmatprep.subr.bf16.mxu0 0
    %2734 = vmatpush1.bf16.msra.mxu0 %v2703
    %2735 = vmatprep.subr.bf16.mxu0 0
    %2736 = vmatpush2.bf16.msra.mxu0 0
    %2737 = vmatprep.subr.bf16.mxu0 0
    %2738 = vmatpush2.bf16.msra.mxu0 0
    %2739 = vmatprep.subr.bf16.mxu0 0
    %2740 = vmatpush2.bf16.msra.mxu0 0
    %2741 = vmatprep.subr.bf16.mxu0 0
    %2742 = vmatpush2.bf16.msra.mxu0 0
    %2743 = vmatprep.subr.bf16.mxu0 0
    %2744 = vmatpush2.bf16.msra.mxu0 0
    %2745 = vmatprep.subr.bf16.mxu0 0
    %2746 = vmatpush2.bf16.msra.mxu0 0
    %2747 = vmatprep.subr.bf16.mxu0 0
    %2748 = vmatpush2.bf16.msra.mxu0 0
    %2749 = vmatprep.subr.bf16.mxu0 0
    %2750 = vmatpush2.bf16.msra.mxu0 0
    %2751 = vmatprep.mubr.bf16.mxu0 0
    %2752 = vmatmul.mubr.bf16.gmra.mxu0 %v2708
    %v2753 = vpop.f32.mrf.mxu0
    %v2754 = vadd.f32 0.0, %v2753
    %v2755 = vpop.f32.mrf.mxu0
    %v2756 = vpop.f32.mrf.mxu0
    %v2757 = vadd.f32 0.0, %v2756
    %v2758 = vpop.f32.mrf.mxu0
    %2759 = vmatprep.mubr.bf16.mxu0 0
    %2760 = vmatmul.mubr.bf16.gmra.mxu0 %v2711
    %v2761 = vpop.f32.mrf.mxu0
    %v2762 = vadd.f32 0.0, %v2761
    %v2763 = vpop.f32.mrf.mxu0
    %v2764 = vpop.f32.mrf.mxu0
    %v2765 = vadd.f32 0.0, %v2764
    %v2766 = vpop.f32.mrf.mxu0
    %2767 = vmatprep.mubr.bf16.mxu0 0
    %2768 = vmatmul.mubr.bf16.gmra.mxu0 %v2714
    %v2769 = vpop.f32.mrf.mxu0
    %v2770 = vadd.f32 0.0, %v2769
    %v2771 = vpop.f32.mrf.mxu0
    %v2772 = vpop.f32.mrf.mxu0
    %v2773 = vadd.f32 0.0, %v2772
    %v2774 = vpop.f32.mrf.mxu0
    %2775 = vmatprep.mubr.bf16.mxu0 0
    %2776 = vmatmul.mubr.bf16.gmra.mxu0 %v2717
    %v2777 = vpop.f32.mrf.mxu0
    %v2778 = vadd.f32 0.0, %v2777
    %v2779 = vpop.f32.mrf.mxu0
    %v2780 = vpop.f32.mrf.mxu0
    %v2781 = vadd.f32 0.0, %v2780
    %v2782 = vpop.f32.mrf.mxu0
    %2783 = vdwg.mxu0
    %v2788 = vunpack.c.l.b16 %v2663
    %v2789 = vunpack.c.l.b16 %v2664
    %v2790 = vunpack.c.l.b16 %v2665
    %v2791 = vunpack.c.l.b16 %v2666
    %v2792 = vpack.c.b16 %v2789, %v2788
    %v2793 = vpack.c.b16 %v2791, %v2790
    %v2797 = vsel %vm202, %v2679, 0
    %v2800 = vsel %vm202, %v2680, 0
    %v2803 = vsel %vm202, %v2681, 0
    %v2806 = vsel %vm202, %v2682, 0
    %2808 = vmatprep.subr.bf16.mxu0 0
    %2809 = vmatpush1.bf16.msra.mxu0 0
    %2810 = vmatprep.subr.bf16.mxu0 0
    %2811 = vmatpush1.bf16.msra.mxu0 0
    %2812 = vmatprep.subr.bf16.mxu0 0
    %2813 = vmatpush1.bf16.msra.mxu0 0
    %2814 = vmatprep.subr.bf16.mxu0 0
    %2815 = vmatpush1.bf16.msra.mxu0 0
    %2816 = vmatprep.subr.bf16.mxu0 0
    %2817 = vmatpush1.bf16.msra.mxu0 0
    %2818 = vmatprep.subr.bf16.mxu0 0
    %2819 = vmatpush1.bf16.msra.mxu0 0
    %2820 = vmatprep.subr.bf16.mxu0 0
    %2821 = vmatpush1.bf16.msra.mxu0 %v2793
    %2822 = vmatprep.subr.bf16.mxu0 0
    %2823 = vmatpush1.bf16.msra.mxu0 %v2792
    %2824 = vmatprep.subr.bf16.mxu0 0
    %2825 = vmatpush2.bf16.msra.mxu0 0
    %2826 = vmatprep.subr.bf16.mxu0 0
    %2827 = vmatpush2.bf16.msra.mxu0 0
    %2828 = vmatprep.subr.bf16.mxu0 0
    %2829 = vmatpush2.bf16.msra.mxu0 0
    %2830 = vmatprep.subr.bf16.mxu0 0
    %2831 = vmatpush2.bf16.msra.mxu0 0
    %2832 = vmatprep.subr.bf16.mxu0 0
    %2833 = vmatpush2.bf16.msra.mxu0 0
    %2834 = vmatprep.subr.bf16.mxu0 0
    %2835 = vmatpush2.bf16.msra.mxu0 0
    %2836 = vmatprep.subr.bf16.mxu0 0
    %2837 = vmatpush2.bf16.msra.mxu0 0
    %2838 = vmatprep.subr.bf16.mxu0 0
    %2839 = vmatpush2.bf16.msra.mxu0 0
    %2840 = vmatprep.mubr.bf16.mxu0 0
    %2841 = vmatmul.mubr.bf16.gmra.mxu0 %v2797
    %v2842 = vpop.f32.mrf.mxu0
    %v2843 = vadd.f32 %v2754, %v2842
    %v2844 = vpop.f32.mrf.mxu0
    %v2845 = vpop.f32.mrf.mxu0
    %v2846 = vadd.f32 %v2757, %v2845
    %v2847 = vpop.f32.mrf.mxu0
    %2848 = vmatprep.mubr.bf16.mxu0 0
    %2849 = vmatmul.mubr.bf16.gmra.mxu0 %v2800
    %v2850 = vpop.f32.mrf.mxu0
    %v2851 = vadd.f32 %v2762, %v2850
    %v2852 = vpop.f32.mrf.mxu0
    %v2853 = vpop.f32.mrf.mxu0
    %v2854 = vadd.f32 %v2765, %v2853
    %v2855 = vpop.f32.mrf.mxu0
    %2856 = vmatprep.mubr.bf16.mxu0 0
    %2857 = vmatmul.mubr.bf16.gmra.mxu0 %v2803
    %v2858 = vpop.f32.mrf.mxu0
    %v2859 = vadd.f32 %v2770, %v2858
    %v2860 = vpop.f32.mrf.mxu0
    %v2861 = vpop.f32.mrf.mxu0
    %v2862 = vadd.f32 %v2773, %v2861
    %v2863 = vpop.f32.mrf.mxu0
    %2864 = vmatprep.mubr.bf16.mxu0 0
    %2865 = vmatmul.mubr.bf16.gmra.mxu0 %v2806
    %v2866 = vpop.f32.mrf.mxu0
    %v2867 = vadd.f32 %v2778, %v2866
    %v2868 = vpop.f32.mrf.mxu0
    %v2869 = vpop.f32.mrf.mxu0
    %v2870 = vadd.f32 %v2781, %v2869
    %v2871 = vpop.f32.mrf.mxu0
    %2872 = vdwg.mxu0
    %v2873 = vld [vmem:[%s12] sm:$0x1]
    %v2875 = vlaneseq
    %v2876 = vshrl.u32 %v2875, 7
    %v2877 = vsub.s32 0, %v2876
    %v2878 = vrot.slane %v2873, %v2877
    %v2880 = vadd.f32 %v2843, %v2878
    %v2881 = vadd.f32 %v2846, %v2878
    %v2882 = vadd.f32 %v2851, %v2878
    %v2883 = vadd.f32 %v2854, %v2878
    %v2884 = vadd.f32 %v2859, %v2878
    %v2885 = vadd.f32 %v2862, %v2878
    %v2886 = vadd.f32 %v2867, %v2878
    %v2887 = vadd.f32 %v2870, %v2878
    %2888 = vst [vmem:[#allocation20] sm:$0xff] %v2880
    %2889 = vst [vmem:[#allocation20 + $0x8] sm:$0xff] %v2881
    %2890 = vst [vmem:[#allocation20 + $0x10] sm:$0xff] %v2882
    %2891 = vst [vmem:[#allocation20 + $0x18] sm:$0xff] %v2883
    %2892 = vst [vmem:[#allocation20 + $0x20] sm:$0xff] %v2884
    %2893 = vst [vmem:[#allocation20 + $0x28] sm:$0xff] %v2885
    %2894 = vst [vmem:[#allocation20 + $0x30] sm:$0xff] %v2886
    %2895 = vst [vmem:[#allocation20 + $0x38] sm:$0xff] %v2887
    // Predicated region
    $region86: #{tpu_custom_call.1} parent=1 // pred_check
      _
    $region87: #{tpu_custom_call.1} parent=1 // pred_check_branch
      %2897 = sbr.rel (0) target = $region89
    $region88: #{tpu_custom_call.1} parent=1 // pred_region
      %s2899 = ssub.s32 1024, 1024
      %2900 = vsyncadd [#allocation8], %s2899
      %s2901 = sshll.u32 [#allocation20], 4
      %s2902 = int_to_ptr.vmem [resolvable:$true] %s2901
      %2907 = dma.vmem_to_hbm [thread:$0]  %s2902, 1024, %s13, [#allocation8], 128, 128, 8
    $region89: #{tpu_custom_call.1} parent=1 // pred_fallthru
      _
    // Predicated region
    $region90: #{tpu_custom_call.1} parent=1 // pred_check
      _
    $region91: #{tpu_custom_call.1} parent=1 // pred_check_branch
      %2909 = sbr.rel (0) target = $region93
    $region92: #{tpu_custom_call.1} parent=1 // pred_region
      %2910 = dma.done [#allocation8], 1024
    $region93: #{tpu_custom_call.1} parent=1 // pred_fallthru
      _
    %2911 = vsyncpa [#allocation7], 1
    %2912 = vsyncpa [#allocation10], 1
    %2913 = vsyncpa [#allocation13], 1
    %2914 = vsyncpa [#allocation16], 1
    %2915 = vsyncpa [#allocation19], 1
    %2916 = vsyncpa [#allocation8], 1

</llo_original>
